<compile_context>
chip_gen: v7x
topology: tpu7x:2x2x1
jax: 0.10.0
libtpu: 0.0.40
codegen_flags: <defaults>
</compile_context>

<pallas_src>
import functools
import math

import jax
import jax.numpy as jnp
from jax.experimental import pallas as pl
from jax.experimental.pallas import tpu as pltpu


# --------------------------------------------------------------------------
# Kernel
# --------------------------------------------------------------------------
def _block_kernel(x_ref,
                  ln1g_ref, ln1b_ref,
                  wqkv_ref, bqkv_ref,
                  wo_ref, bo_ref,
                  ln2g_ref, ln2b_ref,
                  wfc_ref, bfc_ref,
                  wpj_ref, bpj_ref,
                  o_ref,
                  attn_scratch,
                  *, n_head: int, heads_per_group: int):
    B, L, D = x_ref.shape                       # block: (B_blk, L, D)
    head_dim = D // n_head

    x = x_ref[...].astype(jnp.float32)          # (B, L, D) f32

    def layer_norm(v, g, b):
        mu = jnp.mean(v, axis=-1, keepdims=True)
        var = jnp.mean((v - mu) * (v - mu), axis=-1, keepdims=True)
        return (v - mu) * jax.lax.rsqrt(var + 1e-5) * g + b

    # ---------------- attention branch ----------------
    y = layer_norm(x, ln1g_ref[...], ln1b_ref[...])            # f32

    # Fused QKV projection: one (B*L, D) x (D, 3D) bf16 matmul, f32 accumulate.
    y2 = y.reshape(B * L, D).astype(jnp.bfloat16)
    qkv = jnp.dot(y2, wqkv_ref[...], preferred_element_type=jnp.float32)
    # Cast to bf16 right after the bias add — this is the largest tensor that
    # stays live across the head loop, and every per-head slice feeds the MXU
    # in bf16 anyway.  (Attention scale is pre-folded into the Q weights.)
    qkv = (qkv + bqkv_ref[...]).astype(jnp.bfloat16).reshape(B, L, 3 * D)

    # Per-head attention, batched over the B_blk sequences of this grid step.
    # Heads are processed in groups whose concatenated width is a full
    # 128-lane store when head_dim < 128 (lane-dense scratch writes).
    group_w = heads_per_group * head_dim
    for gi in range(n_head // heads_per_group):
        outs = []
        for j in range(heads_per_group):
            h = gi * heads_per_group + j
            lo = h * head_dim
            hi = lo + head_dim
            qh = qkv[:, :, lo:hi]                              # (B, L, hd) bf16
            kh = qkv[:, :, D + lo:D + hi]
            vh = qkv[:, :, 2 * D + lo:2 * D + hi]

            s = jnp.einsum("bqd,bkd->bqk", qh, kh,
                           preferred_element_type=jnp.float32)  # already scaled
            s = s - jnp.max(s, axis=-1, keepdims=True)
            p = jnp.exp(s)
            p = p * pl.reciprocal(jnp.sum(p, axis=-1, keepdims=True),
                                  approx=True)

            outs.append(jnp.einsum("bqk,bkd->bqd", p.astype(jnp.bfloat16), vh,
                                   preferred_element_type=jnp.float32))
        grp = outs[0] if heads_per_group == 1 else jnp.concatenate(outs, axis=-1)
        attn_scratch[:, :, gi * group_w:(gi + 1) * group_w] = (
            grp.astype(attn_scratch.dtype))

    attn = attn_scratch[...].reshape(B * L, D)                 # bf16
    a = jnp.dot(attn, wo_ref[...],
                preferred_element_type=jnp.float32) + bo_ref[...]
    x2 = x.reshape(B * L, D) + a                               # residual, f32

    # ---------------- MLP branch ----------------
    y2 = layer_norm(x2, ln2g_ref[...], ln2b_ref[...])
    h1 = jnp.dot(y2.astype(jnp.bfloat16), wfc_ref[...],
                 preferred_element_type=jnp.float32) + bfc_ref[...]
    # TODO(synk): on v6e/v7x a bf16 sigmoid would run ~2x faster on the EUP;
    # kept f32 here so the same kernel stays optimal-correct on v5e too.
    h1 = h1 * jax.nn.sigmoid(1.702 * h1)                       # QuickGELU
    m = jnp.dot(h1.astype(jnp.bfloat16), wpj_ref[...],
                preferred_element_type=jnp.float32) + bpj_ref[...]

    o_ref[...] = (x2 + m).reshape(B, L, D).astype(o_ref.dtype)


# --------------------------------------------------------------------------
# VMEM / tiling heuristics
# --------------------------------------------------------------------------
def _vmem_capacity_bytes():
    try:
        return int(pltpu.get_tpu_info().vmem_capacity_bytes)
    except Exception:
        return 64 << 20          # conservative: v7x per-core VMEM


def _weight_bytes(D):
    # bf16 matmul weights + f32 biases / LN params
    return (3 * D * D + D * D + 4 * D * D + 4 * D * D) * 2 + 16 * D * 4


def _activation_bytes(b, L, D):
    """Rough per-grid-step VMEM footprint of the activations (peak phase)."""
    BLD = b * L * D
    io = 2 * 2 * BLD * 4                                     # 2x-buffered in/out blocks, f32
    attn = (4 + 12 + 6 + 2) * BLD + 12 * b * L * L           # x, qkv f32 transient, qkv bf16, scratch, scores
    mlp = (4 + 16 + 8 + 4) * BLD                             # x2, h1 f32, h1 bf16, m
    return io + max(attn, mlp)


def _pick_batch_block(n, L, D, act_budget, cap=16):
    """Largest divisor of n that fits the VMEM activation budget, preferring
    grid lengths that are even and >= 2 (balanced v7x TensorCore split)."""
    best = None
    for b in range(1, min(n, cap) + 1):
        if n % b:
            continue
        if b > 1 and _activation_bytes(b, L, D) > act_budget:
            continue
        g = n // b
        key = ((g >= 2) or (n == 1),       # both cores get work
               (g % 2 == 0) or (g == 1),   # even split across 2 TCs
               b)                          # amortise per-step overhead
        if best is None or key > best[0]:
            best = (key, b)
    return best[1] if best is not None else 1


def _heads_per_group(n_head, head_dim):
    """Group heads so each scratch store is >= 128 lanes wide when possible."""
    if head_dim >= 128:
        return 1
    g = min(n_head, max(1, 128 // head_dim))
    while n_head % g:
        g -= 1
    return g


def _w_spec(shape, pipeline_mode):
    zero = (0,) * len(shape)
    if pipeline_mode is None:
        return pl.BlockSpec(shape, lambda g, _z=zero: _z)
    return pl.BlockSpec(shape, lambda g, _z=zero: _z,
                        pipeline_mode=pipeline_mode)


# --------------------------------------------------------------------------
# Wrapper
# --------------------------------------------------------------------------
def residual_attention_block(x, params, *, n_head, batch_first=False,
                             batch_block=None):
    """CLIP ResidualAttentionBlock forward.

    x: (L, N, D) float32 if batch_first=False (PyTorch layout), else (N, L, D).
    params: output of prepare_kernel_params().
    """
    x_nld = x if batch_first else jnp.transpose(x, (1, 0, 2))
    N, L, D = x_nld.shape
    assert D % n_head == 0
    head_dim = D // n_head

    vmem_cap = _vmem_capacity_bytes()
    budget = int(0.85 * vmem_cap)
    wbytes = _weight_bytes(D)

    if batch_block is not None:
        b_blk = batch_block
    else:
        b_blk = _pick_batch_block(N, L, D, max(budget - wbytes, 1 << 20))
    assert N % b_blk == 0
    grid = (N // b_blk,)

    hpg = _heads_per_group(n_head, head_dim)
    kernel = functools.partial(_block_kernel, n_head=n_head,
                               heads_per_group=hpg)
    p = params

    def build(single_buffer_weights):
        pm = (pl.Buffered(1)
              if (single_buffer_weights and hasattr(pl, "Buffered")) else None)
        w_buf_factor = 1 if pm is not None else 2
        vmem_limit = int(min(
            max(w_buf_factor * wbytes + _activation_bytes(b_blk, L, D)
                + (8 << 20), 32 << 20),
            int(0.9 * vmem_cap)))

        return pl.pallas_call(
            kernel,
            out_shape=jax.ShapeDtypeStruct((N, L, D), x_nld.dtype),
            grid_spec=pltpu.PrefetchScalarGridSpec(
                num_scalar_prefetch=0,
                grid=grid,
                in_specs=[
                    pl.BlockSpec((b_blk, L, D), lambda g: (g, 0, 0)),  # x
                    _w_spec((1, D), pm), _w_spec((1, D), pm),          # ln1 g/b
                    _w_spec((D, 3 * D), pm), _w_spec((1, 3 * D), pm),  # W_qkv,b
                    _w_spec((D, D), pm), _w_spec((1, D), pm),          # W_o, b_o
                    _w_spec((1, D), pm), _w_spec((1, D), pm),          # ln2 g/b
                    _w_spec((D, 4 * D), pm), _w_spec((1, 4 * D), pm),  # W_fc, b
                    _w_spec((4 * D, D), pm), _w_spec((1, D), pm),      # W_pj, b
                ],
                out_specs=pl.BlockSpec((b_blk, L, D), lambda g: (g, 0, 0)),
                scratch_shapes=[pltpu.VMEM((b_blk, L, D), jnp.bfloat16)],
            ),
            compiler_params=pltpu.CompilerParams(
                dimension_semantics=("parallel",),
                vmem_limit_bytes=vmem_limit),
        )

    args = (x_nld,
            p["ln1_g"], p["ln1_b"],
            p["wqkv"], p["bqkv"],
            p["wo"], p["bo"],
            p["ln2_g"], p["ln2_b"],
            p["wfc"], p["bfc"],
            p["wpj"], p["bpj"])

    try:
        out_nld = build(True)(*args)
        if isinstance(out_nld, jax.Array):
            out_nld.block_until_ready()
    except Exception:
        # Fallback: default (double-buffered) weight specs.
        out_nld = build(False)(*args)

    return out_nld if batch_first else jnp.transpose(out_nld, (1, 0, 2))


# --------------------------------------------------------------------------
# Parameter helpers
# --------------------------------------------------------------------------
def make_params(key, d_model):
    """PyTorch-style f32 parameters (weights stored as (D_in, D_out))."""
    ks = jax.random.split(key, 8)
    std = 0.02
    D = d_model
    return {
        "ln1_g": jnp.ones((1, D), jnp.float32),
        "ln1_b": jnp.zeros((1, D), jnp.float32),
        "wq": jax.random.normal(ks[0], (D, D), jnp.float32) * std,
        "bq": jnp.zeros((1, D), jnp.float32),
        "wk": jax.random.normal(ks[1], (D, D), jnp.float32) * std,
        "bk": jnp.zeros((1, D), jnp.float32),
        "wv": jax.random.normal(ks[2], (D, D), jnp.float32) * std,
        "bv": jnp.zeros((1, D), jnp.float32),
        "wo": jax.random.normal(ks[3], (D, D), jnp.float32) * std,
        "bo": jnp.zeros((1, D), jnp.float32),
        "ln2_g": jnp.ones((1, D), jnp.float32),
        "ln2_b": jnp.zeros((1, D), jnp.float32),
        "wfc": jax.random.normal(ks[4], (D, 4 * D), jnp.float32) * std,
        "bfc": jnp.zeros((1, 4 * D), jnp.float32),
        "wpj": jax.random.normal(ks[5], (4 * D, D), jnp.float32) * std,
        "bpj": jnp.zeros((1, D), jnp.float32),
    }


def prepare_kernel_params(p, *, n_head):
    """Host-side prep: fuse QKV weights, fold 1/sqrt(head_dim) into the Q
    columns, and cast matmul weights to bf16.  Biases and LayerNorm affine
    params stay f32 (added after f32 accumulation)."""
    D = p["wq"].shape[0]
    scale = 1.0 / math.sqrt(D // n_head)
    wq = p["wq"] * scale
    bq = p["bq"] * scale
    return {
        "ln1_g": p["ln1_g"], "ln1_b": p["ln1_b"],
        "wqkv": jnp.concatenate([wq, p["wk"], p["wv"]],
                                axis=1).astype(jnp.bfloat16),
        "bqkv": jnp.concatenate([bq, p["bk"], p["bv"]], axis=1),
        "wo": p["wo"].astype(jnp.bfloat16), "bo": p["bo"],
        "ln2_g": p["ln2_g"], "ln2_b": p["ln2_b"],
        "wfc": p["wfc"].astype(jnp.bfloat16), "bfc": p["bfc"],
        "wpj": p["wpj"].astype(jnp.bfloat16), "bpj": p["bpj"],
    }


# --------------------------------------------------------------------------
# Pure-JAX f32 reference (for verification)
# --------------------------------------------------------------------------
def _reference(x_lnd, params, *, n_head):
    p = params
    L, N, D = x_lnd.shape
    hd = D // n_head
    x = jnp.transpose(x_lnd, (1, 0, 2))                        # (N, L, D)

    def ln(v, g, b):
        mu = jnp.mean(v, -1, keepdims=True)
        var = jnp.mean((v - mu) ** 2, -1, keepdims=True)
        return (v - mu) / jnp.sqrt(var + 1e-5) * g + b

    y = ln(x, p["ln1_g"], p["ln1_b"])
    q = y @ p["wq"] + p["bq"]
    k = y @ p["wk"] + p["bk"]
    v = y @ p["wv"] + p["bv"]
    q = q.reshape(N, L, n_head, hd)
    k = k.reshape(N, L, n_head, hd)
    v = v.reshape(N, L, n_head, hd)
    s = jnp.einsum("nqhd,nkhd->nhqk", q, k) / math.sqrt(hd)
    pattn = jax.nn.softmax(s, axis=-1)
    a = jnp.einsum("nhqk,nkhd->nqhd", pattn, v).reshape(N, L, D)
    a = a @ p["wo"] + p["bo"]
    x = x + a
    y = ln(x, p["ln2_g"], p["ln2_b"])
    h1 = y @ p["wfc"] + p["bfc"]
    h1 = h1 * jax.nn.sigmoid(1.702 * h1)
    y = h1 @ p["wpj"] + p["bpj"]
    x = x + y
    return jnp.transpose(x, (1, 0, 2))


# --------------------------------------------------------------------------
if __name__ == "__main__":
    L, N, D, H = 8, 4, 32, 4          # seq, batch, d_model, heads
    key = jax.random.PRNGKey(0)
    kx, kp = jax.random.split(key)
    x = jax.random.normal(kx, (L, N, D), jnp.float32)

    torch_params = make_params(kp, D)
    kparams = prepare_kernel_params(torch_params, n_head=H)

    out = residual_attention_block(x, kparams, n_head=H)
    out = jax.block_until_ready(out)

    ref = _reference(x, torch_params, n_head=H)
    assert out.shape == (L, N, D)
    # bf16 MXU inputs + approx reciprocal => loosened tolerance vs f32 reference.
    max_err = float(jnp.max(jnp.abs(out - ref)))
    assert max_err < 2e-2, f"mismatch vs JAX reference: max abs err {max_err}"

    print("KERNEL_OK")
</pallas_src>

<mosaic_0001>
module attributes {stable_mosaic.version = 11 : i64} {
  func.func @_block_kernel(%arg0: i32, %arg1: memref<2x8x32xf32, #tpu.memory_space<vmem>>, %arg2: memref<1x32xf32, #tpu.memory_space<vmem>>, %arg3: memref<1x32xf32, #tpu.memory_space<vmem>>, %arg4: memref<32x96xbf16, #tpu.memory_space<vmem>>, %arg5: memref<1x96xf32, #tpu.memory_space<vmem>>, %arg6: memref<32x32xbf16, #tpu.memory_space<vmem>>, %arg7: memref<1x32xf32, #tpu.memory_space<vmem>>, %arg8: memref<1x32xf32, #tpu.memory_space<vmem>>, %arg9: memref<1x32xf32, #tpu.memory_space<vmem>>, %arg10: memref<32x128xbf16, #tpu.memory_space<vmem>>, %arg11: memref<1x128xf32, #tpu.memory_space<vmem>>, %arg12: memref<128x32xbf16, #tpu.memory_space<vmem>>, %arg13: memref<1x32xf32, #tpu.memory_space<vmem>>, %arg14: memref<2x8x32xf32, #tpu.memory_space<vmem>>, %arg15: memref<2x8x32xbf16, #tpu.memory_space<vmem>>) attributes {dimension_semantics = [#tpu.dimension_semantics<parallel>], iteration_bounds = array<i64: 2>, scalar_prefetch = 0 : i64, scratch_operands = 1 : i64, tpu.core_type = #tpu.core_type<tc>, window_params = [{transform_indices = @transform_0, window_bounds = array<i64: 2, 8, 32>}, {pipeline_mode = #tpu.pipeline_mode<synchronous>, transform_indices = @transform_1, window_bounds = array<i64: 1, 32>}, {pipeline_mode = #tpu.pipeline_mode<synchronous>, transform_indices = @transform_2, window_bounds = array<i64: 1, 32>}, {pipeline_mode = #tpu.pipeline_mode<synchronous>, transform_indices = @transform_3, window_bounds = array<i64: 32, 96>}, {pipeline_mode = #tpu.pipeline_mode<synchronous>, transform_indices = @transform_4, window_bounds = array<i64: 1, 96>}, {pipeline_mode = #tpu.pipeline_mode<synchronous>, transform_indices = @transform_5, window_bounds = array<i64: 32, 32>}, {pipeline_mode = #tpu.pipeline_mode<synchronous>, transform_indices = @transform_6, window_bounds = array<i64: 1, 32>}, {pipeline_mode = #tpu.pipeline_mode<synchronous>, transform_indices = @transform_7, window_bounds = array<i64: 1, 32>}, {pipeline_mode = #tpu.pipeline_mode<synchronous>, transform_indices = @transform_8, window_bounds = array<i64: 1, 32>}, {pipeline_mode = #tpu.pipeline_mode<synchronous>, transform_indices = @transform_9, window_bounds = array<i64: 32, 128>}, {pipeline_mode = #tpu.pipeline_mode<synchronous>, transform_indices = @transform_10, window_bounds = array<i64: 1, 128>}, {pipeline_mode = #tpu.pipeline_mode<synchronous>, transform_indices = @transform_11, window_bounds = array<i64: 128, 32>}, {pipeline_mode = #tpu.pipeline_mode<synchronous>, transform_indices = @transform_12, window_bounds = array<i64: 1, 32>}, {transform_indices = @transform_13, window_bounds = array<i64: 2, 8, 32>}]} {
    %c0 = arith.constant 0 : index
    %c0_0 = arith.constant 0 : index
    %c0_1 = arith.constant 0 : index
    %0 = vector.load %arg1[%c0, %c0_0, %c0_1] : memref<2x8x32xf32, #tpu.memory_space<vmem>>, vector<2x8x32xf32>
    %c0_2 = arith.constant 0 : index
    %c0_3 = arith.constant 0 : index
    %1 = vector.load %arg2[%c0_2, %c0_3] : memref<1x32xf32, #tpu.memory_space<vmem>>, vector<1x32xf32>
    %c0_4 = arith.constant 0 : index
    %c0_5 = arith.constant 0 : index
    %2 = vector.load %arg3[%c0_4, %c0_5] : memref<1x32xf32, #tpu.memory_space<vmem>>, vector<1x32xf32>
    %cst = arith.constant dense<0.000000e+00> : vector<2x8xf32>
    %3 = vector.multi_reduction <add>, %0, %cst [2] : vector<2x8x32xf32> to vector<2x8xf32>
    %4 = vector.shape_cast %3 : vector<2x8xf32> to vector<2x8x1xf32>
    %cst_6 = arith.constant 3.200000e+01 : f32
    %5 = vector.broadcast %cst_6 : f32 to vector<2x8x1xf32>
    %6 = arith.divf %4, %5 : vector<2x8x1xf32>
    %7 = vector.broadcast %6 : vector<2x8x1xf32> to vector<2x8x32xf32>
    %8 = arith.subf %0, %7 : vector<2x8x32xf32>
    %9 = vector.broadcast %6 : vector<2x8x1xf32> to vector<2x8x32xf32>
    %10 = arith.subf %0, %9 : vector<2x8x32xf32>
    %11 = arith.mulf %8, %10 : vector<2x8x32xf32>
    %cst_7 = arith.constant dense<0.000000e+00> : vector<2x8xf32>
    %12 = vector.multi_reduction <add>, %11, %cst_7 [2] : vector<2x8x32xf32> to vector<2x8xf32>
    %13 = vector.shape_cast %12 : vector<2x8xf32> to vector<2x8x1xf32>
    %cst_8 = arith.constant 3.200000e+01 : f32
    %14 = vector.broadcast %cst_8 : f32 to vector<2x8x1xf32>
    %15 = arith.divf %13, %14 : vector<2x8x1xf32>
    %16 = vector.broadcast %6 : vector<2x8x1xf32> to vector<2x8x32xf32>
    %17 = arith.subf %0, %16 : vector<2x8x32xf32>
    %cst_9 = arith.constant 9.99999974E-6 : f32
    %18 = vector.broadcast %cst_9 : f32 to vector<2x8x1xf32>
    %19 = arith.addf %15, %18 : vector<2x8x1xf32>
    %20 = math.rsqrt %19 : vector<2x8x1xf32>
    %21 = vector.broadcast %20 : vector<2x8x1xf32> to vector<2x8x32xf32>
    %22 = arith.mulf %17, %21 : vector<2x8x32xf32>
    %23 = vector.shape_cast %1 : vector<1x32xf32> to vector<1x1x32xf32>
    %24 = vector.broadcast %23 : vector<1x1x32xf32> to vector<2x8x32xf32>
    %25 = arith.mulf %22, %24 : vector<2x8x32xf32>
    %26 = vector.shape_cast %2 : vector<1x32xf32> to vector<1x1x32xf32>
    %27 = vector.broadcast %26 : vector<1x1x32xf32> to vector<2x8x32xf32>
    %28 = arith.addf %25, %27 : vector<2x8x32xf32>
    %29 = vector.shape_cast %28 : vector<2x8x32xf32> to vector<16x32xf32>
    %30 = arith.truncf %29 : vector<16x32xf32> to vector<16x32xbf16>
    %c0_10 = arith.constant 0 : index
    %c0_11 = arith.constant 0 : index
    %31 = vector.load %arg4[%c0_10, %c0_11] : memref<32x96xbf16, #tpu.memory_space<vmem>>, vector<32x96xbf16>
    %cst_12 = arith.constant dense<0.000000e+00> : vector<16x96xf32>
    %32 = tpu.matmul %30, %31, %cst_12 {dimension_numbers = #tpu.dot_dimension_numbers<[1], [0], [0], [1], [0, 0, 1, 1], [], []>} : vector<16x32xbf16>, vector<32x96xbf16>, vector<16x96xf32> -> vector<16x96xf32>
    %c0_13 = arith.constant 0 : index
    %c0_14 = arith.constant 0 : index
    %33 = vector.load %arg5[%c0_13, %c0_14] : memref<1x96xf32, #tpu.memory_space<vmem>>, vector<1x96xf32>
    %34 = vector.broadcast %33 : vector<1x96xf32> to vector<16x96xf32>
    %35 = arith.addf %32, %34 : vector<16x96xf32>
    %36 = arith.truncf %35 : vector<16x96xf32> to vector<16x96xbf16>
    %37 = vector.shape_cast %36 : vector<16x96xbf16> to vector<2x8x96xbf16>
    %38 = vector.extract_strided_slice %37 {offsets = [0, 0, 0], sizes = [2, 8, 8], strides = [1, 1, 1]} : vector<2x8x96xbf16> to vector<2x8x8xbf16>
    %39 = vector.extract_strided_slice %37 {offsets = [0, 0, 32], sizes = [2, 8, 8], strides = [1, 1, 1]} : vector<2x8x96xbf16> to vector<2x8x8xbf16>
    %40 = vector.extract_strided_slice %37 {offsets = [0, 0, 64], sizes = [2, 8, 8], strides = [1, 1, 1]} : vector<2x8x96xbf16> to vector<2x8x8xbf16>
    "tpu.trace_start"() <{level = 10 : i32, message = "bqd,bkd->bqk"}> : () -> ()
    %cst_15 = arith.constant dense<0.000000e+00> : vector<2x8x8xf32>
    %41 = tpu.matmul %38, %39, %cst_15 {dimension_numbers = #tpu.dot_dimension_numbers<[2], [2], [1], [1], [0, 0, 0, 1, 1, 1], [0], [0]>} : vector<2x8x8xbf16>, vector<2x8x8xbf16>, vector<2x8x8xf32> -> vector<2x8x8xf32>
    "tpu.trace_stop"() : () -> ()
    %cst_16 = arith.constant dense<0xFF800000> : vector<2x8xf32>
    %42 = vector.multi_reduction <maximumf>, %41, %cst_16 [2] : vector<2x8x8xf32> to vector<2x8xf32>
    %43 = vector.shape_cast %42 : vector<2x8xf32> to vector<2x8x1xf32>
    %44 = vector.broadcast %43 : vector<2x8x1xf32> to vector<2x8x8xf32>
    %45 = arith.subf %41, %44 : vector<2x8x8xf32>
    %46 = math.exp %45 : vector<2x8x8xf32>
    %cst_17 = arith.constant dense<0.000000e+00> : vector<2x8xf32>
    %47 = vector.multi_reduction <add>, %46, %cst_17 [2] : vector<2x8x8xf32> to vector<2x8xf32>
    %48 = vector.shape_cast %47 : vector<2x8xf32> to vector<2x8x1xf32>
    %49 = tpu.reciprocal %48 {approx = true} : vector<2x8x1xf32> -> vector<2x8x1xf32>
    %50 = vector.broadcast %49 : vector<2x8x1xf32> to vector<2x8x8xf32>
    %51 = arith.mulf %46, %50 : vector<2x8x8xf32>
    %52 = arith.truncf %51 : vector<2x8x8xf32> to vector<2x8x8xbf16>
    "tpu.trace_start"() <{level = 10 : i32, message = "bqk,bkd->bqd"}> : () -> ()
    %cst_18 = arith.constant dense<0.000000e+00> : vector<2x8x8xf32>
    %53 = tpu.matmul %52, %40, %cst_18 {dimension_numbers = #tpu.dot_dimension_numbers<[2], [1], [1], [2], [0, 0, 0, 1, 1, 2], [0], [0]>} : vector<2x8x8xbf16>, vector<2x8x8xbf16>, vector<2x8x8xf32> -> vector<2x8x8xf32>
    "tpu.trace_stop"() : () -> ()
    %54 = vector.extract_strided_slice %37 {offsets = [0, 0, 8], sizes = [2, 8, 8], strides = [1, 1, 1]} : vector<2x8x96xbf16> to vector<2x8x8xbf16>
    %55 = vector.extract_strided_slice %37 {offsets = [0, 0, 40], sizes = [2, 8, 8], strides = [1, 1, 1]} : vector<2x8x96xbf16> to vector<2x8x8xbf16>
    %56 = vector.extract_strided_slice %37 {offsets = [0, 0, 72], sizes = [2, 8, 8], strides = [1, 1, 1]} : vector<2x8x96xbf16> to vector<2x8x8xbf16>
    "tpu.trace_start"() <{level = 10 : i32, message = "bqd,bkd->bqk"}> : () -> ()
    %cst_19 = arith.constant dense<0.000000e+00> : vector<2x8x8xf32>
    %57 = tpu.matmul %54, %55, %cst_19 {dimension_numbers = #tpu.dot_dimension_numbers<[2], [2], [1], [1], [0, 0, 0, 1, 1, 1], [0], [0]>} : vector<2x8x8xbf16>, vector<2x8x8xbf16>, vector<2x8x8xf32> -> vector<2x8x8xf32>
    "tpu.trace_stop"() : () -> ()
    %cst_20 = arith.constant dense<0xFF800000> : vector<2x8xf32>
    %58 = vector.multi_reduction <maximumf>, %57, %cst_20 [2] : vector<2x8x8xf32> to vector<2x8xf32>
    %59 = vector.shape_cast %58 : vector<2x8xf32> to vector<2x8x1xf32>
    %60 = vector.broadcast %59 : vector<2x8x1xf32> to vector<2x8x8xf32>
    %61 = arith.subf %57, %60 : vector<2x8x8xf32>
    %62 = math.exp %61 : vector<2x8x8xf32>
    %cst_21 = arith.constant dense<0.000000e+00> : vector<2x8xf32>
    %63 = vector.multi_reduction <add>, %62, %cst_21 [2] : vector<2x8x8xf32> to vector<2x8xf32>
    %64 = vector.shape_cast %63 : vector<2x8xf32> to vector<2x8x1xf32>
    %65 = tpu.reciprocal %64 {approx = true} : vector<2x8x1xf32> -> vector<2x8x1xf32>
    %66 = vector.broadcast %65 : vector<2x8x1xf32> to vector<2x8x8xf32>
    %67 = arith.mulf %62, %66 : vector<2x8x8xf32>
    %68 = arith.truncf %67 : vector<2x8x8xf32> to vector<2x8x8xbf16>
    "tpu.trace_start"() <{level = 10 : i32, message = "bqk,bkd->bqd"}> : () -> ()
    %cst_22 = arith.constant dense<0.000000e+00> : vector<2x8x8xf32>
    %69 = tpu.matmul %68, %56, %cst_22 {dimension_numbers = #tpu.dot_dimension_numbers<[2], [1], [1], [2], [0, 0, 0, 1, 1, 2], [0], [0]>} : vector<2x8x8xbf16>, vector<2x8x8xbf16>, vector<2x8x8xf32> -> vector<2x8x8xf32>
    "tpu.trace_stop"() : () -> ()
    %70 = vector.extract_strided_slice %37 {offsets = [0, 0, 16], sizes = [2, 8, 8], strides = [1, 1, 1]} : vector<2x8x96xbf16> to vector<2x8x8xbf16>
    %71 = vector.extract_strided_slice %37 {offsets = [0, 0, 48], sizes = [2, 8, 8], strides = [1, 1, 1]} : vector<2x8x96xbf16> to vector<2x8x8xbf16>
    %72 = vector.extract_strided_slice %37 {offsets = [0, 0, 80], sizes = [2, 8, 8], strides = [1, 1, 1]} : vector<2x8x96xbf16> to vector<2x8x8xbf16>
    "tpu.trace_start"() <{level = 10 : i32, message = "bqd,bkd->bqk"}> : () -> ()
    %cst_23 = arith.constant dense<0.000000e+00> : vector<2x8x8xf32>
    %73 = tpu.matmul %70, %71, %cst_23 {dimension_numbers = #tpu.dot_dimension_numbers<[2], [2], [1], [1], [0, 0, 0, 1, 1, 1], [0], [0]>} : vector<2x8x8xbf16>, vector<2x8x8xbf16>, vector<2x8x8xf32> -> vector<2x8x8xf32>
    "tpu.trace_stop"() : () -> ()
    %cst_24 = arith.constant dense<0xFF800000> : vector<2x8xf32>
    %74 = vector.multi_reduction <maximumf>, %73, %cst_24 [2] : vector<2x8x8xf32> to vector<2x8xf32>
    %75 = vector.shape_cast %74 : vector<2x8xf32> to vector<2x8x1xf32>
    %76 = vector.broadcast %75 : vector<2x8x1xf32> to vector<2x8x8xf32>
    %77 = arith.subf %73, %76 : vector<2x8x8xf32>
    %78 = math.exp %77 : vector<2x8x8xf32>
    %cst_25 = arith.constant dense<0.000000e+00> : vector<2x8xf32>
    %79 = vector.multi_reduction <add>, %78, %cst_25 [2] : vector<2x8x8xf32> to vector<2x8xf32>
    %80 = vector.shape_cast %79 : vector<2x8xf32> to vector<2x8x1xf32>
    %81 = tpu.reciprocal %80 {approx = true} : vector<2x8x1xf32> -> vector<2x8x1xf32>
    %82 = vector.broadcast %81 : vector<2x8x1xf32> to vector<2x8x8xf32>
    %83 = arith.mulf %78, %82 : vector<2x8x8xf32>
    %84 = arith.truncf %83 : vector<2x8x8xf32> to vector<2x8x8xbf16>
    "tpu.trace_start"() <{level = 10 : i32, message = "bqk,bkd->bqd"}> : () -> ()
    %cst_26 = arith.constant dense<0.000000e+00> : vector<2x8x8xf32>
    %85 = tpu.matmul %84, %72, %cst_26 {dimension_numbers = #tpu.dot_dimension_numbers<[2], [1], [1], [2], [0, 0, 0, 1, 1, 2], [0], [0]>} : vector<2x8x8xbf16>, vector<2x8x8xbf16>, vector<2x8x8xf32> -> vector<2x8x8xf32>
    "tpu.trace_stop"() : () -> ()
    %86 = vector.extract_strided_slice %37 {offsets = [0, 0, 24], sizes = [2, 8, 8], strides = [1, 1, 1]} : vector<2x8x96xbf16> to vector<2x8x8xbf16>
    %87 = vector.extract_strided_slice %37 {offsets = [0, 0, 56], sizes = [2, 8, 8], strides = [1, 1, 1]} : vector<2x8x96xbf16> to vector<2x8x8xbf16>
    %88 = vector.extract_strided_slice %37 {offsets = [0, 0, 88], sizes = [2, 8, 8], strides = [1, 1, 1]} : vector<2x8x96xbf16> to vector<2x8x8xbf16>
    "tpu.trace_start"() <{level = 10 : i32, message = "bqd,bkd->bqk"}> : () -> ()
    %cst_27 = arith.constant dense<0.000000e+00> : vector<2x8x8xf32>
    %89 = tpu.matmul %86, %87, %cst_27 {dimension_numbers = #tpu.dot_dimension_numbers<[2], [2], [1], [1], [0, 0, 0, 1, 1, 1], [0], [0]>} : vector<2x8x8xbf16>, vector<2x8x8xbf16>, vector<2x8x8xf32> -> vector<2x8x8xf32>
    "tpu.trace_stop"() : () -> ()
    %cst_28 = arith.constant dense<0xFF800000> : vector<2x8xf32>
    %90 = vector.multi_reduction <maximumf>, %89, %cst_28 [2] : vector<2x8x8xf32> to vector<2x8xf32>
    %91 = vector.shape_cast %90 : vector<2x8xf32> to vector<2x8x1xf32>
    %92 = vector.broadcast %91 : vector<2x8x1xf32> to vector<2x8x8xf32>
    %93 = arith.subf %89, %92 : vector<2x8x8xf32>
    %94 = math.exp %93 : vector<2x8x8xf32>
    %cst_29 = arith.constant dense<0.000000e+00> : vector<2x8xf32>
    %95 = vector.multi_reduction <add>, %94, %cst_29 [2] : vector<2x8x8xf32> to vector<2x8xf32>
    %96 = vector.shape_cast %95 : vector<2x8xf32> to vector<2x8x1xf32>
    %97 = tpu.reciprocal %96 {approx = true} : vector<2x8x1xf32> -> vector<2x8x1xf32>
    %98 = vector.broadcast %97 : vector<2x8x1xf32> to vector<2x8x8xf32>
    %99 = arith.mulf %94, %98 : vector<2x8x8xf32>
    %100 = arith.truncf %99 : vector<2x8x8xf32> to vector<2x8x8xbf16>
    "tpu.trace_start"() <{level = 10 : i32, message = "bqk,bkd->bqd"}> : () -> ()
    %cst_30 = arith.constant dense<0.000000e+00> : vector<2x8x8xf32>
    %101 = tpu.matmul %100, %88, %cst_30 {dimension_numbers = #tpu.dot_dimension_numbers<[2], [1], [1], [2], [0, 0, 0, 1, 1, 2], [0], [0]>} : vector<2x8x8xbf16>, vector<2x8x8xbf16>, vector<2x8x8xf32> -> vector<2x8x8xf32>
    "tpu.trace_stop"() : () -> ()
    %102 = tpu.concatenate %53, %69, %85, %101 in 2 : vector<2x8x8xf32>, vector<2x8x8xf32>, vector<2x8x8xf32>, vector<2x8x8xf32> -> vector<2x8x32xf32>
    %103 = arith.truncf %102 : vector<2x8x32xf32> to vector<2x8x32xbf16>
    %c0_31 = arith.constant 0 : index
    %c0_32 = arith.constant 0 : index
    %c0_33 = arith.constant 0 : index
    %104 = vector.load %arg15[%c0_31, %c0_32, %c0_33] : memref<2x8x32xbf16, #tpu.memory_space<vmem>>, vector<2x8x32xbf16>
    tpu.vector_store %arg15[%c0_31, %c0_32, %c0_33], %103 {strides = array<i32>} : memref<2x8x32xbf16, #tpu.memory_space<vmem>>, vector<2x8x32xbf16>,
    %c0_34 = arith.constant 0 : index
    %c0_35 = arith.constant 0 : index
    %c0_36 = arith.constant 0 : index
    %105 = vector.load %arg15[%c0_34, %c0_35, %c0_36] : memref<2x8x32xbf16, #tpu.memory_space<vmem>>, vector<2x8x32xbf16>
    %106 = vector.shape_cast %105 : vector<2x8x32xbf16> to vector<16x32xbf16>
    %c0_37 = arith.constant 0 : index
    %c0_38 = arith.constant 0 : index
    %107 = vector.load %arg6[%c0_37, %c0_38] : memref<32x32xbf16, #tpu.memory_space<vmem>>, vector<32x32xbf16>
    %cst_39 = arith.constant dense<0.000000e+00> : vector<16x32xf32>
    %108 = tpu.matmul %106, %107, %cst_39 {dimension_numbers = #tpu.dot_dimension_numbers<[1], [0], [0], [1], [0, 0, 1, 1], [], []>} : vector<16x32xbf16>, vector<32x32xbf16>, vector<16x32xf32> -> vector<16x32xf32>
    %c0_40 = arith.constant 0 : index
    %c0_41 = arith.constant 0 : index
    %109 = vector.load %arg7[%c0_40, %c0_41] : memref<1x32xf32, #tpu.memory_space<vmem>>, vector<1x32xf32>
    %110 = vector.broadcast %109 : vector<1x32xf32> to vector<16x32xf32>
    %111 = arith.addf %108, %110 : vector<16x32xf32>
    %112 = vector.shape_cast %0 : vector<2x8x32xf32> to vector<16x32xf32>
    %113 = arith.addf %112, %111 : vector<16x32xf32>
    %c0_42 = arith.constant 0 : index
    %c0_43 = arith.constant 0 : index
    %114 = vector.load %arg8[%c0_42, %c0_43] : memref<1x32xf32, #tpu.memory_space<vmem>>, vector<1x32xf32>
    %c0_44 = arith.constant 0 : index
    %c0_45 = arith.constant 0 : index
    %115 = vector.load %arg9[%c0_44, %c0_45] : memref<1x32xf32, #tpu.memory_space<vmem>>, vector<1x32xf32>
    %cst_46 = arith.constant dense<0.000000e+00> : vector<16xf32>
    %116 = vector.multi_reduction <add>, %113, %cst_46 [1] : vector<16x32xf32> to vector<16xf32>
    %117 = vector.shape_cast %116 : vector<16xf32> to vector<16x1xf32>
    %cst_47 = arith.constant 3.200000e+01 : f32
    %118 = vector.broadcast %cst_47 : f32 to vector<16x1xf32>
    %119 = arith.divf %117, %118 : vector<16x1xf32>
    %120 = vector.broadcast %119 : vector<16x1xf32> to vector<16x32xf32>
    %121 = arith.subf %113, %120 : vector<16x32xf32>
    %122 = vector.broadcast %119 : vector<16x1xf32> to vector<16x32xf32>
    %123 = arith.subf %113, %122 : vector<16x32xf32>
    %124 = arith.mulf %121, %123 : vector<16x32xf32>
    %cst_48 = arith.constant dense<0.000000e+00> : vector<16xf32>
    %125 = vector.multi_reduction <add>, %124, %cst_48 [1] : vector<16x32xf32> to vector<16xf32>
    %126 = vector.shape_cast %125 : vector<16xf32> to vector<16x1xf32>
    %cst_49 = arith.constant 3.200000e+01 : f32
    %127 = vector.broadcast %cst_49 : f32 to vector<16x1xf32>
    %128 = arith.divf %126, %127 : vector<16x1xf32>
    %129 = vector.broadcast %119 : vector<16x1xf32> to vector<16x32xf32>
    %130 = arith.subf %113, %129 : vector<16x32xf32>
    %cst_50 = arith.constant 9.99999974E-6 : f32
    %131 = vector.broadcast %cst_50 : f32 to vector<16x1xf32>
    %132 = arith.addf %128, %131 : vector<16x1xf32>
    %133 = math.rsqrt %132 : vector<16x1xf32>
    %134 = vector.broadcast %133 : vector<16x1xf32> to vector<16x32xf32>
    %135 = arith.mulf %130, %134 : vector<16x32xf32>
    %136 = vector.broadcast %114 : vector<1x32xf32> to vector<16x32xf32>
    %137 = arith.mulf %135, %136 : vector<16x32xf32>
    %138 = vector.broadcast %115 : vector<1x32xf32> to vector<16x32xf32>
    %139 = arith.addf %137, %138 : vector<16x32xf32>
    %140 = arith.truncf %139 : vector<16x32xf32> to vector<16x32xbf16>
    %c0_51 = arith.constant 0 : index
    %c0_52 = arith.constant 0 : index
    %141 = vector.load %arg10[%c0_51, %c0_52] : memref<32x128xbf16, #tpu.memory_space<vmem>>, vector<32x128xbf16>
    %cst_53 = arith.constant dense<0.000000e+00> : vector<16x128xf32>
    %142 = tpu.matmul %140, %141, %cst_53 {dimension_numbers = #tpu.dot_dimension_numbers<[1], [0], [0], [1], [0, 0, 1, 1], [], []>} : vector<16x32xbf16>, vector<32x128xbf16>, vector<16x128xf32> -> vector<16x128xf32>
    %c0_54 = arith.constant 0 : index
    %c0_55 = arith.constant 0 : index
    %143 = vector.load %arg11[%c0_54, %c0_55] : memref<1x128xf32, #tpu.memory_space<vmem>>, vector<1x128xf32>
    %144 = vector.broadcast %143 : vector<1x128xf32> to vector<16x128xf32>
    %145 = arith.addf %142, %144 : vector<16x128xf32>
    %cst_56 = arith.constant 1.702000e+00 : f32
    %146 = vector.broadcast %cst_56 : f32 to vector<16x128xf32>
    %147 = arith.mulf %146, %145 : vector<16x128xf32>
    %148 = arith.negf %147 : vector<16x128xf32>
    %149 = math.exp %148 : vector<16x128xf32>
    %cst_57 = arith.constant 1.000000e+00 : f32
    %150 = vector.broadcast %cst_57 : f32 to vector<16x128xf32>
    %151 = arith.addf %150, %149 : vector<16x128xf32>
    %152 = arith.divf %150, %151 : vector<16x128xf32>
    %153 = arith.mulf %145, %152 : vector<16x128xf32>
    %154 = arith.truncf %153 : vector<16x128xf32> to vector<16x128xbf16>
    %c0_58 = arith.constant 0 : index
    %c0_59 = arith.constant 0 : index
    %155 = vector.load %arg12[%c0_58, %c0_59] : memref<128x32xbf16, #tpu.memory_space<vmem>>, vector<128x32xbf16>
    %cst_60 = arith.constant dense<0.000000e+00> : vector<16x32xf32>
    %156 = tpu.matmul %154, %155, %cst_60 {dimension_numbers = #tpu.dot_dimension_numbers<[1], [0], [0], [1], [0, 0, 1, 1], [], []>} : vector<16x128xbf16>, vector<128x32xbf16>, vector<16x32xf32> -> vector<16x32xf32>
    %c0_61 = arith.constant 0 : index
    %c0_62 = arith.constant 0 : index
    %157 = vector.load %arg13[%c0_61, %c0_62] : memref<1x32xf32, #tpu.memory_space<vmem>>, vector<1x32xf32>
    %158 = vector.broadcast %157 : vector<1x32xf32> to vector<16x32xf32>
    %159 = arith.addf %156, %158 : vector<16x32xf32>
    %160 = arith.addf %113, %159 : vector<16x32xf32>
    %161 = vector.shape_cast %160 : vector<16x32xf32> to vector<2x8x32xf32>
    %c0_63 = arith.constant 0 : index
    %c0_64 = arith.constant 0 : index
    %c0_65 = arith.constant 0 : index
    %162 = vector.load %arg14[%c0_63, %c0_64, %c0_65] : memref<2x8x32xf32, #tpu.memory_space<vmem>>, vector<2x8x32xf32>
    tpu.vector_store %arg14[%c0_63, %c0_64, %c0_65], %161 {strides = array<i32>} : memref<2x8x32xf32, #tpu.memory_space<vmem>>, vector<2x8x32xf32>,
    return
  }
  func.func @transform_0(%arg0: i32) -> (i32, i32, i32) {
    %c0_i32 = arith.constant 0 : i32
    %c0_i32_0 = arith.constant 0 : i32
    %c0_i32_1 = arith.constant 0 : i32
    return %arg0, %c0_i32, %c0_i32_0 : i32, i32, i32
  }
  func.func @transform_1(%arg0: i32) -> (i32, i32) {
    %c0_i32 = arith.constant 0 : i32
    %c0_i32_0 = arith.constant 0 : i32
    %c0_i32_1 = arith.constant 0 : i32
    return %c0_i32, %c0_i32_0 : i32, i32
  }
  func.func @transform_2(%arg0: i32) -> (i32, i32) {
    %c0_i32 = arith.constant 0 : i32
    %c0_i32_0 = arith.constant 0 : i32
    %c0_i32_1 = arith.constant 0 : i32
    return %c0_i32, %c0_i32_0 : i32, i32
  }
  func.func @transform_3(%arg0: i32) -> (i32, i32) {
    %c0_i32 = arith.constant 0 : i32
    %c0_i32_0 = arith.constant 0 : i32
    %c0_i32_1 = arith.constant 0 : i32
    return %c0_i32, %c0_i32_0 : i32, i32
  }
  func.func @transform_4(%arg0: i32) -> (i32, i32) {
    %c0_i32 = arith.constant 0 : i32
    %c0_i32_0 = arith.constant 0 : i32
    %c0_i32_1 = arith.constant 0 : i32
    return %c0_i32, %c0_i32_0 : i32, i32
  }
  func.func @transform_5(%arg0: i32) -> (i32, i32) {
    %c0_i32 = arith.constant 0 : i32
    %c0_i32_0 = arith.constant 0 : i32
    %c0_i32_1 = arith.constant 0 : i32
    return %c0_i32, %c0_i32_0 : i32, i32
  }
  func.func @transform_6(%arg0: i32) -> (i32, i32) {
    %c0_i32 = arith.constant 0 : i32
    %c0_i32_0 = arith.constant 0 : i32
    %c0_i32_1 = arith.constant 0 : i32
    return %c0_i32, %c0_i32_0 : i32, i32
  }
  func.func @transform_7(%arg0: i32) -> (i32, i32) {
    %c0_i32 = arith.constant 0 : i32
    %c0_i32_0 = arith.constant 0 : i32
    %c0_i32_1 = arith.constant 0 : i32
    return %c0_i32, %c0_i32_0 : i32, i32
  }
  func.func @transform_8(%arg0: i32) -> (i32, i32) {
    %c0_i32 = arith.constant 0 : i32
    %c0_i32_0 = arith.constant 0 : i32
    %c0_i32_1 = arith.constant 0 : i32
    return %c0_i32, %c0_i32_0 : i32, i32
  }
  func.func @transform_9(%arg0: i32) -> (i32, i32) {
    %c0_i32 = arith.constant 0 : i32
    %c0_i32_0 = arith.constant 0 : i32
    %c0_i32_1 = arith.constant 0 : i32
    return %c0_i32, %c0_i32_0 : i32, i32
  }
  func.func @transform_10(%arg0: i32) -> (i32, i32) {
    %c0_i32 = arith.constant 0 : i32
    %c0_i32_0 = arith.constant 0 : i32
    %c0_i32_1 = arith.constant 0 : i32
    return %c0_i32, %c0_i32_0 : i32, i32
  }
  func.func @transform_11(%arg0: i32) -> (i32, i32) {
    %c0_i32 = arith.constant 0 : i32
    %c0_i32_0 = arith.constant 0 : i32
    %c0_i32_1 = arith.constant 0 : i32
    return %c0_i32, %c0_i32_0 : i32, i32
  }
  func.func @transform_12(%arg0: i32) -> (i32, i32) {
    %c0_i32 = arith.constant 0 : i32
    %c0_i32_0 = arith.constant 0 : i32
    %c0_i32_1 = arith.constant 0 : i32
    return %c0_i32, %c0_i32_0 : i32, i32
  }
  func.func @transform_13(%arg0: i32) -> (i32, i32, i32) {
    %c0_i32 = arith.constant 0 : i32
    %c0_i32_0 = arith.constant 0 : i32
    %c0_i32_1 = arith.constant 0 : i32
    return %arg0, %c0_i32, %c0_i32_0 : i32, i32, i32
  }
}

module attributes {stable_mosaic.version = 11 : i64} {
  func.func @_block_kernel(%arg0: i32, %arg1: memref<2x8x32xf32, #tpu.memory_space<vmem>>, %arg2: memref<1x32xf32, #tpu.memory_space<vmem>>, %arg3: memref<1x32xf32, #tpu.memory_space<vmem>>, %arg4: memref<32x96xbf16, #tpu.memory_space<vmem>>, %arg5: memref<1x96xf32, #tpu.memory_space<vmem>>, %arg6: memref<32x32xbf16, #tpu.memory_space<vmem>>, %arg7: memref<1x32xf32, #tpu.memory_space<vmem>>, %arg8: memref<1x32xf32, #tpu.memory_space<vmem>>, %arg9: memref<1x32xf32, #tpu.memory_space<vmem>>, %arg10: memref<32x128xbf16, #tpu.memory_space<vmem>>, %arg11: memref<1x128xf32, #tpu.memory_space<vmem>>, %arg12: memref<128x32xbf16, #tpu.memory_space<vmem>>, %arg13: memref<1x32xf32, #tpu.memory_space<vmem>>, %arg14: memref<2x8x32xf32, #tpu.memory_space<vmem>>, %arg15: memref<2x8x32xbf16, #tpu.memory_space<vmem>>) attributes {dimension_semantics = [#tpu.dimension_semantics<parallel>], iteration_bounds = array<i64: 2>, scalar_prefetch = 0 : i64, scratch_operands = 1 : i64, tpu.core_type = #tpu.core_type<tc>, window_params = [{transform_indices = @transform_0, window_bounds = array<i64: 2, 8, 32>}, {pipeline_mode = #tpu.pipeline_mode<synchronous>, transform_indices = @transform_1, window_bounds = array<i64: 1, 32>}, {pipeline_mode = #tpu.pipeline_mode<synchronous>, transform_indices = @transform_2, window_bounds = array<i64: 1, 32>}, {pipeline_mode = #tpu.pipeline_mode<synchronous>, transform_indices = @transform_3, window_bounds = array<i64: 32, 96>}, {pipeline_mode = #tpu.pipeline_mode<synchronous>, transform_indices = @transform_4, window_bounds = array<i64: 1, 96>}, {pipeline_mode = #tpu.pipeline_mode<synchronous>, transform_indices = @transform_5, window_bounds = array<i64: 32, 32>}, {pipeline_mode = #tpu.pipeline_mode<synchronous>, transform_indices = @transform_6, window_bounds = array<i64: 1, 32>}, {pipeline_mode = #tpu.pipeline_mode<synchronous>, transform_indices = @transform_7, window_bounds = array<i64: 1, 32>}, {pipeline_mode = #tpu.pipeline_mode<synchronous>, transform_indices = @transform_8, window_bounds = array<i64: 1, 32>}, {pipeline_mode = #tpu.pipeline_mode<synchronous>, transform_indices = @transform_9, window_bounds = array<i64: 32, 128>}, {pipeline_mode = #tpu.pipeline_mode<synchronous>, transform_indices = @transform_10, window_bounds = array<i64: 1, 128>}, {pipeline_mode = #tpu.pipeline_mode<synchronous>, transform_indices = @transform_11, window_bounds = array<i64: 128, 32>}, {pipeline_mode = #tpu.pipeline_mode<synchronous>, transform_indices = @transform_12, window_bounds = array<i64: 1, 32>}, {transform_indices = @transform_13, window_bounds = array<i64: 2, 8, 32>}]} {
    %c0 = arith.constant 0 : index
    %c0_0 = arith.constant 0 : index
    %c0_1 = arith.constant 0 : index
    %0 = vector.load %arg1[%c0, %c0_0, %c0_1] : memref<2x8x32xf32, #tpu.memory_space<vmem>>, vector<2x8x32xf32>
    %c0_2 = arith.constant 0 : index
    %c0_3 = arith.constant 0 : index
    %1 = vector.load %arg2[%c0_2, %c0_3] : memref<1x32xf32, #tpu.memory_space<vmem>>, vector<1x32xf32>
    %c0_4 = arith.constant 0 : index
    %c0_5 = arith.constant 0 : index
    %2 = vector.load %arg3[%c0_4, %c0_5] : memref<1x32xf32, #tpu.memory_space<vmem>>, vector<1x32xf32>
    %cst = arith.constant dense<0.000000e+00> : vector<2x8xf32>
    %3 = vector.multi_reduction <add>, %0, %cst [2] : vector<2x8x32xf32> to vector<2x8xf32>
    %4 = vector.shape_cast %3 : vector<2x8xf32> to vector<2x8x1xf32>
    %cst_6 = arith.constant 3.200000e+01 : f32
    %5 = vector.broadcast %cst_6 : f32 to vector<2x8x1xf32>
    %6 = arith.divf %4, %5 : vector<2x8x1xf32>
    %7 = vector.broadcast %6 : vector<2x8x1xf32> to vector<2x8x32xf32>
    %8 = arith.subf %0, %7 : vector<2x8x32xf32>
    %9 = vector.broadcast %6 : vector<2x8x1xf32> to vector<2x8x32xf32>
    %10 = arith.subf %0, %9 : vector<2x8x32xf32>
    %11 = arith.mulf %8, %10 : vector<2x8x32xf32>
    %cst_7 = arith.constant dense<0.000000e+00> : vector<2x8xf32>
    %12 = vector.multi_reduction <add>, %11, %cst_7 [2] : vector<2x8x32xf32> to vector<2x8xf32>
    %13 = vector.shape_cast %12 : vector<2x8xf32> to vector<2x8x1xf32>
    %cst_8 = arith.constant 3.200000e+01 : f32
    %14 = vector.broadcast %cst_8 : f32 to vector<2x8x1xf32>
    %15 = arith.divf %13, %14 : vector<2x8x1xf32>
    %16 = vector.broadcast %6 : vector<2x8x1xf32> to vector<2x8x32xf32>
    %17 = arith.subf %0, %16 : vector<2x8x32xf32>
    %cst_9 = arith.constant 9.99999974E-6 : f32
    %18 = vector.broadcast %cst_9 : f32 to vector<2x8x1xf32>
    %19 = arith.addf %15, %18 : vector<2x8x1xf32>
    %20 = math.rsqrt %19 : vector<2x8x1xf32>
    %21 = vector.broadcast %20 : vector<2x8x1xf32> to vector<2x8x32xf32>
    %22 = arith.mulf %17, %21 : vector<2x8x32xf32>
    %23 = vector.shape_cast %1 : vector<1x32xf32> to vector<1x1x32xf32>
    %24 = vector.broadcast %23 : vector<1x1x32xf32> to vector<2x8x32xf32>
    %25 = arith.mulf %22, %24 : vector<2x8x32xf32>
    %26 = vector.shape_cast %2 : vector<1x32xf32> to vector<1x1x32xf32>
    %27 = vector.broadcast %26 : vector<1x1x32xf32> to vector<2x8x32xf32>
    %28 = arith.addf %25, %27 : vector<2x8x32xf32>
    %29 = vector.shape_cast %28 : vector<2x8x32xf32> to vector<16x32xf32>
    %30 = arith.truncf %29 : vector<16x32xf32> to vector<16x32xbf16>
    %c0_10 = arith.constant 0 : index
    %c0_11 = arith.constant 0 : index
    %31 = vector.load %arg4[%c0_10, %c0_11] : memref<32x96xbf16, #tpu.memory_space<vmem>>, vector<32x96xbf16>
    %cst_12 = arith.constant dense<0.000000e+00> : vector<16x96xf32>
    %32 = tpu.matmul %30, %31, %cst_12 {dimension_numbers = #tpu.dot_dimension_numbers<[1], [0], [0], [1], [0, 0, 1, 1], [], []>} : vector<16x32xbf16>, vector<32x96xbf16>, vector<16x96xf32> -> vector<16x96xf32>
    %c0_13 = arith.constant 0 : index
    %c0_14 = arith.constant 0 : index
    %33 = vector.load %arg5[%c0_13, %c0_14] : memref<1x96xf32, #tpu.memory_space<vmem>>, vector<1x96xf32>
    %34 = vector.broadcast %33 : vector<1x96xf32> to vector<16x96xf32>
    %35 = arith.addf %32, %34 : vector<16x96xf32>
    %36 = arith.truncf %35 : vector<16x96xf32> to vector<16x96xbf16>
    %37 = vector.shape_cast %36 : vector<16x96xbf16> to vector<2x8x96xbf16>
    %38 = vector.extract_strided_slice %37 {offsets = [0, 0, 0], sizes = [2, 8, 8], strides = [1, 1, 1]} : vector<2x8x96xbf16> to vector<2x8x8xbf16>
    %39 = vector.extract_strided_slice %37 {offsets = [0, 0, 32], sizes = [2, 8, 8], strides = [1, 1, 1]} : vector<2x8x96xbf16> to vector<2x8x8xbf16>
    %40 = vector.extract_strided_slice %37 {offsets = [0, 0, 64], sizes = [2, 8, 8], strides = [1, 1, 1]} : vector<2x8x96xbf16> to vector<2x8x8xbf16>
    "tpu.trace_start"() <{level = 10 : i32, message = "bqd,bkd->bqk"}> : () -> ()
    %cst_15 = arith.constant dense<0.000000e+00> : vector<2x8x8xf32>
    %41 = tpu.matmul %38, %39, %cst_15 {dimension_numbers = #tpu.dot_dimension_numbers<[2], [2], [1], [1], [0, 0, 0, 1, 1, 1], [0], [0]>} : vector<2x8x8xbf16>, vector<2x8x8xbf16>, vector<2x8x8xf32> -> vector<2x8x8xf32>
    "tpu.trace_stop"() : () -> ()
    %cst_16 = arith.constant dense<0xFF800000> : vector<2x8xf32>
    %42 = vector.multi_reduction <maximumf>, %41, %cst_16 [2] : vector<2x8x8xf32> to vector<2x8xf32>
    %43 = vector.shape_cast %42 : vector<2x8xf32> to vector<2x8x1xf32>
    %44 = vector.broadcast %43 : vector<2x8x1xf32> to vector<2x8x8xf32>
    %45 = arith.subf %41, %44 : vector<2x8x8xf32>
    %46 = math.exp %45 : vector<2x8x8xf32>
    %cst_17 = arith.constant dense<0.000000e+00> : vector<2x8xf32>
    %47 = vector.multi_reduction <add>, %46, %cst_17 [2] : vector<2x8x8xf32> to vector<2x8xf32>
    %48 = vector.shape_cast %47 : vector<2x8xf32> to vector<2x8x1xf32>
    %49 = tpu.reciprocal %48 {approx = true} : vector<2x8x1xf32> -> vector<2x8x1xf32>
    %50 = vector.broadcast %49 : vector<2x8x1xf32> to vector<2x8x8xf32>
    %51 = arith.mulf %46, %50 : vector<2x8x8xf32>
    %52 = arith.truncf %51 : vector<2x8x8xf32> to vector<2x8x8xbf16>
    "tpu.trace_start"() <{level = 10 : i32, message = "bqk,bkd->bqd"}> : () -> ()
    %cst_18 = arith.constant dense<0.000000e+00> : vector<2x8x8xf32>
    %53 = tpu.matmul %52, %40, %cst_18 {dimension_numbers = #tpu.dot_dimension_numbers<[2], [1], [1], [2], [0, 0, 0, 1, 1, 2], [0], [0]>} : vector<2x8x8xbf16>, vector<2x8x8xbf16>, vector<2x8x8xf32> -> vector<2x8x8xf32>
    "tpu.trace_stop"() : () -> ()
    %54 = vector.extract_strided_slice %37 {offsets = [0, 0, 8], sizes = [2, 8, 8], strides = [1, 1, 1]} : vector<2x8x96xbf16> to vector<2x8x8xbf16>
    %55 = vector.extract_strided_slice %37 {offsets = [0, 0, 40], sizes = [2, 8, 8], strides = [1, 1, 1]} : vector<2x8x96xbf16> to vector<2x8x8xbf16>
    %56 = vector.extract_strided_slice %37 {offsets = [0, 0, 72], sizes = [2, 8, 8], strides = [1, 1, 1]} : vector<2x8x96xbf16> to vector<2x8x8xbf16>
    "tpu.trace_start"() <{level = 10 : i32, message = "bqd,bkd->bqk"}> : () -> ()
    %cst_19 = arith.constant dense<0.000000e+00> : vector<2x8x8xf32>
    %57 = tpu.matmul %54, %55, %cst_19 {dimension_numbers = #tpu.dot_dimension_numbers<[2], [2], [1], [1], [0, 0, 0, 1, 1, 1], [0], [0]>} : vector<2x8x8xbf16>, vector<2x8x8xbf16>, vector<2x8x8xf32> -> vector<2x8x8xf32>
    "tpu.trace_stop"() : () -> ()
    %cst_20 = arith.constant dense<0xFF800000> : vector<2x8xf32>
    %58 = vector.multi_reduction <maximumf>, %57, %cst_20 [2] : vector<2x8x8xf32> to vector<2x8xf32>
    %59 = vector.shape_cast %58 : vector<2x8xf32> to vector<2x8x1xf32>
    %60 = vector.broadcast %59 : vector<2x8x1xf32> to vector<2x8x8xf32>
    %61 = arith.subf %57, %60 : vector<2x8x8xf32>
    %62 = math.exp %61 : vector<2x8x8xf32>
    %cst_21 = arith.constant dense<0.000000e+00> : vector<2x8xf32>
    %63 = vector.multi_reduction <add>, %62, %cst_21 [2] : vector<2x8x8xf32> to vector<2x8xf32>
    %64 = vector.shape_cast %63 : vector<2x8xf32> to vector<2x8x1xf32>
    %65 = tpu.reciprocal %64 {approx = true} : vector<2x8x1xf32> -> vector<2x8x1xf32>
    %66 = vector.broadcast %65 : vector<2x8x1xf32> to vector<2x8x8xf32>
    %67 = arith.mulf %62, %66 : vector<2x8x8xf32>
    %68 = arith.truncf %67 : vector<2x8x8xf32> to vector<2x8x8xbf16>
    "tpu.trace_start"() <{level = 10 : i32, message = "bqk,bkd->bqd"}> : () -> ()
    %cst_22 = arith.constant dense<0.000000e+00> : vector<2x8x8xf32>
    %69 = tpu.matmul %68, %56, %cst_22 {dimension_numbers = #tpu.dot_dimension_numbers<[2], [1], [1], [2], [0, 0, 0, 1, 1, 2], [0], [0]>} : vector<2x8x8xbf16>, vector<2x8x8xbf16>, vector<2x8x8xf32> -> vector<2x8x8xf32>
    "tpu.trace_stop"() : () -> ()
    %70 = vector.extract_strided_slice %37 {offsets = [0, 0, 16], sizes = [2, 8, 8], strides = [1, 1, 1]} : vector<2x8x96xbf16> to vector<2x8x8xbf16>
    %71 = vector.extract_strided_slice %37 {offsets = [0, 0, 48], sizes = [2, 8, 8], strides = [1, 1, 1]} : vector<2x8x96xbf16> to vector<2x8x8xbf16>
    %72 = vector.extract_strided_slice %37 {offsets = [0, 0, 80], sizes = [2, 8, 8], strides = [1, 1, 1]} : vector<2x8x96xbf16> to vector<2x8x8xbf16>
    "tpu.trace_start"() <{level = 10 : i32, message = "bqd,bkd->bqk"}> : () -> ()
    %cst_23 = arith.constant dense<0.000000e+00> : vector<2x8x8xf32>
    %73 = tpu.matmul %70, %71, %cst_23 {dimension_numbers = #tpu.dot_dimension_numbers<[2], [2], [1], [1], [0, 0, 0, 1, 1, 1], [0], [0]>} : vector<2x8x8xbf16>, vector<2x8x8xbf16>, vector<2x8x8xf32> -> vector<2x8x8xf32>
    "tpu.trace_stop"() : () -> ()
    %cst_24 = arith.constant dense<0xFF800000> : vector<2x8xf32>
    %74 = vector.multi_reduction <maximumf>, %73, %cst_24 [2] : vector<2x8x8xf32> to vector<2x8xf32>
    %75 = vector.shape_cast %74 : vector<2x8xf32> to vector<2x8x1xf32>
    %76 = vector.broadcast %75 : vector<2x8x1xf32> to vector<2x8x8xf32>
    %77 = arith.subf %73, %76 : vector<2x8x8xf32>
    %78 = math.exp %77 : vector<2x8x8xf32>
    %cst_25 = arith.constant dense<0.000000e+00> : vector<2x8xf32>
    %79 = vector.multi_reduction <add>, %78, %cst_25 [2] : vector<2x8x8xf32> to vector<2x8xf32>
    %80 = vector.shape_cast %79 : vector<2x8xf32> to vector<2x8x1xf32>
    %81 = tpu.reciprocal %80 {approx = true} : vector<2x8x1xf32> -> vector<2x8x1xf32>
    %82 = vector.broadcast %81 : vector<2x8x1xf32> to vector<2x8x8xf32>
    %83 = arith.mulf %78, %82 : vector<2x8x8xf32>
    %84 = arith.truncf %83 : vector<2x8x8xf32> to vector<2x8x8xbf16>
    "tpu.trace_start"() <{level = 10 : i32, message = "bqk,bkd->bqd"}> : () -> ()
    %cst_26 = arith.constant dense<0.000000e+00> : vector<2x8x8xf32>
    %85 = tpu.matmul %84, %72, %cst_26 {dimension_numbers = #tpu.dot_dimension_numbers<[2], [1], [1], [2], [0, 0, 0, 1, 1, 2], [0], [0]>} : vector<2x8x8xbf16>, vector<2x8x8xbf16>, vector<2x8x8xf32> -> vector<2x8x8xf32>
    "tpu.trace_stop"() : () -> ()
    %86 = vector.extract_strided_slice %37 {offsets = [0, 0, 24], sizes = [2, 8, 8], strides = [1, 1, 1]} : vector<2x8x96xbf16> to vector<2x8x8xbf16>
    %87 = vector.extract_strided_slice %37 {offsets = [0, 0, 56], sizes = [2, 8, 8], strides = [1, 1, 1]} : vector<2x8x96xbf16> to vector<2x8x8xbf16>
    %88 = vector.extract_strided_slice %37 {offsets = [0, 0, 88], sizes = [2, 8, 8], strides = [1, 1, 1]} : vector<2x8x96xbf16> to vector<2x8x8xbf16>
    "tpu.trace_start"() <{level = 10 : i32, message = "bqd,bkd->bqk"}> : () -> ()
    %cst_27 = arith.constant dense<0.000000e+00> : vector<2x8x8xf32>
    %89 = tpu.matmul %86, %87, %cst_27 {dimension_numbers = #tpu.dot_dimension_numbers<[2], [2], [1], [1], [0, 0, 0, 1, 1, 1], [0], [0]>} : vector<2x8x8xbf16>, vector<2x8x8xbf16>, vector<2x8x8xf32> -> vector<2x8x8xf32>
    "tpu.trace_stop"() : () -> ()
    %cst_28 = arith.constant dense<0xFF800000> : vector<2x8xf32>
    %90 = vector.multi_reduction <maximumf>, %89, %cst_28 [2] : vector<2x8x8xf32> to vector<2x8xf32>
    %91 = vector.shape_cast %90 : vector<2x8xf32> to vector<2x8x1xf32>
    %92 = vector.broadcast %91 : vector<2x8x1xf32> to vector<2x8x8xf32>
    %93 = arith.subf %89, %92 : vector<2x8x8xf32>
    %94 = math.exp %93 : vector<2x8x8xf32>
    %cst_29 = arith.constant dense<0.000000e+00> : vector<2x8xf32>
    %95 = vector.multi_reduction <add>, %94, %cst_29 [2] : vector<2x8x8xf32> to vector<2x8xf32>
    %96 = vector.shape_cast %95 : vector<2x8xf32> to vector<2x8x1xf32>
    %97 = tpu.reciprocal %96 {approx = true} : vector<2x8x1xf32> -> vector<2x8x1xf32>
    %98 = vector.broadcast %97 : vector<2x8x1xf32> to vector<2x8x8xf32>
    %99 = arith.mulf %94, %98 : vector<2x8x8xf32>
    %100 = arith.truncf %99 : vector<2x8x8xf32> to vector<2x8x8xbf16>
    "tpu.trace_start"() <{level = 10 : i32, message = "bqk,bkd->bqd"}> : () -> ()
    %cst_30 = arith.constant dense<0.000000e+00> : vector<2x8x8xf32>
    %101 = tpu.matmul %100, %88, %cst_30 {dimension_numbers = #tpu.dot_dimension_numbers<[2], [1], [1], [2], [0, 0, 0, 1, 1, 2], [0], [0]>} : vector<2x8x8xbf16>, vector<2x8x8xbf16>, vector<2x8x8xf32> -> vector<2x8x8xf32>
    "tpu.trace_stop"() : () -> ()
    %102 = tpu.concatenate %53, %69, %85, %101 in 2 : vector<2x8x8xf32>, vector<2x8x8xf32>, vector<2x8x8xf32>, vector<2x8x8xf32> -> vector<2x8x32xf32>
    %103 = arith.truncf %102 : vector<2x8x32xf32> to vector<2x8x32xbf16>
    %c0_31 = arith.constant 0 : index
    %c0_32 = arith.constant 0 : index
    %c0_33 = arith.constant 0 : index
    %104 = vector.load %arg15[%c0_31, %c0_32, %c0_33] : memref<2x8x32xbf16, #tpu.memory_space<vmem>>, vector<2x8x32xbf16>
    tpu.vector_store %arg15[%c0_31, %c0_32, %c0_33], %103 {strides = array<i32>} : memref<2x8x32xbf16, #tpu.memory_space<vmem>>, vector<2x8x32xbf16>,
    %c0_34 = arith.constant 0 : index
    %c0_35 = arith.constant 0 : index
    %c0_36 = arith.constant 0 : index
    %105 = vector.load %arg15[%c0_34, %c0_35, %c0_36] : memref<2x8x32xbf16, #tpu.memory_space<vmem>>, vector<2x8x32xbf16>
    %106 = vector.shape_cast %105 : vector<2x8x32xbf16> to vector<16x32xbf16>
    %c0_37 = arith.constant 0 : index
    %c0_38 = arith.constant 0 : index
    %107 = vector.load %arg6[%c0_37, %c0_38] : memref<32x32xbf16, #tpu.memory_space<vmem>>, vector<32x32xbf16>
    %cst_39 = arith.constant dense<0.000000e+00> : vector<16x32xf32>
    %108 = tpu.matmul %106, %107, %cst_39 {dimension_numbers = #tpu.dot_dimension_numbers<[1], [0], [0], [1], [0, 0, 1, 1], [], []>} : vector<16x32xbf16>, vector<32x32xbf16>, vector<16x32xf32> -> vector<16x32xf32>
    %c0_40 = arith.constant 0 : index
    %c0_41 = arith.constant 0 : index
    %109 = vector.load %arg7[%c0_40, %c0_41] : memref<1x32xf32, #tpu.memory_space<vmem>>, vector<1x32xf32>
    %110 = vector.broadcast %109 : vector<1x32xf32> to vector<16x32xf32>
    %111 = arith.addf %108, %110 : vector<16x32xf32>
    %112 = vector.shape_cast %0 : vector<2x8x32xf32> to vector<16x32xf32>
    %113 = arith.addf %112, %111 : vector<16x32xf32>
    %c0_42 = arith.constant 0 : index
    %c0_43 = arith.constant 0 : index
    %114 = vector.load %arg8[%c0_42, %c0_43] : memref<1x32xf32, #tpu.memory_space<vmem>>, vector<1x32xf32>
    %c0_44 = arith.constant 0 : index
    %c0_45 = arith.constant 0 : index
    %115 = vector.load %arg9[%c0_44, %c0_45] : memref<1x32xf32, #tpu.memory_space<vmem>>, vector<1x32xf32>
    %cst_46 = arith.constant dense<0.000000e+00> : vector<16xf32>
    %116 = vector.multi_reduction <add>, %113, %cst_46 [1] : vector<16x32xf32> to vector<16xf32>
    %117 = vector.shape_cast %116 : vector<16xf32> to vector<16x1xf32>
    %cst_47 = arith.constant 3.200000e+01 : f32
    %118 = vector.broadcast %cst_47 : f32 to vector<16x1xf32>
    %119 = arith.divf %117, %118 : vector<16x1xf32>
    %120 = vector.broadcast %119 : vector<16x1xf32> to vector<16x32xf32>
    %121 = arith.subf %113, %120 : vector<16x32xf32>
    %122 = vector.broadcast %119 : vector<16x1xf32> to vector<16x32xf32>
    %123 = arith.subf %113, %122 : vector<16x32xf32>
    %124 = arith.mulf %121, %123 : vector<16x32xf32>
    %cst_48 = arith.constant dense<0.000000e+00> : vector<16xf32>
    %125 = vector.multi_reduction <add>, %124, %cst_48 [1] : vector<16x32xf32> to vector<16xf32>
    %126 = vector.shape_cast %125 : vector<16xf32> to vector<16x1xf32>
    %cst_49 = arith.constant 3.200000e+01 : f32
    %127 = vector.broadcast %cst_49 : f32 to vector<16x1xf32>
    %128 = arith.divf %126, %127 : vector<16x1xf32>
    %129 = vector.broadcast %119 : vector<16x1xf32> to vector<16x32xf32>
    %130 = arith.subf %113, %129 : vector<16x32xf32>
    %cst_50 = arith.constant 9.99999974E-6 : f32
    %131 = vector.broadcast %cst_50 : f32 to vector<16x1xf32>
    %132 = arith.addf %128, %131 : vector<16x1xf32>
    %133 = math.rsqrt %132 : vector<16x1xf32>
    %134 = vector.broadcast %133 : vector<16x1xf32> to vector<16x32xf32>
    %135 = arith.mulf %130, %134 : vector<16x32xf32>
    %136 = vector.broadcast %114 : vector<1x32xf32> to vector<16x32xf32>
    %137 = arith.mulf %135, %136 : vector<16x32xf32>
    %138 = vector.broadcast %115 : vector<1x32xf32> to vector<16x32xf32>
    %139 = arith.addf %137, %138 : vector<16x32xf32>
    %140 = arith.truncf %139 : vector<16x32xf32> to vector<16x32xbf16>
    %c0_51 = arith.constant 0 : index
    %c0_52 = arith.constant 0 : index
    %141 = vector.load %arg10[%c0_51, %c0_52] : memref<32x128xbf16, #tpu.memory_space<vmem>>, vector<32x128xbf16>
    %cst_53 = arith.constant dense<0.000000e+00> : vector<16x128xf32>
    %142 = tpu.matmul %140, %141, %cst_53 {dimension_numbers = #tpu.dot_dimension_numbers<[1], [0], [0], [1], [0, 0, 1, 1], [], []>} : vector<16x32xbf16>, vector<32x128xbf16>, vector<16x128xf32> -> vector<16x128xf32>
    %c0_54 = arith.constant 0 : index
    %c0_55 = arith.constant 0 : index
    %143 = vector.load %arg11[%c0_54, %c0_55] : memref<1x128xf32, #tpu.memory_space<vmem>>, vector<1x128xf32>
    %144 = vector.broadcast %143 : vector<1x128xf32> to vector<16x128xf32>
    %145 = arith.addf %142, %144 : vector<16x128xf32>
    %cst_56 = arith.constant 1.702000e+00 : f32
    %146 = vector.broadcast %cst_56 : f32 to vector<16x128xf32>
    %147 = arith.mulf %146, %145 : vector<16x128xf32>
    %148 = arith.negf %147 : vector<16x128xf32>
    %149 = math.exp %148 : vector<16x128xf32>
    %cst_57 = arith.constant 1.000000e+00 : f32
    %150 = vector.broadcast %cst_57 : f32 to vector<16x128xf32>
    %151 = arith.addf %150, %149 : vector<16x128xf32>
    %152 = arith.divf %150, %151 : vector<16x128xf32>
    %153 = arith.mulf %145, %152 : vector<16x128xf32>
    %154 = arith.truncf %153 : vector<16x128xf32> to vector<16x128xbf16>
    %c0_58 = arith.constant 0 : index
    %c0_59 = arith.constant 0 : index
    %155 = vector.load %arg12[%c0_58, %c0_59] : memref<128x32xbf16, #tpu.memory_space<vmem>>, vector<128x32xbf16>
    %cst_60 = arith.constant dense<0.000000e+00> : vector<16x32xf32>
    %156 = tpu.matmul %154, %155, %cst_60 {dimension_numbers = #tpu.dot_dimension_numbers<[1], [0], [0], [1], [0, 0, 1, 1], [], []>} : vector<16x128xbf16>, vector<128x32xbf16>, vector<16x32xf32> -> vector<16x32xf32>
    %c0_61 = arith.constant 0 : index
    %c0_62 = arith.constant 0 : index
    %157 = vector.load %arg13[%c0_61, %c0_62] : memref<1x32xf32, #tpu.memory_space<vmem>>, vector<1x32xf32>
    %158 = vector.broadcast %157 : vector<1x32xf32> to vector<16x32xf32>
    %159 = arith.addf %156, %158 : vector<16x32xf32>
    %160 = arith.addf %113, %159 : vector<16x32xf32>
    %161 = vector.shape_cast %160 : vector<16x32xf32> to vector<2x8x32xf32>
    %c0_63 = arith.constant 0 : index
    %c0_64 = arith.constant 0 : index
    %c0_65 = arith.constant 0 : index
    %162 = vector.load %arg14[%c0_63, %c0_64, %c0_65] : memref<2x8x32xf32, #tpu.memory_space<vmem>>, vector<2x8x32xf32>
    tpu.vector_store %arg14[%c0_63, %c0_64, %c0_65], %161 {strides = array<i32>} : memref<2x8x32xf32, #tpu.memory_space<vmem>>, vector<2x8x32xf32>,
    return
  }
  func.func @transform_0(%arg0: i32) -> (i32, i32, i32) {
    %c0_i32 = arith.constant 0 : i32
    %c0_i32_0 = arith.constant 0 : i32
    %c0_i32_1 = arith.constant 0 : i32
    return %arg0, %c0_i32, %c0_i32_0 : i32, i32, i32
  }
  func.func @transform_1(%arg0: i32) -> (i32, i32) {
    %c0_i32 = arith.constant 0 : i32
    %c0_i32_0 = arith.constant 0 : i32
    %c0_i32_1 = arith.constant 0 : i32
    return %c0_i32, %c0_i32_0 : i32, i32
  }
  func.func @transform_2(%arg0: i32) -> (i32, i32) {
    %c0_i32 = arith.constant 0 : i32
    %c0_i32_0 = arith.constant 0 : i32
    %c0_i32_1 = arith.constant 0 : i32
    return %c0_i32, %c0_i32_0 : i32, i32
  }
  func.func @transform_3(%arg0: i32) -> (i32, i32) {
    %c0_i32 = arith.constant 0 : i32
    %c0_i32_0 = arith.constant 0 : i32
    %c0_i32_1 = arith.constant 0 : i32
    return %c0_i32, %c0_i32_0 : i32, i32
  }
  func.func @transform_4(%arg0: i32) -> (i32, i32) {
    %c0_i32 = arith.constant 0 : i32
    %c0_i32_0 = arith.constant 0 : i32
    %c0_i32_1 = arith.constant 0 : i32
    return %c0_i32, %c0_i32_0 : i32, i32
  }
  func.func @transform_5(%arg0: i32) -> (i32, i32) {
    %c0_i32 = arith.constant 0 : i32
    %c0_i32_0 = arith.constant 0 : i32
    %c0_i32_1 = arith.constant 0 : i32
    return %c0_i32, %c0_i32_0 : i32, i32
  }
  func.func @transform_6(%arg0: i32) -> (i32, i32) {
    %c0_i32 = arith.constant 0 : i32
    %c0_i32_0 = arith.constant 0 : i32
    %c0_i32_1 = arith.constant 0 : i32
    return %c0_i32, %c0_i32_0 : i32, i32
  }
  func.func @transform_7(%arg0: i32) -> (i32, i32) {
    %c0_i32 = arith.constant 0 : i32
    %c0_i32_0 = arith.constant 0 : i32
    %c0_i32_1 = arith.constant 0 : i32
    return %c0_i32, %c0_i32_0 : i32, i32
  }
  func.func @transform_8(%arg0: i32) -> (i32, i32) {
    %c0_i32 = arith.constant 0 : i32
    %c0_i32_0 = arith.constant 0 : i32
    %c0_i32_1 = arith.constant 0 : i32
    return %c0_i32, %c0_i32_0 : i32, i32
  }
  func.func @transform_9(%arg0: i32) -> (i32, i32) {
    %c0_i32 = arith.constant 0 : i32
    %c0_i32_0 = arith.constant 0 : i32
    %c0_i32_1 = arith.constant 0 : i32
    return %c0_i32, %c0_i32_0 : i32, i32
  }
  func.func @transform_10(%arg0: i32) -> (i32, i32) {
    %c0_i32 = arith.constant 0 : i32
    %c0_i32_0 = arith.constant 0 : i32
    %c0_i32_1 = arith.constant 0 : i32
    return %c0_i32, %c0_i32_0 : i32, i32
  }
  func.func @transform_11(%arg0: i32) -> (i32, i32) {
    %c0_i32 = arith.constant 0 : i32
    %c0_i32_0 = arith.constant 0 : i32
    %c0_i32_1 = arith.constant 0 : i32
    return %c0_i32, %c0_i32_0 : i32, i32
  }
  func.func @transform_12(%arg0: i32) -> (i32, i32) {
    %c0_i32 = arith.constant 0 : i32
    %c0_i32_0 = arith.constant 0 : i32
    %c0_i32_1 = arith.constant 0 : i32
    return %c0_i32, %c0_i32_0 : i32, i32
  }
  func.func @transform_13(%arg0: i32) -> (i32, i32, i32) {
    %c0_i32 = arith.constant 0 : i32
    %c0_i32_0 = arith.constant 0 : i32
    %c0_i32_1 = arith.constant 0 : i32
    return %arg0, %c0_i32, %c0_i32_0 : i32, i32, i32
  }
}

</mosaic_0001>

<llo_original>
// kernel: tpu_custom_call.1
$region0: #{tpu_custom_call.1}
  #allocation0 [shape = 'u32[]', space=smem, size = 0x4, offset = 0x4, fixed_abs, tag = 'smem constant byte address 0x4 - core index']
  #allocation1 [shape = 'u32[144,128]{1,0:T(1,128)}', space=vmem, size = 0x12000, scoped, tag = 'internal scratch']
  #allocation2 [shape = 'bf16[2,8,32]{2,1,0:T(8,128)(2,1)}', space=vmem, size = 0x1000, scoped, tag = 'scratch operand']
  %s0 = inlined_call_operand.vmem [shape: f32[4,8,32], index: 0, kind: input, shape index: {}]
  %s1 = inlined_call_operand.vmem [shape: f32[1,32], index: 1, kind: input, shape index: {}]
  %s2 = inlined_call_operand.vmem [shape: f32[1,32], index: 2, kind: input, shape index: {}]
  %s3 = inlined_call_operand.vmem [shape: bf16[32,96], index: 3, kind: input, shape index: {}]
  %s4 = inlined_call_operand.vmem [shape: f32[1,96], index: 4, kind: input, shape index: {}]
  %s5 = inlined_call_operand.vmem [shape: bf16[32,32], index: 5, kind: input, shape index: {}]
  %s6 = inlined_call_operand.vmem [shape: f32[1,32], index: 6, kind: input, shape index: {}]
  %s7 = inlined_call_operand.vmem [shape: f32[1,32], index: 7, kind: input, shape index: {}]
  %s8 = inlined_call_operand.vmem [shape: f32[1,32], index: 8, kind: input, shape index: {}]
  %s9 = inlined_call_operand.vmem [shape: bf16[32,128], index: 9, kind: input, shape index: {}]
  %s10 = inlined_call_operand.vmem [shape: f32[1,128], index: 10, kind: input, shape index: {}]
  %s11 = inlined_call_operand.vmem [shape: bf16[128,32], index: 11, kind: input, shape index: {}]
  %s12 = inlined_call_operand.vmem [shape: f32[1,32], index: 12, kind: input, shape index: {}]
  %s13 = inlined_call_operand.hbm [shape: f32[4,8,32], index: 13, kind: output, shape index: {}]
  %s14 = sld [smem:[#allocation0]]
  $region85: #{tpu_custom_call.1} parent=0
    _
  %s16 = ssub.s32 1, %s14
  %s17 = scalar_select 0, %s16, %s14
  $region1: #{tpu_custom_call.1} parent=0
    #allocation3 [shape = 'u8[16384]{0}', space=vmem, size = 0x4000, scoped, tag = 'output window, operand 0']
    #allocation4 [shape = 's32[2]{0}', space=sflag, size = 0x8, scoped, tag = 'scoped memory for tpu_custom_call.1']
    %18 = vsyncpa [#allocation4], 0
    %s19 = scalar_lea.sflag [#allocation4], 1
    %20 = vsyncpa %s19, 0
    loop: start=0, step=1, limit=4
    $region2: #{tpu_custom_call.1} parent=1 // loop_pre_header
      _
    $region3: #{tpu_custom_call.1} parent=1 // loop_header
      %s22 = sphi 0, %s26
      %p23 = scmp.ge.s32.totalorder %s22, 4
      %s32 = sphi 0, %s34
      %s35 = sphi 0, %s32
      %s36 = sphi 0, %s35
      %s52 = sphi 0, %s36
      %s56 = sphi 0, %s56
      %s58 = sphi 0, %s56
      %s59 = sphi 0, %s58
      %s73 = sphi 0, %s59
      %s77 = sphi 0, %s77
      %s79 = sphi 0, %s77
      %s80 = sphi 0, %s79
      %s94 = sphi 0, %s80
      %s98 = sphi 0, %s98
      %s100 = sphi 0, %s98
      %s101 = sphi 0, %s100
      %s115 = sphi 0, %s101
      %s119 = sphi 0, %s119
      %s121 = sphi 0, %s119
      %s122 = sphi 0, %s121
      %s136 = sphi 0, %s122
      %s140 = sphi 0, %s140
      %s142 = sphi 0, %s140
      %s143 = sphi 0, %s142
      %s157 = sphi 0, %s143
      %s161 = sphi 0, %s161
      %s163 = sphi 0, %s161
      %s164 = sphi 0, %s163
      %s178 = sphi 0, %s164
      %s182 = sphi 0, %s182
      %s184 = sphi 0, %s182
      %s185 = sphi 0, %s184
      %s199 = sphi 0, %s185
      %s203 = sphi 0, %s203
      %s205 = sphi 0, %s203
      %s206 = sphi 0, %s205
      %s220 = sphi 0, %s206
      %s224 = sphi 0, %s224
      %s226 = sphi 0, %s224
      %s227 = sphi 0, %s226
      %s241 = sphi 0, %s227
      %s245 = sphi 0, %s245
      %s247 = sphi 0, %s245
      %s248 = sphi 0, %s247
      %s262 = sphi 0, %s248
      %s266 = sphi 0, %s266
      %s268 = sphi 0, %s266
      %s269 = sphi 0, %s268
      %s283 = sphi 0, %s269
      %s287 = sphi 0, %s287
      %s289 = sphi 0, %s287
      %s290 = sphi 0, %s289
      %s304 = sphi 0, %s290
      %s310 = sphi 0, %s312
      %s313 = sphi 0, %s310
      %s314 = sphi 0, %s313
      %s330 = sphi 0, %s314
    $region4: #{tpu_custom_call.1} parent=1 // loop_header_branch
      %25 = sbr.rel (%p23) target = $region8
    $region5: #{tpu_custom_call.1} parent=1 // loop_body
      %s27 = ssub.s32 %s22, 1
      %s28 = ssub.s32 %s22, 2
      %s29 = sadd.s32 %s22, 1
      %s30 = ssub.s32 %s22, %s29
      %p31 = scmp.eq.s32.totalorder %s30, 0
      %s33 = sadd.s32 %s32, 1
      %s34 = scalar_select %p31, %s32, %s33
      %p37 = pneg %p31
      %p38 = scmp.eq.s32.totalorder %s22, 1
      %p39 = por %p37, %p38
      %p40 = scmp.ne.s32.totalorder %s32, %s35
      %p41 = scmp.eq.s32.totalorder %s22, 0
      %p42 = por %p40, %p41
      %p43 = scmp.ne.s32.totalorder %s32, %s35
      %p44 = scmp.eq.s32.totalorder %s27, 1
      %p45 = por %p43, %p44
      %p46 = scmp.ne.s32.totalorder %s35, %s36
      %p47 = scmp.eq.s32.totalorder %s27, 0
      %p48 = por %p46, %p47
      %p49 = scmp.ne.s32.totalorder %s35, %s36
      %p50 = scmp.eq.s32.totalorder %s28, 1
      %p51 = por %p49, %p50
      %p53 = scmp.ne.s32.totalorder %s36, %s52
      %p54 = scmp.eq.s32.totalorder %s28, 0
      %p55 = por %p53, %p54
      %s57 = sadd.s32 %s56, 1
      %p60 = scmp.eq.s32.totalorder %s22, 1
      %p61 = scmp.ne.s32.totalorder %s56, %s58
      %p62 = scmp.eq.s32.totalorder %s22, 0
      %p63 = por %p61, %p62
      %p64 = scmp.ne.s32.totalorder %s56, %s58
      %p65 = scmp.eq.s32.totalorder %s27, 1
      %p66 = por %p64, %p65
      %p67 = scmp.ne.s32.totalorder %s58, %s59
      %p68 = scmp.eq.s32.totalorder %s27, 0
      %p69 = por %p67, %p68
      %p70 = scmp.ne.s32.totalorder %s58, %s59
      %p71 = scmp.eq.s32.totalorder %s28, 1
      %p72 = por %p70, %p71
      %p74 = scmp.ne.s32.totalorder %s59, %s73
      %p75 = scmp.eq.s32.totalorder %s28, 0
      %p76 = por %p74, %p75
      %s78 = sadd.s32 %s77, 1
      %p81 = scmp.eq.s32.totalorder %s22, 1
      %p82 = scmp.ne.s32.totalorder %s77, %s79
      %p83 = scmp.eq.s32.totalorder %s22, 0
      %p84 = por %p82, %p83
      %p85 = scmp.ne.s32.totalorder %s77, %s79
      %p86 = scmp.eq.s32.totalorder %s27, 1
      %p87 = por %p85, %p86
      %p88 = scmp.ne.s32.totalorder %s79, %s80
      %p89 = scmp.eq.s32.totalorder %s27, 0
      %p90 = por %p88, %p89
      %p91 = scmp.ne.s32.totalorder %s79, %s80
      %p92 = scmp.eq.s32.totalorder %s28, 1
      %p93 = por %p91, %p92
      %p95 = scmp.ne.s32.totalorder %s80, %s94
      %p96 = scmp.eq.s32.totalorder %s28, 0
      %p97 = por %p95, %p96
      %s99 = sadd.s32 %s98, 1
      %p102 = scmp.eq.s32.totalorder %s22, 1
      %p103 = scmp.ne.s32.totalorder %s98, %s100
      %p104 = scmp.eq.s32.totalorder %s22, 0
      %p105 = por %p103, %p104
      %p106 = scmp.ne.s32.totalorder %s98, %s100
      %p107 = scmp.eq.s32.totalorder %s27, 1
      %p108 = por %p106, %p107
      %p109 = scmp.ne.s32.totalorder %s100, %s101
      %p110 = scmp.eq.s32.totalorder %s27, 0
      %p111 = por %p109, %p110
      %p112 = scmp.ne.s32.totalorder %s100, %s101
      %p113 = scmp.eq.s32.totalorder %s28, 1
      %p114 = por %p112, %p113
      %p116 = scmp.ne.s32.totalorder %s101, %s115
      %p117 = scmp.eq.s32.totalorder %s28, 0
      %p118 = por %p116, %p117
      %s120 = sadd.s32 %s119, 1
      %p123 = scmp.eq.s32.totalorder %s22, 1
      %p124 = scmp.ne.s32.totalorder %s119, %s121
      %p125 = scmp.eq.s32.totalorder %s22, 0
      %p126 = por %p124, %p125
      %p127 = scmp.ne.s32.totalorder %s119, %s121
      %p128 = scmp.eq.s32.totalorder %s27, 1
      %p129 = por %p127, %p128
      %p130 = scmp.ne.s32.totalorder %s121, %s122
      %p131 = scmp.eq.s32.totalorder %s27, 0
      %p132 = por %p130, %p131
      %p133 = scmp.ne.s32.totalorder %s121, %s122
      %p134 = scmp.eq.s32.totalorder %s28, 1
      %p135 = por %p133, %p134
      %p137 = scmp.ne.s32.totalorder %s122, %s136
      %p138 = scmp.eq.s32.totalorder %s28, 0
      %p139 = por %p137, %p138
      %s141 = sadd.s32 %s140, 1
      %p144 = scmp.eq.s32.totalorder %s22, 1
      %p145 = scmp.ne.s32.totalorder %s140, %s142
      %p146 = scmp.eq.s32.totalorder %s22, 0
      %p147 = por %p145, %p146
      %p148 = scmp.ne.s32.totalorder %s140, %s142
      %p149 = scmp.eq.s32.totalorder %s27, 1
      %p150 = por %p148, %p149
      %p151 = scmp.ne.s32.totalorder %s142, %s143
      %p152 = scmp.eq.s32.totalorder %s27, 0
      %p153 = por %p151, %p152
      %p154 = scmp.ne.s32.totalorder %s142, %s143
      %p155 = scmp.eq.s32.totalorder %s28, 1
      %p156 = por %p154, %p155
      %p158 = scmp.ne.s32.totalorder %s143, %s157
      %p159 = scmp.eq.s32.totalorder %s28, 0
      %p160 = por %p158, %p159
      %s162 = sadd.s32 %s161, 1
      %p165 = scmp.eq.s32.totalorder %s22, 1
      %p166 = scmp.ne.s32.totalorder %s161, %s163
      %p167 = scmp.eq.s32.totalorder %s22, 0
      %p168 = por %p166, %p167
      %p169 = scmp.ne.s32.totalorder %s161, %s163
      %p170 = scmp.eq.s32.totalorder %s27, 1
      %p171 = por %p169, %p170
      %p172 = scmp.ne.s32.totalorder %s163, %s164
      %p173 = scmp.eq.s32.totalorder %s27, 0
      %p174 = por %p172, %p173
      %p175 = scmp.ne.s32.totalorder %s163, %s164
      %p176 = scmp.eq.s32.totalorder %s28, 1
      %p177 = por %p175, %p176
      %p179 = scmp.ne.s32.totalorder %s164, %s178
      %p180 = scmp.eq.s32.totalorder %s28, 0
      %p181 = por %p179, %p180
      %s183 = sadd.s32 %s182, 1
      %p186 = scmp.eq.s32.totalorder %s22, 1
      %p187 = scmp.ne.s32.totalorder %s182, %s184
      %p188 = scmp.eq.s32.totalorder %s22, 0
      %p189 = por %p187, %p188
      %p190 = scmp.ne.s32.totalorder %s182, %s184
      %p191 = scmp.eq.s32.totalorder %s27, 1
      %p192 = por %p190, %p191
      %p193 = scmp.ne.s32.totalorder %s184, %s185
      %p194 = scmp.eq.s32.totalorder %s27, 0
      %p195 = por %p193, %p194
      %p196 = scmp.ne.s32.totalorder %s184, %s185
      %p197 = scmp.eq.s32.totalorder %s28, 1
      %p198 = por %p196, %p197
      %p200 = scmp.ne.s32.totalorder %s185, %s199
      %p201 = scmp.eq.s32.totalorder %s28, 0
      %p202 = por %p200, %p201
      %s204 = sadd.s32 %s203, 1
      %p207 = scmp.eq.s32.totalorder %s22, 1
      %p208 = scmp.ne.s32.totalorder %s203, %s205
      %p209 = scmp.eq.s32.totalorder %s22, 0
      %p210 = por %p208, %p209
      %p211 = scmp.ne.s32.totalorder %s203, %s205
      %p212 = scmp.eq.s32.totalorder %s27, 1
      %p213 = por %p211, %p212
      %p214 = scmp.ne.s32.totalorder %s205, %s206
      %p215 = scmp.eq.s32.totalorder %s27, 0
      %p216 = por %p214, %p215
      %p217 = scmp.ne.s32.totalorder %s205, %s206
      %p218 = scmp.eq.s32.totalorder %s28, 1
      %p219 = por %p217, %p218
      %p221 = scmp.ne.s32.totalorder %s206, %s220
      %p222 = scmp.eq.s32.totalorder %s28, 0
      %p223 = por %p221, %p222
      %s225 = sadd.s32 %s224, 1
      %p228 = scmp.eq.s32.totalorder %s22, 1
      %p229 = scmp.ne.s32.totalorder %s224, %s226
      %p230 = scmp.eq.s32.totalorder %s22, 0
      %p231 = por %p229, %p230
      %p232 = scmp.ne.s32.totalorder %s224, %s226
      %p233 = scmp.eq.s32.totalorder %s27, 1
      %p234 = por %p232, %p233
      %p235 = scmp.ne.s32.totalorder %s226, %s227
      %p236 = scmp.eq.s32.totalorder %s27, 0
      %p237 = por %p235, %p236
      %p238 = scmp.ne.s32.totalorder %s226, %s227
      %p239 = scmp.eq.s32.totalorder %s28, 1
      %p240 = por %p238, %p239
      %p242 = scmp.ne.s32.totalorder %s227, %s241
      %p243 = scmp.eq.s32.totalorder %s28, 0
      %p244 = por %p242, %p243
      %s246 = sadd.s32 %s245, 1
      %p249 = scmp.eq.s32.totalorder %s22, 1
      %p250 = scmp.ne.s32.totalorder %s245, %s247
      %p251 = scmp.eq.s32.totalorder %s22, 0
      %p252 = por %p250, %p251
      %p253 = scmp.ne.s32.totalorder %s245, %s247
      %p254 = scmp.eq.s32.totalorder %s27, 1
      %p255 = por %p253, %p254
      %p256 = scmp.ne.s32.totalorder %s247, %s248
      %p257 = scmp.eq.s32.totalorder %s27, 0
      %p258 = por %p256, %p257
      %p259 = scmp.ne.s32.totalorder %s247, %s248
      %p260 = scmp.eq.s32.totalorder %s28, 1
      %p261 = por %p259, %p260
      %p263 = scmp.ne.s32.totalorder %s248, %s262
      %p264 = scmp.eq.s32.totalorder %s28, 0
      %p265 = por %p263, %p264
      %s267 = sadd.s32 %s266, 1
      %p270 = scmp.eq.s32.totalorder %s22, 1
      %p271 = scmp.ne.s32.totalorder %s266, %s268
      %p272 = scmp.eq.s32.totalorder %s22, 0
      %p273 = por %p271, %p272
      %p274 = scmp.ne.s32.totalorder %s266, %s268
      %p275 = scmp.eq.s32.totalorder %s27, 1
      %p276 = por %p274, %p275
      %p277 = scmp.ne.s32.totalorder %s268, %s269
      %p278 = scmp.eq.s32.totalorder %s27, 0
      %p279 = por %p277, %p278
      %p280 = scmp.ne.s32.totalorder %s268, %s269
      %p281 = scmp.eq.s32.totalorder %s28, 1
      %p282 = por %p280, %p281
      %p284 = scmp.ne.s32.totalorder %s269, %s283
      %p285 = scmp.eq.s32.totalorder %s28, 0
      %p286 = por %p284, %p285
      %s288 = sadd.s32 %s287, 1
      %p291 = scmp.eq.s32.totalorder %s22, 1
      %p292 = scmp.ne.s32.totalorder %s287, %s289
      %p293 = scmp.eq.s32.totalorder %s22, 0
      %p294 = por %p292, %p293
      %p295 = scmp.ne.s32.totalorder %s287, %s289
      %p296 = scmp.eq.s32.totalorder %s27, 1
      %p297 = por %p295, %p296
      %p298 = scmp.ne.s32.totalorder %s289, %s290
      %p299 = scmp.eq.s32.totalorder %s27, 0
      %p300 = por %p298, %p299
      %p301 = scmp.ne.s32.totalorder %s289, %s290
      %p302 = scmp.eq.s32.totalorder %s28, 1
      %p303 = por %p301, %p302
      %p305 = scmp.ne.s32.totalorder %s290, %s304
      %p306 = scmp.eq.s32.totalorder %s28, 0
      %p307 = por %p305, %p306
      %s308 = ssub.s32 %s22, %s29
      %p309 = scmp.eq.s32.totalorder %s308, 0
      %s311 = sadd.s32 %s310, 1
      %s312 = scalar_select %p309, %s310, %s311
      %p315 = pneg %p309
      %p316 = scmp.eq.s32.totalorder %s22, 1
      %p317 = por %p315, %p316
      %p318 = scmp.ne.s32.totalorder %s310, %s313
      %p319 = scmp.eq.s32.totalorder %s22, 0
      %p320 = por %p318, %p319
      %p321 = scmp.ne.s32.totalorder %s310, %s313
      %p322 = scmp.eq.s32.totalorder %s27, 1
      %p323 = por %p321, %p322
      %p324 = scmp.ne.s32.totalorder %s313, %s314
      %p325 = scmp.eq.s32.totalorder %s27, 0
      %p326 = por %p324, %p325
      %p327 = scmp.ne.s32.totalorder %s313, %s314
      %p328 = scmp.eq.s32.totalorder %s28, 1
      %p329 = por %p327, %p328
      %p331 = scmp.ne.s32.totalorder %s314, %s330
      %p332 = scmp.eq.s32.totalorder %s28, 0
      %p333 = por %p331, %p332
      %p334 = scmp.le.s32.totalorder 1, %s22
      %p335 = scmp.lt.s32.totalorder %s22, 3
      %p336 = pnand %p334, %p335
      %p337 = pneg %p336
      // Predicated region
      $region9: #{tpu_custom_call.1} parent=5 // pred_check
        _
      $region10: #{tpu_custom_call.1} parent=5 // pred_check_branch
        %339 = sbr.rel (%p336) target = $region12
      $region11: #{tpu_custom_call.1} parent=5 // pred_region
        %s340 = ssub.s32 %s22, 1
        // Predicated region
        $region13: #{tpu_custom_call.1} parent=11 // pred_check
          %p341 = pneg %p69
        $region14: #{tpu_custom_call.1} parent=11 // pred_check_branch
          %343 = sbr.rel (%p341) target = $region16
        $region15: #{tpu_custom_call.1} parent=11 // pred_region
          _
        $region16: #{tpu_custom_call.1} parent=11 // pred_fallthru
          _
        // Predicated region
        $region17: #{tpu_custom_call.1} parent=11 // pred_check
          %p344 = pneg %p90
        $region18: #{tpu_custom_call.1} parent=11 // pred_check_branch
          %346 = sbr.rel (%p344) target = $region20
        $region19: #{tpu_custom_call.1} parent=11 // pred_region
          _
        $region20: #{tpu_custom_call.1} parent=11 // pred_fallthru
          _
        // Predicated region
        $region21: #{tpu_custom_call.1} parent=11 // pred_check
          %p347 = pneg %p111
        $region22: #{tpu_custom_call.1} parent=11 // pred_check_branch
          %349 = sbr.rel (%p347) target = $region24
        $region23: #{tpu_custom_call.1} parent=11 // pred_region
          _
        $region24: #{tpu_custom_call.1} parent=11 // pred_fallthru
          _
        // Predicated region
        $region25: #{tpu_custom_call.1} parent=11 // pred_check
          %p350 = pneg %p132
        $region26: #{tpu_custom_call.1} parent=11 // pred_check_branch
          %352 = sbr.rel (%p350) target = $region28
        $region27: #{tpu_custom_call.1} parent=11 // pred_region
          _
        $region28: #{tpu_custom_call.1} parent=11 // pred_fallthru
          _
        // Predicated region
        $region29: #{tpu_custom_call.1} parent=11 // pred_check
          %p353 = pneg %p153
        $region30: #{tpu_custom_call.1} parent=11 // pred_check_branch
          %355 = sbr.rel (%p353) target = $region32
        $region31: #{tpu_custom_call.1} parent=11 // pred_region
          _
        $region32: #{tpu_custom_call.1} parent=11 // pred_fallthru
          _
        // Predicated region
        $region33: #{tpu_custom_call.1} parent=11 // pred_check
          %p356 = pneg %p174
        $region34: #{tpu_custom_call.1} parent=11 // pred_check_branch
          %358 = sbr.rel (%p356) target = $region36
        $region35: #{tpu_custom_call.1} parent=11 // pred_region
          _
        $region36: #{tpu_custom_call.1} parent=11 // pred_fallthru
          _
        // Predicated region
        $region37: #{tpu_custom_call.1} parent=11 // pred_check
          %p359 = pneg %p195
        $region38: #{tpu_custom_call.1} parent=11 // pred_check_branch
          %361 = sbr.rel (%p359) target = $region40
        $region39: #{tpu_custom_call.1} parent=11 // pred_region
          _
        $region40: #{tpu_custom_call.1} parent=11 // pred_fallthru
          _
        // Predicated region
        $region41: #{tpu_custom_call.1} parent=11 // pred_check
          %p362 = pneg %p216
        $region42: #{tpu_custom_call.1} parent=11 // pred_check_branch
          %364 = sbr.rel (%p362) target = $region44
        $region43: #{tpu_custom_call.1} parent=11 // pred_region
          _
        $region44: #{tpu_custom_call.1} parent=11 // pred_fallthru
          _
        // Predicated region
        $region45: #{tpu_custom_call.1} parent=11 // pred_check
          %p365 = pneg %p237
        $region46: #{tpu_custom_call.1} parent=11 // pred_check_branch
          %367 = sbr.rel (%p365) target = $region48
        $region47: #{tpu_custom_call.1} parent=11 // pred_region
          _
        $region48: #{tpu_custom_call.1} parent=11 // pred_fallthru
          _
        // Predicated region
        $region49: #{tpu_custom_call.1} parent=11 // pred_check
          %p368 = pneg %p258
        $region50: #{tpu_custom_call.1} parent=11 // pred_check_branch
          %370 = sbr.rel (%p368) target = $region52
        $region51: #{tpu_custom_call.1} parent=11 // pred_region
          _
        $region52: #{tpu_custom_call.1} parent=11 // pred_fallthru
          _
        // Predicated region
        $region53: #{tpu_custom_call.1} parent=11 // pred_check
          %p371 = pneg %p279
        $region54: #{tpu_custom_call.1} parent=11 // pred_check_branch
          %373 = sbr.rel (%p371) target = $region56
        $region55: #{tpu_custom_call.1} parent=11 // pred_region
          _
        $region56: #{tpu_custom_call.1} parent=11 // pred_fallthru
          _
        // Predicated region
        $region57: #{tpu_custom_call.1} parent=11 // pred_check
          %p374 = pneg %p300
        $region58: #{tpu_custom_call.1} parent=11 // pred_check_branch
          %376 = sbr.rel (%p374) target = $region60
        $region59: #{tpu_custom_call.1} parent=11 // pred_region
          _
        $region60: #{tpu_custom_call.1} parent=11 // pred_fallthru
          _
      $region12: #{tpu_custom_call.1} parent=5 // pred_fallthru
        _
      %p377 = scmp.lt.s32.totalorder %s22, 2
      // Predicated region
      $region61: #{tpu_custom_call.1} parent=5 // pred_check
        %p378 = pneg %p377
      $region62: #{tpu_custom_call.1} parent=5 // pred_check_branch
        %380 = sbr.rel (%p378) target = $region64
      $region63: #{tpu_custom_call.1} parent=5 // pred_region
        // Predicated region
        $region65: #{tpu_custom_call.1} parent=63 // pred_check
          %p381 = pneg %p42
        $region66: #{tpu_custom_call.1} parent=63 // pred_check_branch
          %383 = sbr.rel (%p381) target = $region68
        $region67: #{tpu_custom_call.1} parent=63 // pred_region
          %s384 = smul.u32 2, %s22
          %p385 = scmp.lt.s32.totalorder %s384, 3
          %s386 = scalar_select %p385, %s384, 3
          %s387 = smul.addr %s386, 8
          %s388 = scalar_lea.vmem %s0, %s387
          %s389 = smul.u32 2, %s22
        $region68: #{tpu_custom_call.1} parent=63 // pred_fallthru
          _
      $region64: #{tpu_custom_call.1} parent=5 // pred_fallthru
        _
      %p390 = scmp.le.s32.totalorder 1, %s22
      %p391 = scmp.lt.s32.totalorder %s22, 3
      %p392 = pnand %p390, %p391
      %p393 = pneg %p392
      // Predicated region
      $region69: #{tpu_custom_call.1} parent=5 // pred_check
        _
      $region70: #{tpu_custom_call.1} parent=5 // pred_check_branch
        %395 = sbr.rel (%p392) target = $region72
      $region71: #{tpu_custom_call.1} parent=5 // pred_region
        %s396 = ssub.s32 %s22, 1
        %s397 = smul.u32 2, %s27
        %p398 = scmp.lt.s32.totalorder %s397, 3
        %s399 = scalar_select %p398, %s397, 3
        %s400 = smul.addr %s399, 8
        %s401 = scalar_lea.vmem %s0, %s400
        %p402 = pneg %p48
        %p403 = pneg %p45
        %p404 = pneg %p69
        %p405 = pneg %p66
        %p406 = pneg %p90
        %p407 = pneg %p87
        %p408 = pneg %p111
        %p409 = pneg %p108
        %p410 = pneg %p132
        %p411 = pneg %p129
        %p412 = pneg %p153
        %p413 = pneg %p150
        %p414 = pneg %p174
        %p415 = pneg %p171
        %p416 = pneg %p195
        %p417 = pneg %p192
        %p418 = pneg %p216
        %p419 = pneg %p213
        %p420 = pneg %p237
        %p421 = pneg %p234
        %p422 = pneg %p258
        %p423 = pneg %p255
        %p424 = pneg %p279
        %p425 = pneg %p276
        %p426 = pneg %p300
        %p427 = pneg %p297
        %p428 = pneg %p326
        %p429 = pneg %p323
        %s430 = sand.u32 %s313, 1
        %s431 = scalar_lea.sflag [#allocation4], %s430
        %s432 = sand.u32 %s313, 1
        %s433 = smul.addr %s432, 16
        %s434 = scalar_lea.vmem [#allocation3], %s433
        %s435 = smul.u32 2, %s27
        %p436 = scmp.lt.s32.totalorder %s435, 3
        %s437 = scalar_select %p436, %s435, 3
        %s438 = smul.addr %s437, 8
        %s439 = scalar_lea.vmem %s0, %s438
        %s440 = smul.u32 2, %s27
        %s441 = smul.u32 2, %s27
        %v443 = vld [vmem:[%s439] sm:$0xff]
        %v444 = vld [vmem:[%s439 + $0x8] sm:$0xff]
        %v445 = vld [vmem:[%s1] sm:$0x1]
        %v446 = vld [vmem:[%s2] sm:$0x1]
        %vm447 = vcmask 261120
        %v448 = vsel %vm447, %v443, 0.0
        %449 = vadd.xlane.f32.xlu0 %v448
        %v450 = vpop.xlane.xlu0 %449
        %v451 = vsel %vm447, %v444, 0.0
        %452 = vadd.xlane.f32.xlu0 %v451
        %v453 = vpop.xlane.xlu0 %452
        %v454 = vrcp.pop 32.0
        %v455 = vmul.f32 %v450, %v454
        %v456 = vmul.f32 %v453, %v454
        %v457 = vsub.f32 %v443, %v455
        %v458 = vsub.f32 %v444, %v456
        %v459 = vmul.f32 %v457, %v457
        %v460 = vmul.f32 %v458, %v458
        %v461 = vsel %vm447, %v459, 0.0
        %462 = vadd.xlane.f32.xlu0 %v461
        %v463 = vpop.xlane.xlu0 %462
        %v464 = vsel %vm447, %v460, 0.0
        %465 = vadd.xlane.f32.xlu0 %v464
        %v466 = vpop.xlane.xlu0 %465
        %v467 = vmul.f32 %v463, %v454
        %v468 = vmul.f32 %v466, %v454
        %v469 = vadd.f32 %v467, 1e-05
        %v470 = vadd.f32 %v468, 1e-05
        %v471 = vrsqrt.pop %v469
        %v472 = vrsqrt.pop %v470
        %v473 = vmul.f32 %v457, %v471
        %v474 = vmul.f32 %v458, %v472
        %v476 = vlaneseq
        %v477 = vshrl.u32 %v476, 7
        %v478 = vsub.s32 0, %v477
        %v479 = vrot.slane %v445, %v478
        %v481 = vmul.f32 %v473, %v479
        %v482 = vmul.f32 %v474, %v479
        %v484 = vlaneseq
        %v485 = vshrl.u32 %v484, 7
        %v486 = vsub.s32 0, %v485
        %v487 = vrot.slane %v446, %v486
        %v489 = vadd.f32 %v481, %v487
        %v490 = vadd.f32 %v482, %v487
        %v491 = vpack.c.bf16 %v490, %v489
        %v492 = vld [vmem:[%s3] sm:$0xf]
        %v493 = vld [vmem:[%s3 + $0x4] sm:$0xf]
        %v494 = vld [vmem:[%s3 + $0x8] sm:$0xf]
        %v495 = vld [vmem:[%s3 + $0xc] sm:$0xf]
        %v496 = vld [vmem:[%s4] sm:$0x1]
        %v498 = vlaneseq
        %v499 = vshrl.u32 %v498, 7
        %v500 = vsub.s32 0, %v499
        %v501 = vrot.slane %v496, %v500
        %v507 = vunpack.c.l.b16 %v492
        %v508 = vunpack.c.l.b16 %v493
        %v509 = vunpack.c.l.b16 %v494
        %v510 = vunpack.c.l.b16 %v495
        %v511 = vpack.c.b16 %v508, %v507
        %v512 = vpack.c.b16 %v510, %v509
        %v516 = vsel %vm447, %v491, 0
        %518 = vmatprep.subr.bf16.mxu0 0
        %519 = vmatpush1.bf16.msra.mxu0 %v511
        %520 = vmatprep.subr.bf16.mxu0 0
        %521 = vmatpush1.bf16.msra.mxu0 %v512
        %522 = vmatprep.subr.bf16.mxu0 0
        %523 = vmatpush1.bf16.msra.mxu0 0
        %524 = vmatprep.subr.bf16.mxu0 0
        %525 = vmatpush1.bf16.msra.mxu0 0
        %526 = vmatprep.subr.bf16.mxu0 0
        %527 = vmatpush1.bf16.msra.mxu0 0
        %528 = vmatprep.subr.bf16.mxu0 0
        %529 = vmatpush1.bf16.msra.mxu0 0
        %530 = vmatprep.subr.bf16.mxu0 0
        %531 = vmatpush1.bf16.msra.mxu0 0
        %532 = vmatprep.subr.bf16.mxu0 0
        %533 = vmatpush1.bf16.msra.mxu0 0
        %534 = vmatprep.subr.bf16.mxu0 0
        %535 = vmatpush1.bf16.msra.mxu0 0
        %536 = vmatprep.subr.bf16.mxu0 0
        %537 = vmatpush1.bf16.msra.mxu0 0
        %538 = vmatprep.subr.bf16.mxu0 0
        %539 = vmatpush1.bf16.msra.mxu0 0
        %540 = vmatprep.subr.bf16.mxu0 0
        %541 = vmatpush1.bf16.msra.mxu0 0
        %542 = vmatprep.subr.bf16.mxu0 0
        %543 = vmatpush1.bf16.msra.mxu0 0
        %544 = vmatprep.subr.bf16.mxu0 0
        %545 = vmatpush1.bf16.msra.mxu0 0
        %546 = vmatprep.subr.bf16.mxu0 0
        %547 = vmatpush1.bf16.msra.mxu0 0
        %548 = vmatprep.subr.bf16.mxu0 0
        %549 = vmatpush1.bf16.msra.mxu0 0
        %550 = vmatprep.mubr.bf16.mxu0 0
        %551 = vmatmul.mubr.bf16.gmra.mrb[0].mxu0 %v516
        %v552 = vpop.f32.mrb[0].mxu0
        %v553 = vadd.f32 %v501, %v552
        %v554 = vpop.f32.mrb[0].mxu0
        %v555 = vpop.f32.mrb[0].mxu0
        %v556 = vadd.f32 %v501, %v555
        %v557 = vpop.f32.mrb[0].mxu0
        %558 = vdwg.mxu0
        %v559 = vpack.c.bf16 %v556, %v553
        %v561 = vunpack.c.l.b16 %v559
        %v562 = vunpack.c.h.b16 %v559
        %v563 = vpack.c.b16 %v561, %v561
        %v564 = vpack.c.b16 %v562, %v562
        %565 = vrot.lane.b32.xlu0 %v563, 96
        %v566 = vpop.permute.xlu0 %565
        %vm567 = vcmask 64512
        %v569 = vsel %vm567, %v563, 0
        %v572 = vsel %vm567, %v566, 0
        %574 = vmatprep.subr.bf16.mxu0 0
        %575 = vmatpush1.bf16.xpose.msra.mxu0 %v572
        %576 = vmatprep.subr.bf16.mxu0 0
        %577 = vmatpush1.bf16.xpose.msra.mxu0 0
        %578 = vmatprep.subr.bf16.mxu0 0
        %579 = vmatpush1.bf16.xpose.msra.mxu0 0
        %580 = vmatprep.subr.bf16.mxu0 0
        %581 = vmatpush1.bf16.xpose.msra.mxu0 0
        %582 = vmatprep.subr.bf16.mxu0 0
        %583 = vmatpush1.bf16.xpose.msra.mxu0 0
        %584 = vmatprep.subr.bf16.mxu0 0
        %585 = vmatpush1.bf16.xpose.msra.mxu0 0
        %586 = vmatprep.subr.bf16.mxu0 0
        %587 = vmatpush1.bf16.xpose.msra.mxu0 0
        %588 = vmatprep.subr.bf16.mxu0 0
        %589 = vmatpush1.bf16.xpose.msra.mxu0 0
        %590 = vmatprep.subr.bf16.mxu0 0
        %591 = vmatpush1.bf16.xpose.msra.mxu0 0
        %592 = vmatprep.subr.bf16.mxu0 0
        %593 = vmatpush1.bf16.xpose.msra.mxu0 0
        %594 = vmatprep.subr.bf16.mxu0 0
        %595 = vmatpush1.bf16.xpose.msra.mxu0 0
        %596 = vmatprep.subr.bf16.mxu0 0
        %597 = vmatpush1.bf16.xpose.msra.mxu0 0
        %598 = vmatprep.subr.bf16.mxu0 0
        %599 = vmatpush1.bf16.xpose.msra.mxu0 0
        %600 = vmatprep.subr.bf16.mxu0 0
        %601 = vmatpush1.bf16.xpose.msra.mxu0 0
        %602 = vmatprep.subr.bf16.mxu0 0
        %603 = vmatpush1.bf16.xpose.msra.mxu0 0
        %604 = vmatprep.subr.bf16.mxu0 0
        %605 = vmatpush1.bf16.xpose.msra.mxu0 0
        %606 = vmatprep.mubr.bf16.mxu0 0
        %607 = vmatmul.mubr.bf16.gmra.mrb[0].mxu0 %v569
        %v608 = vpop.f32.mrb[0].mxu0
        %v609 = vadd.f32 0.0, %v608
        %v610 = vpop.f32.mrb[0].mxu0
        %v611 = vpop.f32.mrb[0].mxu0
        %v612 = vpop.f32.mrb[0].mxu0
        %613 = vdwg.mxu0
        %614 = vrot.lane.b32.xlu0 %v564, 96
        %v615 = vpop.permute.xlu0 %614
        %v617 = vsel %vm567, %v564, 0
        %v620 = vsel %vm567, %v615, 0
        %622 = vmatprep.subr.bf16.mxu0 0
        %623 = vmatpush1.bf16.xpose.msra.mxu0 %v620
        %624 = vmatprep.subr.bf16.mxu0 0
        %625 = vmatpush1.bf16.xpose.msra.mxu0 0
        %626 = vmatprep.subr.bf16.mxu0 0
        %627 = vmatpush1.bf16.xpose.msra.mxu0 0
        %628 = vmatprep.subr.bf16.mxu0 0
        %629 = vmatpush1.bf16.xpose.msra.mxu0 0
        %630 = vmatprep.subr.bf16.mxu0 0
        %631 = vmatpush1.bf16.xpose.msra.mxu0 0
        %632 = vmatprep.subr.bf16.mxu0 0
        %633 = vmatpush1.bf16.xpose.msra.mxu0 0
        %634 = vmatprep.subr.bf16.mxu0 0
        %635 = vmatpush1.bf16.xpose.msra.mxu0 0
        %636 = vmatprep.subr.bf16.mxu0 0
        %637 = vmatpush1.bf16.xpose.msra.mxu0 0
        %638 = vmatprep.subr.bf16.mxu0 0
        %639 = vmatpush1.bf16.xpose.msra.mxu0 0
        %640 = vmatprep.subr.bf16.mxu0 0
        %641 = vmatpush1.bf16.xpose.msra.mxu0 0
        %642 = vmatprep.subr.bf16.mxu0 0
        %643 = vmatpush1.bf16.xpose.msra.mxu0 0
        %644 = vmatprep.subr.bf16.mxu0 0
        %645 = vmatpush1.bf16.xpose.msra.mxu0 0
        %646 = vmatprep.subr.bf16.mxu0 0
        %647 = vmatpush1.bf16.xpose.msra.mxu0 0
        %648 = vmatprep.subr.bf16.mxu0 0
        %649 = vmatpush1.bf16.xpose.msra.mxu0 0
        %650 = vmatprep.subr.bf16.mxu0 0
        %651 = vmatpush1.bf16.xpose.msra.mxu0 0
        %652 = vmatprep.subr.bf16.mxu0 0
        %653 = vmatpush1.bf16.xpose.msra.mxu0 0
        %654 = vmatprep.mubr.bf16.mxu0 0
        %655 = vmatmul.mubr.bf16.gmra.mrb[0].mxu0 %v617
        %v656 = vpop.f32.mrb[0].mxu0
        %v657 = vadd.f32 0.0, %v656
        %v658 = vpop.f32.mrb[0].mxu0
        %v659 = vpop.f32.mrb[0].mxu0
        %v660 = vpop.f32.mrb[0].mxu0
        %661 = vdwg.mxu0
        %v662 = vsel %vm567, %v609, -inf
        %663 = vmax.xlane.f32.xlu0 %v662
        %v664 = vpop.xlane.xlu0 %663
        %v665 = vsel %vm567, %v657, -inf
        %666 = vmax.xlane.f32.xlu0 %v665
        %v667 = vpop.xlane.xlu0 %666
        %v668 = vsub.f32 %v609, %v664
        %v669 = vsub.f32 %v657, %v667
        %v670 = vmul.f32 %v668, 1.442695
        %v671 = vpow.pop %v670
        %v672 = vmul.f32 %v669, 1.442695
        %v673 = vpow.pop %v672
        %v674 = vsel %vm567, %v671, 0.0
        %675 = vadd.xlane.f32.xlu0 %v674
        %v676 = vpop.xlane.xlu0 %675
        %v677 = vsel %vm567, %v673, 0.0
        %678 = vadd.xlane.f32.xlu0 %v677
        %v679 = vpop.xlane.xlu0 %678
        %v680 = vrcp.pop %v676
        %v681 = vrcp.pop %v679
        %v682 = vmul.f32 %v671, %v680
        %v683 = vmul.f32 %v673, %v681
        %v684 = vpack.c.bf16 %v682, %v682
        %v685 = vpack.c.bf16 %v683, %v683
        %686 = vrot.lane.b32.xlu0 %v563, 64
        %v687 = vpop.permute.xlu0 %686
        %v689 = vsel %vm567, %v684, 0
        %vm691 = vcmask 1043456
        %v693 = vsel %vm691, %v687, 0
        %695 = vmatprep.subr.bf16.mxu0 0
        %696 = vmatpush1.bf16.msra.mxu0 %v693
        %697 = vmatprep.subr.bf16.mxu0 0
        %698 = vmatpush1.bf16.msra.mxu0 0
        %699 = vmatprep.subr.bf16.mxu0 0
        %700 = vmatpush1.bf16.msra.mxu0 0
        %701 = vmatprep.subr.bf16.mxu0 0
        %702 = vmatpush1.bf16.msra.mxu0 0
        %703 = vmatprep.subr.bf16.mxu0 0
        %704 = vmatpush1.bf16.msra.mxu0 0
        %705 = vmatprep.subr.bf16.mxu0 0
        %706 = vmatpush1.bf16.msra.mxu0 0
        %707 = vmatprep.subr.bf16.mxu0 0
        %708 = vmatpush1.bf16.msra.mxu0 0
        %709 = vmatprep.subr.bf16.mxu0 0
        %710 = vmatpush1.bf16.msra.mxu0 0
        %711 = vmatprep.subr.bf16.mxu0 0
        %712 = vmatpush1.bf16.msra.mxu0 0
        %713 = vmatprep.subr.bf16.mxu0 0
        %714 = vmatpush1.bf16.msra.mxu0 0
        %715 = vmatprep.subr.bf16.mxu0 0
        %716 = vmatpush1.bf16.msra.mxu0 0
        %717 = vmatprep.subr.bf16.mxu0 0
        %718 = vmatpush1.bf16.msra.mxu0 0
        %719 = vmatprep.subr.bf16.mxu0 0
        %720 = vmatpush1.bf16.msra.mxu0 0
        %721 = vmatprep.subr.bf16.mxu0 0
        %722 = vmatpush1.bf16.msra.mxu0 0
        %723 = vmatprep.subr.bf16.mxu0 0
        %724 = vmatpush1.bf16.msra.mxu0 0
        %725 = vmatprep.subr.bf16.mxu0 0
        %726 = vmatpush1.bf16.msra.mxu0 0
        %727 = vmatprep.mubr.bf16.mxu0 0
        %728 = vmatmul.mubr.bf16.gmra.mrb[0].mxu0 %v689
        %v729 = vpop.f32.mrb[0].mxu0
        %v730 = vadd.f32 0.0, %v729
        %v731 = vpop.f32.mrb[0].mxu0
        %v732 = vpop.f32.mrb[0].mxu0
        %v733 = vpop.f32.mrb[0].mxu0
        %734 = vdwg.mxu0
        %735 = vrot.lane.b32.xlu0 %v564, 64
        %v736 = vpop.permute.xlu0 %735
        %v738 = vsel %vm567, %v685, 0
        %v741 = vsel %vm691, %v736, 0
        %743 = vmatprep.subr.bf16.mxu0 0
        %744 = vmatpush1.bf16.msra.mxu0 %v741
        %745 = vmatprep.subr.bf16.mxu0 0
        %746 = vmatpush1.bf16.msra.mxu0 0
        %747 = vmatprep.subr.bf16.mxu0 0
        %748 = vmatpush1.bf16.msra.mxu0 0
        %749 = vmatprep.subr.bf16.mxu0 0
        %750 = vmatpush1.bf16.msra.mxu0 0
        %751 = vmatprep.subr.bf16.mxu0 0
        %752 = vmatpush1.bf16.msra.mxu0 0
        %753 = vmatprep.subr.bf16.mxu0 0
        %754 = vmatpush1.bf16.msra.mxu0 0
        %755 = vmatprep.subr.bf16.mxu0 0
        %756 = vmatpush1.bf16.msra.mxu0 0
        %757 = vmatprep.subr.bf16.mxu0 0
        %758 = vmatpush1.bf16.msra.mxu0 0
        %759 = vmatprep.subr.bf16.mxu0 0
        %760 = vmatpush1.bf16.msra.mxu0 0
        %761 = vmatprep.subr.bf16.mxu0 0
        %762 = vmatpush1.bf16.msra.mxu0 0
        %763 = vmatprep.subr.bf16.mxu0 0
        %764 = vmatpush1.bf16.msra.mxu0 0
        %765 = vmatprep.subr.bf16.mxu0 0
        %766 = vmatpush1.bf16.msra.mxu0 0
        %767 = vmatprep.subr.bf16.mxu0 0
        %768 = vmatpush1.bf16.msra.mxu0 0
        %769 = vmatprep.subr.bf16.mxu0 0
        %770 = vmatpush1.bf16.msra.mxu0 0
        %771 = vmatprep.subr.bf16.mxu0 0
        %772 = vmatpush1.bf16.msra.mxu0 0
        %773 = vmatprep.subr.bf16.mxu0 0
        %774 = vmatpush1.bf16.msra.mxu0 0
        %775 = vmatprep.mubr.bf16.mxu0 0
        %776 = vmatmul.mubr.bf16.gmra.mrb[0].mxu0 %v738
        %v777 = vpop.f32.mrb[0].mxu0
        %v778 = vadd.f32 0.0, %v777
        %v779 = vpop.f32.mrb[0].mxu0
        %v780 = vpop.f32.mrb[0].mxu0
        %v781 = vpop.f32.mrb[0].mxu0
        %782 = vdwg.mxu0
        %783 = vrot.lane.b32.xlu0 %v563, 120
        %v784 = vpop.permute.xlu0 %783
        %785 = vrot.lane.b32.xlu0 %v563, 88
        %v786 = vpop.permute.xlu0 %785
        %v788 = vsel %vm567, %v784, 0
        %v791 = vsel %vm567, %v786, 0
        %793 = vmatprep.subr.bf16.mxu0 0
        %794 = vmatpush1.bf16.xpose.msra.mxu0 %v791
        %795 = vmatprep.subr.bf16.mxu0 0
        %796 = vmatpush1.bf16.xpose.msra.mxu0 0
        %797 = vmatprep.subr.bf16.mxu0 0
        %798 = vmatpush1.bf16.xpose.msra.mxu0 0
        %799 = vmatprep.subr.bf16.mxu0 0
        %800 = vmatpush1.bf16.xpose.msra.mxu0 0
        %801 = vmatprep.subr.bf16.mxu0 0
        %802 = vmatpush1.bf16.xpose.msra.mxu0 0
        %803 = vmatprep.subr.bf16.mxu0 0
        %804 = vmatpush1.bf16.xpose.msra.mxu0 0
        %805 = vmatprep.subr.bf16.mxu0 0
        %806 = vmatpush1.bf16.xpose.msra.mxu0 0
        %807 = vmatprep.subr.bf16.mxu0 0
        %808 = vmatpush1.bf16.xpose.msra.mxu0 0
        %809 = vmatprep.subr.bf16.mxu0 0
        %810 = vmatpush1.bf16.xpose.msra.mxu0 0
        %811 = vmatprep.subr.bf16.mxu0 0
        %812 = vmatpush1.bf16.xpose.msra.mxu0 0
        %813 = vmatprep.subr.bf16.mxu0 0
        %814 = vmatpush1.bf16.xpose.msra.mxu0 0
        %815 = vmatprep.subr.bf16.mxu0 0
        %816 = vmatpush1.bf16.xpose.msra.mxu0 0
        %817 = vmatprep.subr.bf16.mxu0 0
        %818 = vmatpush1.bf16.xpose.msra.mxu0 0
        %819 = vmatprep.subr.bf16.mxu0 0
        %820 = vmatpush1.bf16.xpose.msra.mxu0 0
        %821 = vmatprep.subr.bf16.mxu0 0
        %822 = vmatpush1.bf16.xpose.msra.mxu0 0
        %823 = vmatprep.subr.bf16.mxu0 0
        %824 = vmatpush1.bf16.xpose.msra.mxu0 0
        %825 = vmatprep.mubr.bf16.mxu0 0
        %826 = vmatmul.mubr.bf16.gmra.mrb[0].mxu0 %v788
        %v827 = vpop.f32.mrb[0].mxu0
        %v828 = vadd.f32 0.0, %v827
        %v829 = vpop.f32.mrb[0].mxu0
        %v830 = vpop.f32.mrb[0].mxu0
        %v831 = vpop.f32.mrb[0].mxu0
        %832 = vdwg.mxu0
        %833 = vrot.lane.b32.xlu0 %v564, 120
        %v834 = vpop.permute.xlu0 %833
        %835 = vrot.lane.b32.xlu0 %v564, 88
        %v836 = vpop.permute.xlu0 %835
        %v838 = vsel %vm567, %v834, 0
        %v841 = vsel %vm567, %v836, 0
        %843 = vmatprep.subr.bf16.mxu0 0
        %844 = vmatpush1.bf16.xpose.msra.mxu0 %v841
        %845 = vmatprep.subr.bf16.mxu0 0
        %846 = vmatpush1.bf16.xpose.msra.mxu0 0
        %847 = vmatprep.subr.bf16.mxu0 0
        %848 = vmatpush1.bf16.xpose.msra.mxu0 0
        %849 = vmatprep.subr.bf16.mxu0 0
        %850 = vmatpush1.bf16.xpose.msra.mxu0 0
        %851 = vmatprep.subr.bf16.mxu0 0
        %852 = vmatpush1.bf16.xpose.msra.mxu0 0
        %853 = vmatprep.subr.bf16.mxu0 0
        %854 = vmatpush1.bf16.xpose.msra.mxu0 0
        %855 = vmatprep.subr.bf16.mxu0 0
        %856 = vmatpush1.bf16.xpose.msra.mxu0 0
        %857 = vmatprep.subr.bf16.mxu0 0
        %858 = vmatpush1.bf16.xpose.msra.mxu0 0
        %859 = vmatprep.subr.bf16.mxu0 0
        %860 = vmatpush1.bf16.xpose.msra.mxu0 0
        %861 = vmatprep.subr.bf16.mxu0 0
        %862 = vmatpush1.bf16.xpose.msra.mxu0 0
        %863 = vmatprep.subr.bf16.mxu0 0
        %864 = vmatpush1.bf16.xpose.msra.mxu0 0
        %865 = vmatprep.subr.bf16.mxu0 0
        %866 = vmatpush1.bf16.xpose.msra.mxu0 0
        %867 = vmatprep.subr.bf16.mxu0 0
        %868 = vmatpush1.bf16.xpose.msra.mxu0 0
        %869 = vmatprep.subr.bf16.mxu0 0
        %870 = vmatpush1.bf16.xpose.msra.mxu0 0
        %871 = vmatprep.subr.bf16.mxu0 0
        %872 = vmatpush1.bf16.xpose.msra.mxu0 0
        %873 = vmatprep.subr.bf16.mxu0 0
        %874 = vmatpush1.bf16.xpose.msra.mxu0 0
        %875 = vmatprep.mubr.bf16.mxu0 0
        %876 = vmatmul.mubr.bf16.gmra.mrb[0].mxu0 %v838
        %v877 = vpop.f32.mrb[0].mxu0
        %v878 = vadd.f32 0.0, %v877
        %v879 = vpop.f32.mrb[0].mxu0
        %v880 = vpop.f32.mrb[0].mxu0
        %v881 = vpop.f32.mrb[0].mxu0
        %882 = vdwg.mxu0
        %v883 = vsel %vm567, %v828, -inf
        %884 = vmax.xlane.f32.xlu0 %v883
        %v885 = vpop.xlane.xlu0 %884
        %v886 = vsel %vm567, %v878, -inf
        %887 = vmax.xlane.f32.xlu0 %v886
        %v888 = vpop.xlane.xlu0 %887
        %v889 = vsub.f32 %v828, %v885
        %v890 = vsub.f32 %v878, %v888
        %v891 = vmul.f32 %v889, 1.442695
        %v892 = vpow.pop %v891
        %v893 = vmul.f32 %v890, 1.442695
        %v894 = vpow.pop %v893
        %v895 = vsel %vm567, %v892, 0.0
        %896 = vadd.xlane.f32.xlu0 %v895
        %v897 = vpop.xlane.xlu0 %896
        %v898 = vsel %vm567, %v894, 0.0
        %899 = vadd.xlane.f32.xlu0 %v898
        %v900 = vpop.xlane.xlu0 %899
        %v901 = vrcp.pop %v897
        %v902 = vrcp.pop %v900
        %v903 = vmul.f32 %v892, %v901
        %v904 = vmul.f32 %v894, %v902
        %v905 = vpack.c.bf16 %v903, %v903
        %v906 = vpack.c.bf16 %v904, %v904
        %907 = vrot.lane.b32.xlu0 %v563, 56
        %v908 = vpop.permute.xlu0 %907
        %v910 = vsel %vm567, %v905, 0
        %v913 = vsel %vm691, %v908, 0
        %915 = vmatprep.subr.bf16.mxu0 0
        %916 = vmatpush1.bf16.msra.mxu0 %v913
        %917 = vmatprep.subr.bf16.mxu0 0
        %918 = vmatpush1.bf16.msra.mxu0 0
        %919 = vmatprep.subr.bf16.mxu0 0
        %920 = vmatpush1.bf16.msra.mxu0 0
        %921 = vmatprep.subr.bf16.mxu0 0
        %922 = vmatpush1.bf16.msra.mxu0 0
        %923 = vmatprep.subr.bf16.mxu0 0
        %924 = vmatpush1.bf16.msra.mxu0 0
        %925 = vmatprep.subr.bf16.mxu0 0
        %926 = vmatpush1.bf16.msra.mxu0 0
        %927 = vmatprep.subr.bf16.mxu0 0
        %928 = vmatpush1.bf16.msra.mxu0 0
        %929 = vmatprep.subr.bf16.mxu0 0
        %930 = vmatpush1.bf16.msra.mxu0 0
        %931 = vmatprep.subr.bf16.mxu0 0
        %932 = vmatpush1.bf16.msra.mxu0 0
        %933 = vmatprep.subr.bf16.mxu0 0
        %934 = vmatpush1.bf16.msra.mxu0 0
        %935 = vmatprep.subr.bf16.mxu0 0
        %936 = vmatpush1.bf16.msra.mxu0 0
        %937 = vmatprep.subr.bf16.mxu0 0
        %938 = vmatpush1.bf16.msra.mxu0 0
        %939 = vmatprep.subr.bf16.mxu0 0
        %940 = vmatpush1.bf16.msra.mxu0 0
        %941 = vmatprep.subr.bf16.mxu0 0
        %942 = vmatpush1.bf16.msra.mxu0 0
        %943 = vmatprep.subr.bf16.mxu0 0
        %944 = vmatpush1.bf16.msra.mxu0 0
        %945 = vmatprep.subr.bf16.mxu0 0
        %946 = vmatpush1.bf16.msra.mxu0 0
        %947 = vmatprep.mubr.bf16.mxu0 0
        %948 = vmatmul.mubr.bf16.gmra.mrb[0].mxu0 %v910
        %v949 = vpop.f32.mrb[0].mxu0
        %v950 = vadd.f32 0.0, %v949
        %v951 = vpop.f32.mrb[0].mxu0
        %v952 = vpop.f32.mrb[0].mxu0
        %v953 = vpop.f32.mrb[0].mxu0
        %954 = vdwg.mxu0
        %955 = vrot.lane.b32.xlu0 %v564, 56
        %v956 = vpop.permute.xlu0 %955
        %v958 = vsel %vm567, %v906, 0
        %v961 = vsel %vm691, %v956, 0
        %963 = vmatprep.subr.bf16.mxu0 0
        %964 = vmatpush1.bf16.msra.mxu0 %v961
        %965 = vmatprep.subr.bf16.mxu0 0
        %966 = vmatpush1.bf16.msra.mxu0 0
        %967 = vmatprep.subr.bf16.mxu0 0
        %968 = vmatpush1.bf16.msra.mxu0 0
        %969 = vmatprep.subr.bf16.mxu0 0
        %970 = vmatpush1.bf16.msra.mxu0 0
        %971 = vmatprep.subr.bf16.mxu0 0
        %972 = vmatpush1.bf16.msra.mxu0 0
        %973 = vmatprep.subr.bf16.mxu0 0
        %974 = vmatpush1.bf16.msra.mxu0 0
        %975 = vmatprep.subr.bf16.mxu0 0
        %976 = vmatpush1.bf16.msra.mxu0 0
        %977 = vmatprep.subr.bf16.mxu0 0
        %978 = vmatpush1.bf16.msra.mxu0 0
        %979 = vmatprep.subr.bf16.mxu0 0
        %980 = vmatpush1.bf16.msra.mxu0 0
        %981 = vmatprep.subr.bf16.mxu0 0
        %982 = vmatpush1.bf16.msra.mxu0 0
        %983 = vmatprep.subr.bf16.mxu0 0
        %984 = vmatpush1.bf16.msra.mxu0 0
        %985 = vmatprep.subr.bf16.mxu0 0
        %986 = vmatpush1.bf16.msra.mxu0 0
        %987 = vmatprep.subr.bf16.mxu0 0
        %988 = vmatpush1.bf16.msra.mxu0 0
        %989 = vmatprep.subr.bf16.mxu0 0
        %990 = vmatpush1.bf16.msra.mxu0 0
        %991 = vmatprep.subr.bf16.mxu0 0
        %992 = vmatpush1.bf16.msra.mxu0 0
        %993 = vmatprep.subr.bf16.mxu0 0
        %994 = vmatpush1.bf16.msra.mxu0 0
        %995 = vmatprep.mubr.bf16.mxu0 0
        %996 = vmatmul.mubr.bf16.gmra.mrb[0].mxu0 %v958
        %v997 = vpop.f32.mrb[0].mxu0
        %v998 = vadd.f32 0.0, %v997
        %v999 = vpop.f32.mrb[0].mxu0
        %v1000 = vpop.f32.mrb[0].mxu0
        %v1001 = vpop.f32.mrb[0].mxu0
        %1002 = vdwg.mxu0
        %1003 = vrot.lane.b32.xlu0 %v563, 112
        %v1004 = vpop.permute.xlu0 %1003
        %1005 = vrot.lane.b32.xlu0 %v563, 80
        %v1006 = vpop.permute.xlu0 %1005
        %v1008 = vsel %vm567, %v1004, 0
        %v1011 = vsel %vm567, %v1006, 0
        %1013 = vmatprep.subr.bf16.mxu0 0
        %1014 = vmatpush1.bf16.xpose.msra.mxu0 %v1011
        %1015 = vmatprep.subr.bf16.mxu0 0
        %1016 = vmatpush1.bf16.xpose.msra.mxu0 0
        %1017 = vmatprep.subr.bf16.mxu0 0
        %1018 = vmatpush1.bf16.xpose.msra.mxu0 0
        %1019 = vmatprep.subr.bf16.mxu0 0
        %1020 = vmatpush1.bf16.xpose.msra.mxu0 0
        %1021 = vmatprep.subr.bf16.mxu0 0
        %1022 = vmatpush1.bf16.xpose.msra.mxu0 0
        %1023 = vmatprep.subr.bf16.mxu0 0
        %1024 = vmatpush1.bf16.xpose.msra.mxu0 0
        %1025 = vmatprep.subr.bf16.mxu0 0
        %1026 = vmatpush1.bf16.xpose.msra.mxu0 0
        %1027 = vmatprep.subr.bf16.mxu0 0
        %1028 = vmatpush1.bf16.xpose.msra.mxu0 0
        %1029 = vmatprep.subr.bf16.mxu0 0
        %1030 = vmatpush1.bf16.xpose.msra.mxu0 0
        %1031 = vmatprep.subr.bf16.mxu0 0
        %1032 = vmatpush1.bf16.xpose.msra.mxu0 0
        %1033 = vmatprep.subr.bf16.mxu0 0
        %1034 = vmatpush1.bf16.xpose.msra.mxu0 0
        %1035 = vmatprep.subr.bf16.mxu0 0
        %1036 = vmatpush1.bf16.xpose.msra.mxu0 0
        %1037 = vmatprep.subr.bf16.mxu0 0
        %1038 = vmatpush1.bf16.xpose.msra.mxu0 0
        %1039 = vmatprep.subr.bf16.mxu0 0
        %1040 = vmatpush1.bf16.xpose.msra.mxu0 0
        %1041 = vmatprep.subr.bf16.mxu0 0
        %1042 = vmatpush1.bf16.xpose.msra.mxu0 0
        %1043 = vmatprep.subr.bf16.mxu0 0
        %1044 = vmatpush1.bf16.xpose.msra.mxu0 0
        %1045 = vmatprep.mubr.bf16.mxu0 0
        %1046 = vmatmul.mubr.bf16.gmra.mrb[0].mxu0 %v1008
        %v1047 = vpop.f32.mrb[0].mxu0
        %v1048 = vadd.f32 0.0, %v1047
        %v1049 = vpop.f32.mrb[0].mxu0
        %v1050 = vpop.f32.mrb[0].mxu0
        %v1051 = vpop.f32.mrb[0].mxu0
        %1052 = vdwg.mxu0
        %1053 = vrot.lane.b32.xlu0 %v564, 112
        %v1054 = vpop.permute.xlu0 %1053
        %1055 = vrot.lane.b32.xlu0 %v564, 80
        %v1056 = vpop.permute.xlu0 %1055
        %v1058 = vsel %vm567, %v1054, 0
        %v1061 = vsel %vm567, %v1056, 0
        %1063 = vmatprep.subr.bf16.mxu0 0
        %1064 = vmatpush1.bf16.xpose.msra.mxu0 %v1061
        %1065 = vmatprep.subr.bf16.mxu0 0
        %1066 = vmatpush1.bf16.xpose.msra.mxu0 0
        %1067 = vmatprep.subr.bf16.mxu0 0
        %1068 = vmatpush1.bf16.xpose.msra.mxu0 0
        %1069 = vmatprep.subr.bf16.mxu0 0
        %1070 = vmatpush1.bf16.xpose.msra.mxu0 0
        %1071 = vmatprep.subr.bf16.mxu0 0
        %1072 = vmatpush1.bf16.xpose.msra.mxu0 0
        %1073 = vmatprep.subr.bf16.mxu0 0
        %1074 = vmatpush1.bf16.xpose.msra.mxu0 0
        %1075 = vmatprep.subr.bf16.mxu0 0
        %1076 = vmatpush1.bf16.xpose.msra.mxu0 0
        %1077 = vmatprep.subr.bf16.mxu0 0
        %1078 = vmatpush1.bf16.xpose.msra.mxu0 0
        %1079 = vmatprep.subr.bf16.mxu0 0
        %1080 = vmatpush1.bf16.xpose.msra.mxu0 0
        %1081 = vmatprep.subr.bf16.mxu0 0
        %1082 = vmatpush1.bf16.xpose.msra.mxu0 0
        %1083 = vmatprep.subr.bf16.mxu0 0
        %1084 = vmatpush1.bf16.xpose.msra.mxu0 0
        %1085 = vmatprep.subr.bf16.mxu0 0
        %1086 = vmatpush1.bf16.xpose.msra.mxu0 0
        %1087 = vmatprep.subr.bf16.mxu0 0
        %1088 = vmatpush1.bf16.xpose.msra.mxu0 0
        %1089 = vmatprep.subr.bf16.mxu0 0
        %1090 = vmatpush1.bf16.xpose.msra.mxu0 0
        %1091 = vmatprep.subr.bf16.mxu0 0
        %1092 = vmatpush1.bf16.xpose.msra.mxu0 0
        %1093 = vmatprep.subr.bf16.mxu0 0
        %1094 = vmatpush1.bf16.xpose.msra.mxu0 0
        %1095 = vmatprep.mubr.bf16.mxu0 0
        %1096 = vmatmul.mubr.bf16.gmra.mrb[0].mxu0 %v1058
        %v1097 = vpop.f32.mrb[0].mxu0
        %v1098 = vadd.f32 0.0, %v1097
        %v1099 = vpop.f32.mrb[0].mxu0
        %v1100 = vpop.f32.mrb[0].mxu0
        %v1101 = vpop.f32.mrb[0].mxu0
        %1102 = vdwg.mxu0
        %v1103 = vsel %vm567, %v1048, -inf
        %1104 = vmax.xlane.f32.xlu0 %v1103
        %v1105 = vpop.xlane.xlu0 %1104
        %v1106 = vsel %vm567, %v1098, -inf
        %1107 = vmax.xlane.f32.xlu0 %v1106
        %v1108 = vpop.xlane.xlu0 %1107
        %v1109 = vsub.f32 %v1048, %v1105
        %v1110 = vsub.f32 %v1098, %v1108
        %v1111 = vmul.f32 %v1109, 1.442695
        %v1112 = vpow.pop %v1111
        %v1113 = vmul.f32 %v1110, 1.442695
        %v1114 = vpow.pop %v1113
        %v1115 = vsel %vm567, %v1112, 0.0
        %1116 = vadd.xlane.f32.xlu0 %v1115
        %v1117 = vpop.xlane.xlu0 %1116
        %v1118 = vsel %vm567, %v1114, 0.0
        %1119 = vadd.xlane.f32.xlu0 %v1118
        %v1120 = vpop.xlane.xlu0 %1119
        %v1121 = vrcp.pop %v1117
        %v1122 = vrcp.pop %v1120
        %v1123 = vmul.f32 %v1112, %v1121
        %v1124 = vmul.f32 %v1114, %v1122
        %v1125 = vpack.c.bf16 %v1123, %v1123
        %v1126 = vpack.c.bf16 %v1124, %v1124
        %1127 = vrot.lane.b32.xlu0 %v563, 48
        %v1128 = vpop.permute.xlu0 %1127
        %v1130 = vsel %vm567, %v1125, 0
        %v1133 = vsel %vm691, %v1128, 0
        %1135 = vmatprep.subr.bf16.mxu0 0
        %1136 = vmatpush1.bf16.msra.mxu0 %v1133
        %1137 = vmatprep.subr.bf16.mxu0 0
        %1138 = vmatpush1.bf16.msra.mxu0 0
        %1139 = vmatprep.subr.bf16.mxu0 0
        %1140 = vmatpush1.bf16.msra.mxu0 0
        %1141 = vmatprep.subr.bf16.mxu0 0
        %1142 = vmatpush1.bf16.msra.mxu0 0
        %1143 = vmatprep.subr.bf16.mxu0 0
        %1144 = vmatpush1.bf16.msra.mxu0 0
        %1145 = vmatprep.subr.bf16.mxu0 0
        %1146 = vmatpush1.bf16.msra.mxu0 0
        %1147 = vmatprep.subr.bf16.mxu0 0
        %1148 = vmatpush1.bf16.msra.mxu0 0
        %1149 = vmatprep.subr.bf16.mxu0 0
        %1150 = vmatpush1.bf16.msra.mxu0 0
        %1151 = vmatprep.subr.bf16.mxu0 0
        %1152 = vmatpush1.bf16.msra.mxu0 0
        %1153 = vmatprep.subr.bf16.mxu0 0
        %1154 = vmatpush1.bf16.msra.mxu0 0
        %1155 = vmatprep.subr.bf16.mxu0 0
        %1156 = vmatpush1.bf16.msra.mxu0 0
        %1157 = vmatprep.subr.bf16.mxu0 0
        %1158 = vmatpush1.bf16.msra.mxu0 0
        %1159 = vmatprep.subr.bf16.mxu0 0
        %1160 = vmatpush1.bf16.msra.mxu0 0
        %1161 = vmatprep.subr.bf16.mxu0 0
        %1162 = vmatpush1.bf16.msra.mxu0 0
        %1163 = vmatprep.subr.bf16.mxu0 0
        %1164 = vmatpush1.bf16.msra.mxu0 0
        %1165 = vmatprep.subr.bf16.mxu0 0
        %1166 = vmatpush1.bf16.msra.mxu0 0
        %1167 = vmatprep.mubr.bf16.mxu0 0
        %1168 = vmatmul.mubr.bf16.gmra.mrb[0].mxu0 %v1130
        %v1169 = vpop.f32.mrb[0].mxu0
        %v1170 = vadd.f32 0.0, %v1169
        %v1171 = vpop.f32.mrb[0].mxu0
        %v1172 = vpop.f32.mrb[0].mxu0
        %v1173 = vpop.f32.mrb[0].mxu0
        %1174 = vdwg.mxu0
        %1175 = vrot.lane.b32.xlu0 %v564, 48
        %v1176 = vpop.permute.xlu0 %1175
        %v1178 = vsel %vm567, %v1126, 0
        %v1181 = vsel %vm691, %v1176, 0
        %1183 = vmatprep.subr.bf16.mxu0 0
        %1184 = vmatpush1.bf16.msra.mxu0 %v1181
        %1185 = vmatprep.subr.bf16.mxu0 0
        %1186 = vmatpush1.bf16.msra.mxu0 0
        %1187 = vmatprep.subr.bf16.mxu0 0
        %1188 = vmatpush1.bf16.msra.mxu0 0
        %1189 = vmatprep.subr.bf16.mxu0 0
        %1190 = vmatpush1.bf16.msra.mxu0 0
        %1191 = vmatprep.subr.bf16.mxu0 0
        %1192 = vmatpush1.bf16.msra.mxu0 0
        %1193 = vmatprep.subr.bf16.mxu0 0
        %1194 = vmatpush1.bf16.msra.mxu0 0
        %1195 = vmatprep.subr.bf16.mxu0 0
        %1196 = vmatpush1.bf16.msra.mxu0 0
        %1197 = vmatprep.subr.bf16.mxu0 0
        %1198 = vmatpush1.bf16.msra.mxu0 0
        %1199 = vmatprep.subr.bf16.mxu0 0
        %1200 = vmatpush1.bf16.msra.mxu0 0
        %1201 = vmatprep.subr.bf16.mxu0 0
        %1202 = vmatpush1.bf16.msra.mxu0 0
        %1203 = vmatprep.subr.bf16.mxu0 0
        %1204 = vmatpush1.bf16.msra.mxu0 0
        %1205 = vmatprep.subr.bf16.mxu0 0
        %1206 = vmatpush1.bf16.msra.mxu0 0
        %1207 = vmatprep.subr.bf16.mxu0 0
        %1208 = vmatpush1.bf16.msra.mxu0 0
        %1209 = vmatprep.subr.bf16.mxu0 0
        %1210 = vmatpush1.bf16.msra.mxu0 0
        %1211 = vmatprep.subr.bf16.mxu0 0
        %1212 = vmatpush1.bf16.msra.mxu0 0
        %1213 = vmatprep.subr.bf16.mxu0 0
        %1214 = vmatpush1.bf16.msra.mxu0 0
        %1215 = vmatprep.mubr.bf16.mxu0 0
        %1216 = vmatmul.mubr.bf16.gmra.mrb[0].mxu0 %v1178
        %v1217 = vpop.f32.mrb[0].mxu0
        %v1218 = vadd.f32 0.0, %v1217
        %v1219 = vpop.f32.mrb[0].mxu0
        %v1220 = vpop.f32.mrb[0].mxu0
        %v1221 = vpop.f32.mrb[0].mxu0
        %1222 = vdwg.mxu0
        %1223 = vrot.lane.b32.xlu0 %v563, 104
        %v1224 = vpop.permute.xlu0 %1223
        %1225 = vrot.lane.b32.xlu0 %v563, 72
        %v1226 = vpop.permute.xlu0 %1225
        %v1228 = vsel %vm567, %v1224, 0
        %v1231 = vsel %vm567, %v1226, 0
        %1233 = vmatprep.subr.bf16.mxu0 0
        %1234 = vmatpush1.bf16.xpose.msra.mxu0 %v1231
        %1235 = vmatprep.subr.bf16.mxu0 0
        %1236 = vmatpush1.bf16.xpose.msra.mxu0 0
        %1237 = vmatprep.subr.bf16.mxu0 0
        %1238 = vmatpush1.bf16.xpose.msra.mxu0 0
        %1239 = vmatprep.subr.bf16.mxu0 0
        %1240 = vmatpush1.bf16.xpose.msra.mxu0 0
        %1241 = vmatprep.subr.bf16.mxu0 0
        %1242 = vmatpush1.bf16.xpose.msra.mxu0 0
        %1243 = vmatprep.subr.bf16.mxu0 0
        %1244 = vmatpush1.bf16.xpose.msra.mxu0 0
        %1245 = vmatprep.subr.bf16.mxu0 0
        %1246 = vmatpush1.bf16.xpose.msra.mxu0 0
        %1247 = vmatprep.subr.bf16.mxu0 0
        %1248 = vmatpush1.bf16.xpose.msra.mxu0 0
        %1249 = vmatprep.subr.bf16.mxu0 0
        %1250 = vmatpush1.bf16.xpose.msra.mxu0 0
        %1251 = vmatprep.subr.bf16.mxu0 0
        %1252 = vmatpush1.bf16.xpose.msra.mxu0 0
        %1253 = vmatprep.subr.bf16.mxu0 0
        %1254 = vmatpush1.bf16.xpose.msra.mxu0 0
        %1255 = vmatprep.subr.bf16.mxu0 0
        %1256 = vmatpush1.bf16.xpose.msra.mxu0 0
        %1257 = vmatprep.subr.bf16.mxu0 0
        %1258 = vmatpush1.bf16.xpose.msra.mxu0 0
        %1259 = vmatprep.subr.bf16.mxu0 0
        %1260 = vmatpush1.bf16.xpose.msra.mxu0 0
        %1261 = vmatprep.subr.bf16.mxu0 0
        %1262 = vmatpush1.bf16.xpose.msra.mxu0 0
        %1263 = vmatprep.subr.bf16.mxu0 0
        %1264 = vmatpush1.bf16.xpose.msra.mxu0 0
        %1265 = vmatprep.mubr.bf16.mxu0 0
        %1266 = vmatmul.mubr.bf16.gmra.mrb[0].mxu0 %v1228
        %v1267 = vpop.f32.mrb[0].mxu0
        %v1268 = vadd.f32 0.0, %v1267
        %v1269 = vpop.f32.mrb[0].mxu0
        %v1270 = vpop.f32.mrb[0].mxu0
        %v1271 = vpop.f32.mrb[0].mxu0
        %1272 = vdwg.mxu0
        %1273 = vrot.lane.b32.xlu0 %v564, 104
        %v1274 = vpop.permute.xlu0 %1273
        %1275 = vrot.lane.b32.xlu0 %v564, 72
        %v1276 = vpop.permute.xlu0 %1275
        %v1278 = vsel %vm567, %v1274, 0
        %v1281 = vsel %vm567, %v1276, 0
        %1283 = vmatprep.subr.bf16.mxu0 0
        %1284 = vmatpush1.bf16.xpose.msra.mxu0 %v1281
        %1285 = vmatprep.subr.bf16.mxu0 0
        %1286 = vmatpush1.bf16.xpose.msra.mxu0 0
        %1287 = vmatprep.subr.bf16.mxu0 0
        %1288 = vmatpush1.bf16.xpose.msra.mxu0 0
        %1289 = vmatprep.subr.bf16.mxu0 0
        %1290 = vmatpush1.bf16.xpose.msra.mxu0 0
        %1291 = vmatprep.subr.bf16.mxu0 0
        %1292 = vmatpush1.bf16.xpose.msra.mxu0 0
        %1293 = vmatprep.subr.bf16.mxu0 0
        %1294 = vmatpush1.bf16.xpose.msra.mxu0 0
        %1295 = vmatprep.subr.bf16.mxu0 0
        %1296 = vmatpush1.bf16.xpose.msra.mxu0 0
        %1297 = vmatprep.subr.bf16.mxu0 0
        %1298 = vmatpush1.bf16.xpose.msra.mxu0 0
        %1299 = vmatprep.subr.bf16.mxu0 0
        %1300 = vmatpush1.bf16.xpose.msra.mxu0 0
        %1301 = vmatprep.subr.bf16.mxu0 0
        %1302 = vmatpush1.bf16.xpose.msra.mxu0 0
        %1303 = vmatprep.subr.bf16.mxu0 0
        %1304 = vmatpush1.bf16.xpose.msra.mxu0 0
        %1305 = vmatprep.subr.bf16.mxu0 0
        %1306 = vmatpush1.bf16.xpose.msra.mxu0 0
        %1307 = vmatprep.subr.bf16.mxu0 0
        %1308 = vmatpush1.bf16.xpose.msra.mxu0 0
        %1309 = vmatprep.subr.bf16.mxu0 0
        %1310 = vmatpush1.bf16.xpose.msra.mxu0 0
        %1311 = vmatprep.subr.bf16.mxu0 0
        %1312 = vmatpush1.bf16.xpose.msra.mxu0 0
        %1313 = vmatprep.subr.bf16.mxu0 0
        %1314 = vmatpush1.bf16.xpose.msra.mxu0 0
        %1315 = vmatprep.mubr.bf16.mxu0 0
        %1316 = vmatmul.mubr.bf16.gmra.mrb[0].mxu0 %v1278
        %v1317 = vpop.f32.mrb[0].mxu0
        %v1318 = vadd.f32 0.0, %v1317
        %v1319 = vpop.f32.mrb[0].mxu0
        %v1320 = vpop.f32.mrb[0].mxu0
        %v1321 = vpop.f32.mrb[0].mxu0
        %1322 = vdwg.mxu0
        %v1323 = vsel %vm567, %v1268, -inf
        %1324 = vmax.xlane.f32.xlu0 %v1323
        %v1325 = vpop.xlane.xlu0 %1324
        %v1326 = vsel %vm567, %v1318, -inf
        %1327 = vmax.xlane.f32.xlu0 %v1326
        %v1328 = vpop.xlane.xlu0 %1327
        %v1329 = vsub.f32 %v1268, %v1325
        %v1330 = vsub.f32 %v1318, %v1328
        %v1331 = vmul.f32 %v1329, 1.442695
        %v1332 = vpow.pop %v1331
        %v1333 = vmul.f32 %v1330, 1.442695
        %v1334 = vpow.pop %v1333
        %v1335 = vsel %vm567, %v1332, 0.0
        %1336 = vadd.xlane.f32.xlu0 %v1335
        %v1337 = vpop.xlane.xlu0 %1336
        %v1338 = vsel %vm567, %v1334, 0.0
        %1339 = vadd.xlane.f32.xlu0 %v1338
        %v1340 = vpop.xlane.xlu0 %1339
        %v1341 = vrcp.pop %v1337
        %v1342 = vrcp.pop %v1340
        %v1343 = vmul.f32 %v1332, %v1341
        %v1344 = vmul.f32 %v1334, %v1342
        %v1345 = vpack.c.bf16 %v1343, %v1343
        %v1346 = vpack.c.bf16 %v1344, %v1344
        %1347 = vrot.lane.b32.xlu0 %v563, 40
        %v1348 = vpop.permute.xlu0 %1347
        %v1350 = vsel %vm567, %v1345, 0
        %v1353 = vsel %vm691, %v1348, 0
        %1355 = vmatprep.subr.bf16.mxu0 0
        %1356 = vmatpush1.bf16.msra.mxu0 %v1353
        %1357 = vmatprep.subr.bf16.mxu0 0
        %1358 = vmatpush1.bf16.msra.mxu0 0
        %1359 = vmatprep.subr.bf16.mxu0 0
        %1360 = vmatpush1.bf16.msra.mxu0 0
        %1361 = vmatprep.subr.bf16.mxu0 0
        %1362 = vmatpush1.bf16.msra.mxu0 0
        %1363 = vmatprep.subr.bf16.mxu0 0
        %1364 = vmatpush1.bf16.msra.mxu0 0
        %1365 = vmatprep.subr.bf16.mxu0 0
        %1366 = vmatpush1.bf16.msra.mxu0 0
        %1367 = vmatprep.subr.bf16.mxu0 0
        %1368 = vmatpush1.bf16.msra.mxu0 0
        %1369 = vmatprep.subr.bf16.mxu0 0
        %1370 = vmatpush1.bf16.msra.mxu0 0
        %1371 = vmatprep.subr.bf16.mxu0 0
        %1372 = vmatpush1.bf16.msra.mxu0 0
        %1373 = vmatprep.subr.bf16.mxu0 0
        %1374 = vmatpush1.bf16.msra.mxu0 0
        %1375 = vmatprep.subr.bf16.mxu0 0
        %1376 = vmatpush1.bf16.msra.mxu0 0
        %1377 = vmatprep.subr.bf16.mxu0 0
        %1378 = vmatpush1.bf16.msra.mxu0 0
        %1379 = vmatprep.subr.bf16.mxu0 0
        %1380 = vmatpush1.bf16.msra.mxu0 0
        %1381 = vmatprep.subr.bf16.mxu0 0
        %1382 = vmatpush1.bf16.msra.mxu0 0
        %1383 = vmatprep.subr.bf16.mxu0 0
        %1384 = vmatpush1.bf16.msra.mxu0 0
        %1385 = vmatprep.subr.bf16.mxu0 0
        %1386 = vmatpush1.bf16.msra.mxu0 0
        %1387 = vmatprep.mubr.bf16.mxu0 0
        %1388 = vmatmul.mubr.bf16.gmra.mrb[0].mxu0 %v1350
        %v1389 = vpop.f32.mrb[0].mxu0
        %v1390 = vadd.f32 0.0, %v1389
        %v1391 = vpop.f32.mrb[0].mxu0
        %v1392 = vpop.f32.mrb[0].mxu0
        %v1393 = vpop.f32.mrb[0].mxu0
        %1394 = vdwg.mxu0
        %1395 = vrot.lane.b32.xlu0 %v564, 40
        %v1396 = vpop.permute.xlu0 %1395
        %v1398 = vsel %vm567, %v1346, 0
        %v1401 = vsel %vm691, %v1396, 0
        %1403 = vmatprep.subr.bf16.mxu0 0
        %1404 = vmatpush1.bf16.msra.mxu0 %v1401
        %1405 = vmatprep.subr.bf16.mxu0 0
        %1406 = vmatpush1.bf16.msra.mxu0 0
        %1407 = vmatprep.subr.bf16.mxu0 0
        %1408 = vmatpush1.bf16.msra.mxu0 0
        %1409 = vmatprep.subr.bf16.mxu0 0
        %1410 = vmatpush1.bf16.msra.mxu0 0
        %1411 = vmatprep.subr.bf16.mxu0 0
        %1412 = vmatpush1.bf16.msra.mxu0 0
        %1413 = vmatprep.subr.bf16.mxu0 0
        %1414 = vmatpush1.bf16.msra.mxu0 0
        %1415 = vmatprep.subr.bf16.mxu0 0
        %1416 = vmatpush1.bf16.msra.mxu0 0
        %1417 = vmatprep.subr.bf16.mxu0 0
        %1418 = vmatpush1.bf16.msra.mxu0 0
        %1419 = vmatprep.subr.bf16.mxu0 0
        %1420 = vmatpush1.bf16.msra.mxu0 0
        %1421 = vmatprep.subr.bf16.mxu0 0
        %1422 = vmatpush1.bf16.msra.mxu0 0
        %1423 = vmatprep.subr.bf16.mxu0 0
        %1424 = vmatpush1.bf16.msra.mxu0 0
        %1425 = vmatprep.subr.bf16.mxu0 0
        %1426 = vmatpush1.bf16.msra.mxu0 0
        %1427 = vmatprep.subr.bf16.mxu0 0
        %1428 = vmatpush1.bf16.msra.mxu0 0
        %1429 = vmatprep.subr.bf16.mxu0 0
        %1430 = vmatpush1.bf16.msra.mxu0 0
        %1431 = vmatprep.subr.bf16.mxu0 0
        %1432 = vmatpush1.bf16.msra.mxu0 0
        %1433 = vmatprep.subr.bf16.mxu0 0
        %1434 = vmatpush1.bf16.msra.mxu0 0
        %1435 = vmatprep.mubr.bf16.mxu0 0
        %1436 = vmatmul.mubr.bf16.gmra.mrb[0].mxu0 %v1398
        %v1437 = vpop.f32.mrb[0].mxu0
        %v1438 = vadd.f32 0.0, %v1437
        %v1439 = vpop.f32.mrb[0].mxu0
        %v1440 = vpop.f32.mrb[0].mxu0
        %v1441 = vpop.f32.mrb[0].mxu0
        %1442 = vdwg.mxu0
        %1445 = vrot.lane.b32.xlu0 %v950, 8
        %v1446 = vpop.permute.xlu0 %1445
        %1447 = vrot.lane.b32.xlu0 %v998, 8
        %v1448 = vpop.permute.xlu0 %1447
        %1453 = vrot.lane.b32.xlu0 %v1170, 16
        %v1454 = vpop.permute.xlu0 %1453
        %1455 = vrot.lane.b32.xlu0 %v1218, 16
        %v1456 = vpop.permute.xlu0 %1455
        %1461 = vrot.lane.b32.xlu0 %v1390, 24
        %v1462 = vpop.permute.xlu0 %1461
        %1463 = vrot.lane.b32.xlu0 %v1438, 24
        %v1464 = vpop.permute.xlu0 %1463
        %v1467 = vsel %vm567, %v730, %v1446
        %v1468 = vsel %vm567, %v778, %v1448
        %vm1469 = vcmask 130048
        %v1470 = vsel %vm1469, %v1467, %v1454
        %v1471 = vsel %vm1469, %v1468, %v1456
        %vm1472 = vcmask 195584
        %v1473 = vsel %vm1472, %v1470, %v1462
        %v1474 = vsel %vm1472, %v1471, %v1464
        %v1475 = vpack.c.bf16 %v1473, %v1473
        %v1476 = vpack.c.bf16 %v1474, %v1474
        %vm1477 = vcmask 257024
        %1478 = vst.msk [vmem:[#allocation2] sm:$0xf] %vm1477, %v1475
        %1479 = vst.msk [vmem:[#allocation2 + $0x4] sm:$0xf] %vm1477, %v1476
        %v1480 = vld [vmem:[#allocation2] sm:$0xf]
        %v1481 = vld [vmem:[#allocation2 + $0x4] sm:$0xf]
        %v1482 = vld [vmem:[%s5] sm:$0xf]
        %v1483 = vld [vmem:[%s5 + $0x4] sm:$0xf]
        %v1484 = vld [vmem:[%s5 + $0x8] sm:$0xf]
        %v1485 = vld [vmem:[%s5 + $0xc] sm:$0xf]
        %v1486 = vld [vmem:[%s6] sm:$0x1]
        %v1488 = vlaneseq
        %v1489 = vshrl.u32 %v1488, 7
        %v1490 = vsub.s32 0, %v1489
        %v1491 = vrot.slane %v1486, %v1490
        %v1495 = vunpack.c.l.b16 %v1480
        %v1496 = vunpack.c.l.b16 %v1481
        %v1497 = vpack.c.b16 %v1496, %v1495
        %v1502 = vunpack.c.l.b16 %v1482
        %v1503 = vunpack.c.l.b16 %v1483
        %v1504 = vunpack.c.l.b16 %v1484
        %v1505 = vunpack.c.l.b16 %v1485
        %v1506 = vpack.c.b16 %v1503, %v1502
        %v1507 = vpack.c.b16 %v1505, %v1504
        %v1511 = vsel %vm447, %v1497, 0
        %1513 = vmatprep.subr.bf16.mxu0 0
        %1514 = vmatpush1.bf16.msra.mxu0 %v1506
        %1515 = vmatprep.subr.bf16.mxu0 0
        %1516 = vmatpush1.bf16.msra.mxu0 %v1507
        %1517 = vmatprep.subr.bf16.mxu0 0
        %1518 = vmatpush1.bf16.msra.mxu0 0
        %1519 = vmatprep.subr.bf16.mxu0 0
        %1520 = vmatpush1.bf16.msra.mxu0 0
        %1521 = vmatprep.subr.bf16.mxu0 0
        %1522 = vmatpush1.bf16.msra.mxu0 0
        %1523 = vmatprep.subr.bf16.mxu0 0
        %1524 = vmatpush1.bf16.msra.mxu0 0
        %1525 = vmatprep.subr.bf16.mxu0 0
        %1526 = vmatpush1.bf16.msra.mxu0 0
        %1527 = vmatprep.subr.bf16.mxu0 0
        %1528 = vmatpush1.bf16.msra.mxu0 0
        %1529 = vmatprep.subr.bf16.mxu0 0
        %1530 = vmatpush1.bf16.msra.mxu0 0
        %1531 = vmatprep.subr.bf16.mxu0 0
        %1532 = vmatpush1.bf16.msra.mxu0 0
        %1533 = vmatprep.subr.bf16.mxu0 0
        %1534 = vmatpush1.bf16.msra.mxu0 0
        %1535 = vmatprep.subr.bf16.mxu0 0
        %1536 = vmatpush1.bf16.msra.mxu0 0
        %1537 = vmatprep.subr.bf16.mxu0 0
        %1538 = vmatpush1.bf16.msra.mxu0 0
        %1539 = vmatprep.subr.bf16.mxu0 0
        %1540 = vmatpush1.bf16.msra.mxu0 0
        %1541 = vmatprep.subr.bf16.mxu0 0
        %1542 = vmatpush1.bf16.msra.mxu0 0
        %1543 = vmatprep.subr.bf16.mxu0 0
        %1544 = vmatpush1.bf16.msra.mxu0 0
        %1545 = vmatprep.mubr.bf16.mxu0 0
        %1546 = vmatmul.mubr.bf16.gmra.mrb[0].mxu0 %v1511
        %v1547 = vpop.f32.mrb[0].mxu0
        %v1548 = vadd.f32 %v1491, %v1547
        %v1549 = vpop.f32.mrb[0].mxu0
        %v1550 = vpop.f32.mrb[0].mxu0
        %v1551 = vadd.f32 %v1491, %v1550
        %v1552 = vpop.f32.mrb[0].mxu0
        %1553 = vdwg.mxu0
        %v1554 = vadd.f32 %v443, %v1548
        %v1555 = vadd.f32 %v444, %v1551
        %v1556 = vld [vmem:[%s7] sm:$0x1]
        %v1557 = vld [vmem:[%s8] sm:$0x1]
        %v1558 = vsel %vm447, %v1554, 0.0
        %1559 = vadd.xlane.f32.xlu0 %v1558
        %v1560 = vpop.xlane.xlu0 %1559
        %v1561 = vsel %vm447, %v1555, 0.0
        %1562 = vadd.xlane.f32.xlu0 %v1561
        %v1563 = vpop.xlane.xlu0 %1562
        %v1564 = vmul.f32 %v1560, %v454
        %v1565 = vmul.f32 %v1563, %v454
        %v1566 = vsub.f32 %v1554, %v1564
        %v1567 = vsub.f32 %v1555, %v1565
        %v1568 = vmul.f32 %v1566, %v1566
        %v1569 = vmul.f32 %v1567, %v1567
        %v1570 = vsel %vm447, %v1568, 0.0
        %1571 = vadd.xlane.f32.xlu0 %v1570
        %v1572 = vpop.xlane.xlu0 %1571
        %v1573 = vsel %vm447, %v1569, 0.0
        %1574 = vadd.xlane.f32.xlu0 %v1573
        %v1575 = vpop.xlane.xlu0 %1574
        %v1576 = vmul.f32 %v1572, %v454
        %v1577 = vmul.f32 %v1575, %v454
        %v1578 = vadd.f32 %v1576, 1e-05
        %v1579 = vadd.f32 %v1577, 1e-05
        %v1580 = vrsqrt.pop %v1578
        %v1581 = vrsqrt.pop %v1579
        %v1582 = vmul.f32 %v1566, %v1580
        %v1583 = vmul.f32 %v1567, %v1581
        %v1585 = vlaneseq
        %v1586 = vshrl.u32 %v1585, 7
        %v1587 = vsub.s32 0, %v1586
        %v1588 = vrot.slane %v1556, %v1587
        %v1590 = vmul.f32 %v1582, %v1588
        %v1591 = vmul.f32 %v1583, %v1588
        %v1593 = vlaneseq
        %v1594 = vshrl.u32 %v1593, 7
        %v1595 = vsub.s32 0, %v1594
        %v1596 = vrot.slane %v1557, %v1595
        %v1598 = vadd.f32 %v1590, %v1596
        %v1599 = vadd.f32 %v1591, %v1596
        %v1600 = vpack.c.bf16 %v1599, %v1598
        %v1601 = vld [vmem:[%s9] sm:$0xf]
        %v1602 = vld [vmem:[%s9 + $0x4] sm:$0xf]
        %v1603 = vld [vmem:[%s9 + $0x8] sm:$0xf]
        %v1604 = vld [vmem:[%s9 + $0xc] sm:$0xf]
        %v1605 = vld [vmem:[%s10] sm:$0x1]
        %v1607 = vlaneseq
        %v1608 = vshrl.u32 %v1607, 7
        %v1609 = vsub.s32 0, %v1608
        %v1610 = vrot.slane %v1605, %v1609
        %v1616 = vunpack.c.l.b16 %v1601
        %v1617 = vunpack.c.l.b16 %v1602
        %v1618 = vunpack.c.l.b16 %v1603
        %v1619 = vunpack.c.l.b16 %v1604
        %v1620 = vpack.c.b16 %v1617, %v1616
        %v1621 = vpack.c.b16 %v1619, %v1618
        %v1625 = vsel %vm447, %v1600, 0
        %1627 = vmatprep.subr.bf16.mxu0 0
        %1628 = vmatpush1.bf16.msra.mxu0 %v1620
        %1629 = vmatprep.subr.bf16.mxu0 0
        %1630 = vmatpush1.bf16.msra.mxu0 %v1621
        %1631 = vmatprep.subr.bf16.mxu0 0
        %1632 = vmatpush1.bf16.msra.mxu0 0
        %1633 = vmatprep.subr.bf16.mxu0 0
        %1634 = vmatpush1.bf16.msra.mxu0 0
        %1635 = vmatprep.subr.bf16.mxu0 0
        %1636 = vmatpush1.bf16.msra.mxu0 0
        %1637 = vmatprep.subr.bf16.mxu0 0
        %1638 = vmatpush1.bf16.msra.mxu0 0
        %1639 = vmatprep.subr.bf16.mxu0 0
        %1640 = vmatpush1.bf16.msra.mxu0 0
        %1641 = vmatprep.subr.bf16.mxu0 0
        %1642 = vmatpush1.bf16.msra.mxu0 0
        %1643 = vmatprep.subr.bf16.mxu0 0
        %1644 = vmatpush1.bf16.msra.mxu0 0
        %1645 = vmatprep.subr.bf16.mxu0 0
        %1646 = vmatpush1.bf16.msra.mxu0 0
        %1647 = vmatprep.subr.bf16.mxu0 0
        %1648 = vmatpush1.bf16.msra.mxu0 0
        %1649 = vmatprep.subr.bf16.mxu0 0
        %1650 = vmatpush1.bf16.msra.mxu0 0
        %1651 = vmatprep.subr.bf16.mxu0 0
        %1652 = vmatpush1.bf16.msra.mxu0 0
        %1653 = vmatprep.subr.bf16.mxu0 0
        %1654 = vmatpush1.bf16.msra.mxu0 0
        %1655 = vmatprep.subr.bf16.mxu0 0
        %1656 = vmatpush1.bf16.msra.mxu0 0
        %1657 = vmatprep.subr.bf16.mxu0 0
        %1658 = vmatpush1.bf16.msra.mxu0 0
        %1659 = vmatprep.mubr.bf16.mxu0 0
        %1660 = vmatmul.mubr.bf16.gmra.mrb[0].mxu0 %v1625
        %v1661 = vpop.f32.mrb[0].mxu0
        %v1662 = vadd.f32 %v1610, %v1661
        %v1663 = vpop.f32.mrb[0].mxu0
        %v1664 = vpop.f32.mrb[0].mxu0
        %v1665 = vadd.f32 %v1610, %v1664
        %v1666 = vpop.f32.mrb[0].mxu0
        %1667 = vdwg.mxu0
        %v1668 = vmul.f32 %v1662, 1.702
        %v1669 = vmul.f32 %v1665, 1.702
        %v1670 = vxor.u32 %v1668, 2147483648
        %v1671 = vxor.u32 %v1669, 2147483648
        %v1672 = vmul.f32 %v1670, 1.442695
        %v1673 = vpow.pop %v1672
        %v1674 = vmul.f32 %v1671, 1.442695
        %v1675 = vpow.pop %v1674
        %v1676 = vadd.f32 %v1673, 1.0
        %v1677 = vadd.f32 %v1675, 1.0
        %v1678 = vrcp.pop %v1676
        %v1679 = vmul.f32 1.0, %v1678
        %v1680 = vrcp.pop %v1677
        %v1681 = vmul.f32 1.0, %v1680
        %v1682 = vmul.f32 %v1662, %v1679
        %v1683 = vmul.f32 %v1665, %v1681
        %v1684 = vpack.c.bf16 %v1683, %v1682
        %v1685 = vld [vmem:[%s11] sm:$0xf]
        %v1686 = vld [vmem:[%s11 + $0x4] sm:$0xf]
        %v1687 = vld [vmem:[%s11 + $0x8] sm:$0xf]
        %v1688 = vld [vmem:[%s11 + $0xc] sm:$0xf]
        %v1689 = vld [vmem:[%s11 + $0x10] sm:$0xf]
        %v1690 = vld [vmem:[%s11 + $0x14] sm:$0xf]
        %v1691 = vld [vmem:[%s11 + $0x18] sm:$0xf]
        %v1692 = vld [vmem:[%s11 + $0x1c] sm:$0xf]
        %v1693 = vld [vmem:[%s11 + $0x20] sm:$0xf]
        %v1694 = vld [vmem:[%s11 + $0x24] sm:$0xf]
        %v1695 = vld [vmem:[%s11 + $0x28] sm:$0xf]
        %v1696 = vld [vmem:[%s11 + $0x2c] sm:$0xf]
        %v1697 = vld [vmem:[%s11 + $0x30] sm:$0xf]
        %v1698 = vld [vmem:[%s11 + $0x34] sm:$0xf]
        %v1699 = vld [vmem:[%s11 + $0x38] sm:$0xf]
        %v1700 = vld [vmem:[%s11 + $0x3c] sm:$0xf]
        %v1701 = vld [vmem:[%s12] sm:$0x1]
        %v1703 = vlaneseq
        %v1704 = vshrl.u32 %v1703, 7
        %v1705 = vsub.s32 0, %v1704
        %v1706 = vrot.slane %v1701, %v1705
        %v1724 = vunpack.c.l.b16 %v1685
        %v1725 = vunpack.c.l.b16 %v1686
        %v1726 = vunpack.c.l.b16 %v1687
        %v1727 = vunpack.c.l.b16 %v1688
        %v1728 = vunpack.c.l.b16 %v1689
        %v1729 = vunpack.c.l.b16 %v1690
        %v1730 = vunpack.c.l.b16 %v1691
        %v1731 = vunpack.c.l.b16 %v1692
        %v1732 = vunpack.c.l.b16 %v1693
        %v1733 = vunpack.c.l.b16 %v1694
        %v1734 = vunpack.c.l.b16 %v1695
        %v1735 = vunpack.c.l.b16 %v1696
        %v1736 = vunpack.c.l.b16 %v1697
        %v1737 = vunpack.c.l.b16 %v1698
        %v1738 = vunpack.c.l.b16 %v1699
        %v1739 = vunpack.c.l.b16 %v1700
        %v1740 = vpack.c.b16 %v1725, %v1724
        %v1741 = vpack.c.b16 %v1727, %v1726
        %v1742 = vpack.c.b16 %v1729, %v1728
        %v1743 = vpack.c.b16 %v1731, %v1730
        %v1744 = vpack.c.b16 %v1733, %v1732
        %v1745 = vpack.c.b16 %v1735, %v1734
        %v1746 = vpack.c.b16 %v1737, %v1736
        %v1747 = vpack.c.b16 %v1739, %v1738
        %1756 = vmatprep.subr.bf16.mxu0 0
        %1757 = vmatpush1.bf16.msra.mxu0 %v1740
        %1758 = vmatprep.subr.bf16.mxu0 0
        %1759 = vmatpush1.bf16.msra.mxu0 %v1741
        %1760 = vmatprep.subr.bf16.mxu0 0
        %1761 = vmatpush1.bf16.msra.mxu0 %v1742
        %1762 = vmatprep.subr.bf16.mxu0 0
        %1763 = vmatpush1.bf16.msra.mxu0 %v1743
        %1764 = vmatprep.subr.bf16.mxu0 0
        %1765 = vmatpush1.bf16.msra.mxu0 %v1744
        %1766 = vmatprep.subr.bf16.mxu0 0
        %1767 = vmatpush1.bf16.msra.mxu0 %v1745
        %1768 = vmatprep.subr.bf16.mxu0 0
        %1769 = vmatpush1.bf16.msra.mxu0 %v1746
        %1770 = vmatprep.subr.bf16.mxu0 0
        %1771 = vmatpush1.bf16.msra.mxu0 %v1747
        %1772 = vmatprep.subr.bf16.mxu0 0
        %1773 = vmatpush1.bf16.msra.mxu0 0
        %1774 = vmatprep.subr.bf16.mxu0 0
        %1775 = vmatpush1.bf16.msra.mxu0 0
        %1776 = vmatprep.subr.bf16.mxu0 0
        %1777 = vmatpush1.bf16.msra.mxu0 0
        %1778 = vmatprep.subr.bf16.mxu0 0
        %1779 = vmatpush1.bf16.msra.mxu0 0
        %1780 = vmatprep.subr.bf16.mxu0 0
        %1781 = vmatpush1.bf16.msra.mxu0 0
        %1782 = vmatprep.subr.bf16.mxu0 0
        %1783 = vmatpush1.bf16.msra.mxu0 0
        %1784 = vmatprep.subr.bf16.mxu0 0
        %1785 = vmatpush1.bf16.msra.mxu0 0
        %1786 = vmatprep.subr.bf16.mxu0 0
        %1787 = vmatpush1.bf16.msra.mxu0 0
        %1788 = vmatprep.mubr.bf16.mxu0 0
        %1789 = vmatmul.mubr.bf16.gmra.mrb[0].mxu0 %v1684
        %v1790 = vpop.f32.mrb[0].mxu0
        %v1791 = vadd.f32 %v1706, %v1790
        %v1792 = vpop.f32.mrb[0].mxu0
        %v1793 = vpop.f32.mrb[0].mxu0
        %v1794 = vadd.f32 %v1706, %v1793
        %v1795 = vpop.f32.mrb[0].mxu0
        %1796 = vdwg.mxu0
        %v1797 = vadd.f32 %v1554, %v1791
        %v1798 = vadd.f32 %v1555, %v1794
        %1799 = vst.msk [vmem:[%s434] sm:$0xff] %vm447, %v1797
        %1800 = vst.msk [vmem:[%s434 + $0x8] sm:$0xff] %vm447, %v1798
        %s1801 = sand.u32 %s313, 1
        %s1802 = scalar_lea.sflag [#allocation4], %s1801
        %s1803 = sand.u32 %s313, 1
        %s1804 = smul.addr %s1803, 16
        %s1805 = scalar_lea.vmem [#allocation3], %s1804
        // Predicated region
        $region73: #{tpu_custom_call.1} parent=71 // pred_check
          %p1806 = pneg %p323
        $region74: #{tpu_custom_call.1} parent=71 // pred_check_branch
          %1808 = sbr.rel (%p1806) target = $region76
        $region75: #{tpu_custom_call.1} parent=71 // pred_region
          %s1809 = smul.u32 2, %s27
          %s1811 = ssub.s32 256, 256
          %1812 = vsyncadd %s1802, %s1811
          %s1813 = smul.addr %s1809, 128
          %s1814 = scalar_lea.hbm %s13, %s1813
          %s1815 = sshll.u32 %s1805, 4
          %s1816 = int_to_ptr.vmem [resolvable:$true] %s1815
          %1821 = dma.vmem_to_hbm [thread:$0]  %s1816, 256, %s1814, %s1802, 128, 128, 8
        $region76: #{tpu_custom_call.1} parent=71 // pred_fallthru
          _
      $region72: #{tpu_custom_call.1} parent=5 // pred_fallthru
        _
      %p1822 = scmp.le.s32.totalorder 2, %s22
      // Predicated region
      $region77: #{tpu_custom_call.1} parent=5 // pred_check
        %p1823 = pneg %p1822
      $region78: #{tpu_custom_call.1} parent=5 // pred_check_branch
        %1825 = sbr.rel (%p1823) target = $region80
      $region79: #{tpu_custom_call.1} parent=5 // pred_region
        %s1826 = ssub.s32 %s22, 2
        // Predicated region
        $region81: #{tpu_custom_call.1} parent=79 // pred_check
          %p1827 = pneg %p329
        $region82: #{tpu_custom_call.1} parent=79 // pred_check_branch
          %1829 = sbr.rel (%p1827) target = $region84
        $region83: #{tpu_custom_call.1} parent=79 // pred_region
          %s1830 = sand.u32 %s314, 1
          %s1831 = scalar_lea.sflag [#allocation4], %s1830
          %s1832 = sand.u32 %s314, 1
          %s1833 = smul.addr %s1832, 16
          %s1834 = scalar_lea.vmem [#allocation3], %s1833
          %1835 = dma.done %s1831, 256
        $region84: #{tpu_custom_call.1} parent=79 // pred_fallthru
          _
      $region80: #{tpu_custom_call.1} parent=5 // pred_fallthru
        _
    $region6: #{tpu_custom_call.1} parent=1 // loop_footer
      %s26 = sadd.s32 1, %s22
    $region7: #{tpu_custom_call.1} parent=1 // loop_footer_branch
      %21 = sbr.rel target = $region3
    $region8: #{tpu_custom_call.1} parent=1 // loop_exit
      _
    %1836 = vsyncpa [#allocation4], 1
    %s1837 = scalar_lea.sflag [#allocation4], 1
    %1838 = vsyncpa %s1837, 1

// kernel: tpu_custom_call.1
$region0: #{tpu_custom_call.1}
  #allocation0 [shape = 'u32[]', space=smem, size = 0x4, offset = 0x4, fixed_abs, tag = 'smem constant byte address 0x4 - core index']
  #allocation1 [shape = 'u32[144,128]{1,0:T(1,128)}', space=vmem, size = 0x12000, scoped, tag = 'internal scratch']
  #allocation2 [shape = 'bf16[2,8,32]{2,1,0:T(8,128)(2,1)}', space=vmem, size = 0x1000, scoped, tag = 'scratch operand']
  %s0 = inlined_call_operand.vmem [shape: f32[4,8,32], index: 0, kind: input, shape index: {}]
  %s1 = inlined_call_operand.vmem [shape: f32[1,32], index: 1, kind: input, shape index: {}]
  %s2 = inlined_call_operand.vmem [shape: f32[1,32], index: 2, kind: input, shape index: {}]
  %s3 = inlined_call_operand.vmem [shape: bf16[32,96], index: 3, kind: input, shape index: {}]
  %s4 = inlined_call_operand.vmem [shape: f32[1,96], index: 4, kind: input, shape index: {}]
  %s5 = inlined_call_operand.vmem [shape: bf16[32,32], index: 5, kind: input, shape index: {}]
  %s6 = inlined_call_operand.vmem [shape: f32[1,32], index: 6, kind: input, shape index: {}]
  %s7 = inlined_call_operand.vmem [shape: f32[1,32], index: 7, kind: input, shape index: {}]
  %s8 = inlined_call_operand.vmem [shape: f32[1,32], index: 8, kind: input, shape index: {}]
  %s9 = inlined_call_operand.vmem [shape: bf16[32,128], index: 9, kind: input, shape index: {}]
  %s10 = inlined_call_operand.vmem [shape: f32[1,128], index: 10, kind: input, shape index: {}]
  %s11 = inlined_call_operand.vmem [shape: bf16[128,32], index: 11, kind: input, shape index: {}]
  %s12 = inlined_call_operand.vmem [shape: f32[1,32], index: 12, kind: input, shape index: {}]
  %s13 = inlined_call_operand.hbm [shape: f32[4,8,32], index: 13, kind: output, shape index: {}]
  %s14 = sld [smem:[#allocation0]]
  $region85: #{tpu_custom_call.1} parent=0
    _
  %s16 = ssub.s32 1, %s14
  %s17 = scalar_select 0, %s16, %s14
  $region1: #{tpu_custom_call.1} parent=0
    #allocation3 [shape = 'u8[16384]{0}', space=vmem, size = 0x4000, scoped, tag = 'output window, operand 0']
    #allocation4 [shape = 's32[2]{0}', space=sflag, size = 0x8, scoped, tag = 'scoped memory for tpu_custom_call.1']
    %18 = vsyncpa [#allocation4], 0
    %s19 = scalar_lea.sflag [#allocation4], 1
    %20 = vsyncpa %s19, 0
    loop: start=0, step=1, limit=4
    $region2: #{tpu_custom_call.1} parent=1 // loop_pre_header
      _
    $region3: #{tpu_custom_call.1} parent=1 // loop_header
      %s22 = sphi 0, %s26
      %p23 = scmp.ge.s32.totalorder %s22, 4
      %s32 = sphi 0, %s34
      %s35 = sphi 0, %s32
      %s36 = sphi 0, %s35
      %s52 = sphi 0, %s36
      %s56 = sphi 0, %s56
      %s58 = sphi 0, %s56
      %s59 = sphi 0, %s58
      %s73 = sphi 0, %s59
      %s77 = sphi 0, %s77
      %s79 = sphi 0, %s77
      %s80 = sphi 0, %s79
      %s94 = sphi 0, %s80
      %s98 = sphi 0, %s98
      %s100 = sphi 0, %s98
      %s101 = sphi 0, %s100
      %s115 = sphi 0, %s101
      %s119 = sphi 0, %s119
      %s121 = sphi 0, %s119
      %s122 = sphi 0, %s121
      %s136 = sphi 0, %s122
      %s140 = sphi 0, %s140
      %s142 = sphi 0, %s140
      %s143 = sphi 0, %s142
      %s157 = sphi 0, %s143
      %s161 = sphi 0, %s161
      %s163 = sphi 0, %s161
      %s164 = sphi 0, %s163
      %s178 = sphi 0, %s164
      %s182 = sphi 0, %s182
      %s184 = sphi 0, %s182
      %s185 = sphi 0, %s184
      %s199 = sphi 0, %s185
      %s203 = sphi 0, %s203
      %s205 = sphi 0, %s203
      %s206 = sphi 0, %s205
      %s220 = sphi 0, %s206
      %s224 = sphi 0, %s224
      %s226 = sphi 0, %s224
      %s227 = sphi 0, %s226
      %s241 = sphi 0, %s227
      %s245 = sphi 0, %s245
      %s247 = sphi 0, %s245
      %s248 = sphi 0, %s247
      %s262 = sphi 0, %s248
      %s266 = sphi 0, %s266
      %s268 = sphi 0, %s266
      %s269 = sphi 0, %s268
      %s283 = sphi 0, %s269
      %s287 = sphi 0, %s287
      %s289 = sphi 0, %s287
      %s290 = sphi 0, %s289
      %s304 = sphi 0, %s290
      %s310 = sphi 0, %s312
      %s313 = sphi 0, %s310
      %s314 = sphi 0, %s313
      %s330 = sphi 0, %s314
    $region4: #{tpu_custom_call.1} parent=1 // loop_header_branch
      %25 = sbr.rel (%p23) target = $region8
    $region5: #{tpu_custom_call.1} parent=1 // loop_body
      %s27 = ssub.s32 %s22, 1
      %s28 = ssub.s32 %s22, 2
      %s29 = sadd.s32 %s22, 1
      %s30 = ssub.s32 %s22, %s29
      %p31 = scmp.eq.s32.totalorder %s30, 0
      %s33 = sadd.s32 %s32, 1
      %s34 = scalar_select %p31, %s32, %s33
      %p37 = pneg %p31
      %p38 = scmp.eq.s32.totalorder %s22, 1
      %p39 = por %p37, %p38
      %p40 = scmp.ne.s32.totalorder %s32, %s35
      %p41 = scmp.eq.s32.totalorder %s22, 0
      %p42 = por %p40, %p41
      %p43 = scmp.ne.s32.totalorder %s32, %s35
      %p44 = scmp.eq.s32.totalorder %s27, 1
      %p45 = por %p43, %p44
      %p46 = scmp.ne.s32.totalorder %s35, %s36
      %p47 = scmp.eq.s32.totalorder %s27, 0
      %p48 = por %p46, %p47
      %p49 = scmp.ne.s32.totalorder %s35, %s36
      %p50 = scmp.eq.s32.totalorder %s28, 1
      %p51 = por %p49, %p50
      %p53 = scmp.ne.s32.totalorder %s36, %s52
      %p54 = scmp.eq.s32.totalorder %s28, 0
      %p55 = por %p53, %p54
      %s57 = sadd.s32 %s56, 1
      %p60 = scmp.eq.s32.totalorder %s22, 1
      %p61 = scmp.ne.s32.totalorder %s56, %s58
      %p62 = scmp.eq.s32.totalorder %s22, 0
      %p63 = por %p61, %p62
      %p64 = scmp.ne.s32.totalorder %s56, %s58
      %p65 = scmp.eq.s32.totalorder %s27, 1
      %p66 = por %p64, %p65
      %p67 = scmp.ne.s32.totalorder %s58, %s59
      %p68 = scmp.eq.s32.totalorder %s27, 0
      %p69 = por %p67, %p68
      %p70 = scmp.ne.s32.totalorder %s58, %s59
      %p71 = scmp.eq.s32.totalorder %s28, 1
      %p72 = por %p70, %p71
      %p74 = scmp.ne.s32.totalorder %s59, %s73
      %p75 = scmp.eq.s32.totalorder %s28, 0
      %p76 = por %p74, %p75
      %s78 = sadd.s32 %s77, 1
      %p81 = scmp.eq.s32.totalorder %s22, 1
      %p82 = scmp.ne.s32.totalorder %s77, %s79
      %p83 = scmp.eq.s32.totalorder %s22, 0
      %p84 = por %p82, %p83
      %p85 = scmp.ne.s32.totalorder %s77, %s79
      %p86 = scmp.eq.s32.totalorder %s27, 1
      %p87 = por %p85, %p86
      %p88 = scmp.ne.s32.totalorder %s79, %s80
      %p89 = scmp.eq.s32.totalorder %s27, 0
      %p90 = por %p88, %p89
      %p91 = scmp.ne.s32.totalorder %s79, %s80
      %p92 = scmp.eq.s32.totalorder %s28, 1
      %p93 = por %p91, %p92
      %p95 = scmp.ne.s32.totalorder %s80, %s94
      %p96 = scmp.eq.s32.totalorder %s28, 0
      %p97 = por %p95, %p96
      %s99 = sadd.s32 %s98, 1
      %p102 = scmp.eq.s32.totalorder %s22, 1
      %p103 = scmp.ne.s32.totalorder %s98, %s100
      %p104 = scmp.eq.s32.totalorder %s22, 0
      %p105 = por %p103, %p104
      %p106 = scmp.ne.s32.totalorder %s98, %s100
      %p107 = scmp.eq.s32.totalorder %s27, 1
      %p108 = por %p106, %p107
      %p109 = scmp.ne.s32.totalorder %s100, %s101
      %p110 = scmp.eq.s32.totalorder %s27, 0
      %p111 = por %p109, %p110
      %p112 = scmp.ne.s32.totalorder %s100, %s101
      %p113 = scmp.eq.s32.totalorder %s28, 1
      %p114 = por %p112, %p113
      %p116 = scmp.ne.s32.totalorder %s101, %s115
      %p117 = scmp.eq.s32.totalorder %s28, 0
      %p118 = por %p116, %p117
      %s120 = sadd.s32 %s119, 1
      %p123 = scmp.eq.s32.totalorder %s22, 1
      %p124 = scmp.ne.s32.totalorder %s119, %s121
      %p125 = scmp.eq.s32.totalorder %s22, 0
      %p126 = por %p124, %p125
      %p127 = scmp.ne.s32.totalorder %s119, %s121
      %p128 = scmp.eq.s32.totalorder %s27, 1
      %p129 = por %p127, %p128
      %p130 = scmp.ne.s32.totalorder %s121, %s122
      %p131 = scmp.eq.s32.totalorder %s27, 0
      %p132 = por %p130, %p131
      %p133 = scmp.ne.s32.totalorder %s121, %s122
      %p134 = scmp.eq.s32.totalorder %s28, 1
      %p135 = por %p133, %p134
      %p137 = scmp.ne.s32.totalorder %s122, %s136
      %p138 = scmp.eq.s32.totalorder %s28, 0
      %p139 = por %p137, %p138
      %s141 = sadd.s32 %s140, 1
      %p144 = scmp.eq.s32.totalorder %s22, 1
      %p145 = scmp.ne.s32.totalorder %s140, %s142
      %p146 = scmp.eq.s32.totalorder %s22, 0
      %p147 = por %p145, %p146
      %p148 = scmp.ne.s32.totalorder %s140, %s142
      %p149 = scmp.eq.s32.totalorder %s27, 1
      %p150 = por %p148, %p149
      %p151 = scmp.ne.s32.totalorder %s142, %s143
      %p152 = scmp.eq.s32.totalorder %s27, 0
      %p153 = por %p151, %p152
      %p154 = scmp.ne.s32.totalorder %s142, %s143
      %p155 = scmp.eq.s32.totalorder %s28, 1
      %p156 = por %p154, %p155
      %p158 = scmp.ne.s32.totalorder %s143, %s157
      %p159 = scmp.eq.s32.totalorder %s28, 0
      %p160 = por %p158, %p159
      %s162 = sadd.s32 %s161, 1
      %p165 = scmp.eq.s32.totalorder %s22, 1
      %p166 = scmp.ne.s32.totalorder %s161, %s163
      %p167 = scmp.eq.s32.totalorder %s22, 0
      %p168 = por %p166, %p167
      %p169 = scmp.ne.s32.totalorder %s161, %s163
      %p170 = scmp.eq.s32.totalorder %s27, 1
      %p171 = por %p169, %p170
      %p172 = scmp.ne.s32.totalorder %s163, %s164
      %p173 = scmp.eq.s32.totalorder %s27, 0
      %p174 = por %p172, %p173
      %p175 = scmp.ne.s32.totalorder %s163, %s164
      %p176 = scmp.eq.s32.totalorder %s28, 1
      %p177 = por %p175, %p176
      %p179 = scmp.ne.s32.totalorder %s164, %s178
      %p180 = scmp.eq.s32.totalorder %s28, 0
      %p181 = por %p179, %p180
      %s183 = sadd.s32 %s182, 1
      %p186 = scmp.eq.s32.totalorder %s22, 1
      %p187 = scmp.ne.s32.totalorder %s182, %s184
      %p188 = scmp.eq.s32.totalorder %s22, 0
      %p189 = por %p187, %p188
      %p190 = scmp.ne.s32.totalorder %s182, %s184
      %p191 = scmp.eq.s32.totalorder %s27, 1
      %p192 = por %p190, %p191
      %p193 = scmp.ne.s32.totalorder %s184, %s185
      %p194 = scmp.eq.s32.totalorder %s27, 0
      %p195 = por %p193, %p194
      %p196 = scmp.ne.s32.totalorder %s184, %s185
      %p197 = scmp.eq.s32.totalorder %s28, 1
      %p198 = por %p196, %p197
      %p200 = scmp.ne.s32.totalorder %s185, %s199
      %p201 = scmp.eq.s32.totalorder %s28, 0
      %p202 = por %p200, %p201
      %s204 = sadd.s32 %s203, 1
      %p207 = scmp.eq.s32.totalorder %s22, 1
      %p208 = scmp.ne.s32.totalorder %s203, %s205
      %p209 = scmp.eq.s32.totalorder %s22, 0
      %p210 = por %p208, %p209
      %p211 = scmp.ne.s32.totalorder %s203, %s205
      %p212 = scmp.eq.s32.totalorder %s27, 1
      %p213 = por %p211, %p212
      %p214 = scmp.ne.s32.totalorder %s205, %s206
      %p215 = scmp.eq.s32.totalorder %s27, 0
      %p216 = por %p214, %p215
      %p217 = scmp.ne.s32.totalorder %s205, %s206
      %p218 = scmp.eq.s32.totalorder %s28, 1
      %p219 = por %p217, %p218
      %p221 = scmp.ne.s32.totalorder %s206, %s220
      %p222 = scmp.eq.s32.totalorder %s28, 0
      %p223 = por %p221, %p222
      %s225 = sadd.s32 %s224, 1
      %p228 = scmp.eq.s32.totalorder %s22, 1
      %p229 = scmp.ne.s32.totalorder %s224, %s226
      %p230 = scmp.eq.s32.totalorder %s22, 0
      %p231 = por %p229, %p230
      %p232 = scmp.ne.s32.totalorder %s224, %s226
      %p233 = scmp.eq.s32.totalorder %s27, 1
      %p234 = por %p232, %p233
      %p235 = scmp.ne.s32.totalorder %s226, %s227
      %p236 = scmp.eq.s32.totalorder %s27, 0
      %p237 = por %p235, %p236
      %p238 = scmp.ne.s32.totalorder %s226, %s227
      %p239 = scmp.eq.s32.totalorder %s28, 1
      %p240 = por %p238, %p239
      %p242 = scmp.ne.s32.totalorder %s227, %s241
      %p243 = scmp.eq.s32.totalorder %s28, 0
      %p244 = por %p242, %p243
      %s246 = sadd.s32 %s245, 1
      %p249 = scmp.eq.s32.totalorder %s22, 1
      %p250 = scmp.ne.s32.totalorder %s245, %s247
      %p251 = scmp.eq.s32.totalorder %s22, 0
      %p252 = por %p250, %p251
      %p253 = scmp.ne.s32.totalorder %s245, %s247
      %p254 = scmp.eq.s32.totalorder %s27, 1
      %p255 = por %p253, %p254
      %p256 = scmp.ne.s32.totalorder %s247, %s248
      %p257 = scmp.eq.s32.totalorder %s27, 0
      %p258 = por %p256, %p257
      %p259 = scmp.ne.s32.totalorder %s247, %s248
      %p260 = scmp.eq.s32.totalorder %s28, 1
      %p261 = por %p259, %p260
      %p263 = scmp.ne.s32.totalorder %s248, %s262
      %p264 = scmp.eq.s32.totalorder %s28, 0
      %p265 = por %p263, %p264
      %s267 = sadd.s32 %s266, 1
      %p270 = scmp.eq.s32.totalorder %s22, 1
      %p271 = scmp.ne.s32.totalorder %s266, %s268
      %p272 = scmp.eq.s32.totalorder %s22, 0
      %p273 = por %p271, %p272
      %p274 = scmp.ne.s32.totalorder %s266, %s268
      %p275 = scmp.eq.s32.totalorder %s27, 1
      %p276 = por %p274, %p275
      %p277 = scmp.ne.s32.totalorder %s268, %s269
      %p278 = scmp.eq.s32.totalorder %s27, 0
      %p279 = por %p277, %p278
      %p280 = scmp.ne.s32.totalorder %s268, %s269
      %p281 = scmp.eq.s32.totalorder %s28, 1
      %p282 = por %p280, %p281
      %p284 = scmp.ne.s32.totalorder %s269, %s283
      %p285 = scmp.eq.s32.totalorder %s28, 0
      %p286 = por %p284, %p285
      %s288 = sadd.s32 %s287, 1
      %p291 = scmp.eq.s32.totalorder %s22, 1
      %p292 = scmp.ne.s32.totalorder %s287, %s289
      %p293 = scmp.eq.s32.totalorder %s22, 0
      %p294 = por %p292, %p293
      %p295 = scmp.ne.s32.totalorder %s287, %s289
      %p296 = scmp.eq.s32.totalorder %s27, 1
      %p297 = por %p295, %p296
      %p298 = scmp.ne.s32.totalorder %s289, %s290
      %p299 = scmp.eq.s32.totalorder %s27, 0
      %p300 = por %p298, %p299
      %p301 = scmp.ne.s32.totalorder %s289, %s290
      %p302 = scmp.eq.s32.totalorder %s28, 1
      %p303 = por %p301, %p302
      %p305 = scmp.ne.s32.totalorder %s290, %s304
      %p306 = scmp.eq.s32.totalorder %s28, 0
      %p307 = por %p305, %p306
      %s308 = ssub.s32 %s22, %s29
      %p309 = scmp.eq.s32.totalorder %s308, 0
      %s311 = sadd.s32 %s310, 1
      %s312 = scalar_select %p309, %s310, %s311
      %p315 = pneg %p309
      %p316 = scmp.eq.s32.totalorder %s22, 1
      %p317 = por %p315, %p316
      %p318 = scmp.ne.s32.totalorder %s310, %s313
      %p319 = scmp.eq.s32.totalorder %s22, 0
      %p320 = por %p318, %p319
      %p321 = scmp.ne.s32.totalorder %s310, %s313
      %p322 = scmp.eq.s32.totalorder %s27, 1
      %p323 = por %p321, %p322
      %p324 = scmp.ne.s32.totalorder %s313, %s314
      %p325 = scmp.eq.s32.totalorder %s27, 0
      %p326 = por %p324, %p325
      %p327 = scmp.ne.s32.totalorder %s313, %s314
      %p328 = scmp.eq.s32.totalorder %s28, 1
      %p329 = por %p327, %p328
      %p331 = scmp.ne.s32.totalorder %s314, %s330
      %p332 = scmp.eq.s32.totalorder %s28, 0
      %p333 = por %p331, %p332
      %p334 = scmp.le.s32.totalorder 1, %s22
      %p335 = scmp.lt.s32.totalorder %s22, 3
      %p336 = pnand %p334, %p335
      %p337 = pneg %p336
      // Predicated region
      $region9: #{tpu_custom_call.1} parent=5 // pred_check
        _
      $region10: #{tpu_custom_call.1} parent=5 // pred_check_branch
        %339 = sbr.rel (%p336) target = $region12
      $region11: #{tpu_custom_call.1} parent=5 // pred_region
        %s340 = ssub.s32 %s22, 1
        // Predicated region
        $region13: #{tpu_custom_call.1} parent=11 // pred_check
          %p341 = pneg %p69
        $region14: #{tpu_custom_call.1} parent=11 // pred_check_branch
          %343 = sbr.rel (%p341) target = $region16
        $region15: #{tpu_custom_call.1} parent=11 // pred_region
          _
        $region16: #{tpu_custom_call.1} parent=11 // pred_fallthru
          _
        // Predicated region
        $region17: #{tpu_custom_call.1} parent=11 // pred_check
          %p344 = pneg %p90
        $region18: #{tpu_custom_call.1} parent=11 // pred_check_branch
          %346 = sbr.rel (%p344) target = $region20
        $region19: #{tpu_custom_call.1} parent=11 // pred_region
          _
        $region20: #{tpu_custom_call.1} parent=11 // pred_fallthru
          _
        // Predicated region
        $region21: #{tpu_custom_call.1} parent=11 // pred_check
          %p347 = pneg %p111
        $region22: #{tpu_custom_call.1} parent=11 // pred_check_branch
          %349 = sbr.rel (%p347) target = $region24
        $region23: #{tpu_custom_call.1} parent=11 // pred_region
          _
        $region24: #{tpu_custom_call.1} parent=11 // pred_fallthru
          _
        // Predicated region
        $region25: #{tpu_custom_call.1} parent=11 // pred_check
          %p350 = pneg %p132
        $region26: #{tpu_custom_call.1} parent=11 // pred_check_branch
          %352 = sbr.rel (%p350) target = $region28
        $region27: #{tpu_custom_call.1} parent=11 // pred_region
          _
        $region28: #{tpu_custom_call.1} parent=11 // pred_fallthru
          _
        // Predicated region
        $region29: #{tpu_custom_call.1} parent=11 // pred_check
          %p353 = pneg %p153
        $region30: #{tpu_custom_call.1} parent=11 // pred_check_branch
          %355 = sbr.rel (%p353) target = $region32
        $region31: #{tpu_custom_call.1} parent=11 // pred_region
          _
        $region32: #{tpu_custom_call.1} parent=11 // pred_fallthru
          _
        // Predicated region
        $region33: #{tpu_custom_call.1} parent=11 // pred_check
          %p356 = pneg %p174
        $region34: #{tpu_custom_call.1} parent=11 // pred_check_branch
          %358 = sbr.rel (%p356) target = $region36
        $region35: #{tpu_custom_call.1} parent=11 // pred_region
          _
        $region36: #{tpu_custom_call.1} parent=11 // pred_fallthru
          _
        // Predicated region
        $region37: #{tpu_custom_call.1} parent=11 // pred_check
          %p359 = pneg %p195
        $region38: #{tpu_custom_call.1} parent=11 // pred_check_branch
          %361 = sbr.rel (%p359) target = $region40
        $region39: #{tpu_custom_call.1} parent=11 // pred_region
          _
        $region40: #{tpu_custom_call.1} parent=11 // pred_fallthru
          _
        // Predicated region
        $region41: #{tpu_custom_call.1} parent=11 // pred_check
          %p362 = pneg %p216
        $region42: #{tpu_custom_call.1} parent=11 // pred_check_branch
          %364 = sbr.rel (%p362) target = $region44
        $region43: #{tpu_custom_call.1} parent=11 // pred_region
          _
        $region44: #{tpu_custom_call.1} parent=11 // pred_fallthru
          _
        // Predicated region
        $region45: #{tpu_custom_call.1} parent=11 // pred_check
          %p365 = pneg %p237
        $region46: #{tpu_custom_call.1} parent=11 // pred_check_branch
          %367 = sbr.rel (%p365) target = $region48
        $region47: #{tpu_custom_call.1} parent=11 // pred_region
          _
        $region48: #{tpu_custom_call.1} parent=11 // pred_fallthru
          _
        // Predicated region
        $region49: #{tpu_custom_call.1} parent=11 // pred_check
          %p368 = pneg %p258
        $region50: #{tpu_custom_call.1} parent=11 // pred_check_branch
          %370 = sbr.rel (%p368) target = $region52
        $region51: #{tpu_custom_call.1} parent=11 // pred_region
          _
        $region52: #{tpu_custom_call.1} parent=11 // pred_fallthru
          _
        // Predicated region
        $region53: #{tpu_custom_call.1} parent=11 // pred_check
          %p371 = pneg %p279
        $region54: #{tpu_custom_call.1} parent=11 // pred_check_branch
          %373 = sbr.rel (%p371) target = $region56
        $region55: #{tpu_custom_call.1} parent=11 // pred_region
          _
        $region56: #{tpu_custom_call.1} parent=11 // pred_fallthru
          _
        // Predicated region
        $region57: #{tpu_custom_call.1} parent=11 // pred_check
          %p374 = pneg %p300
        $region58: #{tpu_custom_call.1} parent=11 // pred_check_branch
          %376 = sbr.rel (%p374) target = $region60
        $region59: #{tpu_custom_call.1} parent=11 // pred_region
          _
        $region60: #{tpu_custom_call.1} parent=11 // pred_fallthru
          _
      $region12: #{tpu_custom_call.1} parent=5 // pred_fallthru
        _
      %p377 = scmp.lt.s32.totalorder %s22, 2
      // Predicated region
      $region61: #{tpu_custom_call.1} parent=5 // pred_check
        %p378 = pneg %p377
      $region62: #{tpu_custom_call.1} parent=5 // pred_check_branch
        %380 = sbr.rel (%p378) target = $region64
      $region63: #{tpu_custom_call.1} parent=5 // pred_region
        // Predicated region
        $region65: #{tpu_custom_call.1} parent=63 // pred_check
          %p381 = pneg %p42
        $region66: #{tpu_custom_call.1} parent=63 // pred_check_branch
          %383 = sbr.rel (%p381) target = $region68
        $region67: #{tpu_custom_call.1} parent=63 // pred_region
          %s384 = smul.u32 2, %s22
          %p385 = scmp.lt.s32.totalorder %s384, 3
          %s386 = scalar_select %p385, %s384, 3
          %s387 = smul.addr %s386, 8
          %s388 = scalar_lea.vmem %s0, %s387
          %s389 = smul.u32 2, %s22
        $region68: #{tpu_custom_call.1} parent=63 // pred_fallthru
          _
      $region64: #{tpu_custom_call.1} parent=5 // pred_fallthru
        _
      %p390 = scmp.le.s32.totalorder 1, %s22
      %p391 = scmp.lt.s32.totalorder %s22, 3
      %p392 = pnand %p390, %p391
      %p393 = pneg %p392
      // Predicated region
      $region69: #{tpu_custom_call.1} parent=5 // pred_check
        _
      $region70: #{tpu_custom_call.1} parent=5 // pred_check_branch
        %395 = sbr.rel (%p392) target = $region72
      $region71: #{tpu_custom_call.1} parent=5 // pred_region
        %s396 = ssub.s32 %s22, 1
        %s397 = smul.u32 2, %s27
        %p398 = scmp.lt.s32.totalorder %s397, 3
        %s399 = scalar_select %p398, %s397, 3
        %s400 = smul.addr %s399, 8
        %s401 = scalar_lea.vmem %s0, %s400
        %p402 = pneg %p48
        %p403 = pneg %p45
        %p404 = pneg %p69
        %p405 = pneg %p66
        %p406 = pneg %p90
        %p407 = pneg %p87
        %p408 = pneg %p111
        %p409 = pneg %p108
        %p410 = pneg %p132
        %p411 = pneg %p129
        %p412 = pneg %p153
        %p413 = pneg %p150
        %p414 = pneg %p174
        %p415 = pneg %p171
        %p416 = pneg %p195
        %p417 = pneg %p192
        %p418 = pneg %p216
        %p419 = pneg %p213
        %p420 = pneg %p237
        %p421 = pneg %p234
        %p422 = pneg %p258
        %p423 = pneg %p255
        %p424 = pneg %p279
        %p425 = pneg %p276
        %p426 = pneg %p300
        %p427 = pneg %p297
        %p428 = pneg %p326
        %p429 = pneg %p323
        %s430 = sand.u32 %s313, 1
        %s431 = scalar_lea.sflag [#allocation4], %s430
        %s432 = sand.u32 %s313, 1
        %s433 = smul.addr %s432, 16
        %s434 = scalar_lea.vmem [#allocation3], %s433
        %s435 = smul.u32 2, %s27
        %p436 = scmp.lt.s32.totalorder %s435, 3
        %s437 = scalar_select %p436, %s435, 3
        %s438 = smul.addr %s437, 8
        %s439 = scalar_lea.vmem %s0, %s438
        %s440 = smul.u32 2, %s27
        %s441 = smul.u32 2, %s27
        %v443 = vld [vmem:[%s439] sm:$0xff]
        %v444 = vld [vmem:[%s439 + $0x8] sm:$0xff]
        %v445 = vld [vmem:[%s1] sm:$0x1]
        %v446 = vld [vmem:[%s2] sm:$0x1]
        %vm447 = vcmask 261120
        %v448 = vsel %vm447, %v443, 0.0
        %449 = vadd.xlane.f32.xlu0 %v448
        %v450 = vpop.xlane.xlu0 %449
        %v451 = vsel %vm447, %v444, 0.0
        %452 = vadd.xlane.f32.xlu0 %v451
        %v453 = vpop.xlane.xlu0 %452
        %v454 = vrcp.pop 32.0
        %v455 = vmul.f32 %v450, %v454
        %v456 = vmul.f32 %v453, %v454
        %v457 = vsub.f32 %v443, %v455
        %v458 = vsub.f32 %v444, %v456
        %v459 = vmul.f32 %v457, %v457
        %v460 = vmul.f32 %v458, %v458
        %v461 = vsel %vm447, %v459, 0.0
        %462 = vadd.xlane.f32.xlu0 %v461
        %v463 = vpop.xlane.xlu0 %462
        %v464 = vsel %vm447, %v460, 0.0
        %465 = vadd.xlane.f32.xlu0 %v464
        %v466 = vpop.xlane.xlu0 %465
        %v467 = vmul.f32 %v463, %v454
        %v468 = vmul.f32 %v466, %v454
        %v469 = vadd.f32 %v467, 1e-05
        %v470 = vadd.f32 %v468, 1e-05
        %v471 = vrsqrt.pop %v469
        %v472 = vrsqrt.pop %v470
        %v473 = vmul.f32 %v457, %v471
        %v474 = vmul.f32 %v458, %v472
        %v476 = vlaneseq
        %v477 = vshrl.u32 %v476, 7
        %v478 = vsub.s32 0, %v477
        %v479 = vrot.slane %v445, %v478
        %v481 = vmul.f32 %v473, %v479
        %v482 = vmul.f32 %v474, %v479
        %v484 = vlaneseq
        %v485 = vshrl.u32 %v484, 7
        %v486 = vsub.s32 0, %v485
        %v487 = vrot.slane %v446, %v486
        %v489 = vadd.f32 %v481, %v487
        %v490 = vadd.f32 %v482, %v487
        %v491 = vpack.c.bf16 %v490, %v489
        %v492 = vld [vmem:[%s3] sm:$0xf]
        %v493 = vld [vmem:[%s3 + $0x4] sm:$0xf]
        %v494 = vld [vmem:[%s3 + $0x8] sm:$0xf]
        %v495 = vld [vmem:[%s3 + $0xc] sm:$0xf]
        %v496 = vld [vmem:[%s4] sm:$0x1]
        %v498 = vlaneseq
        %v499 = vshrl.u32 %v498, 7
        %v500 = vsub.s32 0, %v499
        %v501 = vrot.slane %v496, %v500
        %v507 = vunpack.c.l.b16 %v492
        %v508 = vunpack.c.l.b16 %v493
        %v509 = vunpack.c.l.b16 %v494
        %v510 = vunpack.c.l.b16 %v495
        %v511 = vpack.c.b16 %v508, %v507
        %v512 = vpack.c.b16 %v510, %v509
        %v516 = vsel %vm447, %v491, 0
        %518 = vmatprep.subr.bf16.mxu0 0
        %519 = vmatpush1.bf16.msra.mxu0 %v511
        %520 = vmatprep.subr.bf16.mxu0 0
        %521 = vmatpush1.bf16.msra.mxu0 %v512
        %522 = vmatprep.subr.bf16.mxu0 0
        %523 = vmatpush1.bf16.msra.mxu0 0
        %524 = vmatprep.subr.bf16.mxu0 0
        %525 = vmatpush1.bf16.msra.mxu0 0
        %526 = vmatprep.subr.bf16.mxu0 0
        %527 = vmatpush1.bf16.msra.mxu0 0
        %528 = vmatprep.subr.bf16.mxu0 0
        %529 = vmatpush1.bf16.msra.mxu0 0
        %530 = vmatprep.subr.bf16.mxu0 0
        %531 = vmatpush1.bf16.msra.mxu0 0
        %532 = vmatprep.subr.bf16.mxu0 0
        %533 = vmatpush1.bf16.msra.mxu0 0
        %534 = vmatprep.subr.bf16.mxu0 0
        %535 = vmatpush1.bf16.msra.mxu0 0
        %536 = vmatprep.subr.bf16.mxu0 0
        %537 = vmatpush1.bf16.msra.mxu0 0
        %538 = vmatprep.subr.bf16.mxu0 0
        %539 = vmatpush1.bf16.msra.mxu0 0
        %540 = vmatprep.subr.bf16.mxu0 0
        %541 = vmatpush1.bf16.msra.mxu0 0
        %542 = vmatprep.subr.bf16.mxu0 0
        %543 = vmatpush1.bf16.msra.mxu0 0
        %544 = vmatprep.subr.bf16.mxu0 0
        %545 = vmatpush1.bf16.msra.mxu0 0
        %546 = vmatprep.subr.bf16.mxu0 0
        %547 = vmatpush1.bf16.msra.mxu0 0
        %548 = vmatprep.subr.bf16.mxu0 0
        %549 = vmatpush1.bf16.msra.mxu0 0
        %550 = vmatprep.mubr.bf16.mxu0 0
        %551 = vmatmul.mubr.bf16.gmra.mrb[0].mxu0 %v516
        %v552 = vpop.f32.mrb[0].mxu0
        %v553 = vadd.f32 %v501, %v552
        %v554 = vpop.f32.mrb[0].mxu0
        %v555 = vpop.f32.mrb[0].mxu0
        %v556 = vadd.f32 %v501, %v555
        %v557 = vpop.f32.mrb[0].mxu0
        %558 = vdwg.mxu0
        %v559 = vpack.c.bf16 %v556, %v553
        %v561 = vunpack.c.l.b16 %v559
        %v562 = vunpack.c.h.b16 %v559
        %v563 = vpack.c.b16 %v561, %v561
        %v564 = vpack.c.b16 %v562, %v562
        %565 = vrot.lane.b32.xlu0 %v563, 96
        %v566 = vpop.permute.xlu0 %565
        %vm567 = vcmask 64512
        %v569 = vsel %vm567, %v563, 0
        %v572 = vsel %vm567, %v566, 0
        %574 = vmatprep.subr.bf16.mxu0 0
        %575 = vmatpush1.bf16.xpose.msra.mxu0 %v572
        %576 = vmatprep.subr.bf16.mxu0 0
        %577 = vmatpush1.bf16.xpose.msra.mxu0 0
        %578 = vmatprep.subr.bf16.mxu0 0
        %579 = vmatpush1.bf16.xpose.msra.mxu0 0
        %580 = vmatprep.subr.bf16.mxu0 0
        %581 = vmatpush1.bf16.xpose.msra.mxu0 0
        %582 = vmatprep.subr.bf16.mxu0 0
        %583 = vmatpush1.bf16.xpose.msra.mxu0 0
        %584 = vmatprep.subr.bf16.mxu0 0
        %585 = vmatpush1.bf16.xpose.msra.mxu0 0
        %586 = vmatprep.subr.bf16.mxu0 0
        %587 = vmatpush1.bf16.xpose.msra.mxu0 0
        %588 = vmatprep.subr.bf16.mxu0 0
        %589 = vmatpush1.bf16.xpose.msra.mxu0 0
        %590 = vmatprep.subr.bf16.mxu0 0
        %591 = vmatpush1.bf16.xpose.msra.mxu0 0
        %592 = vmatprep.subr.bf16.mxu0 0
        %593 = vmatpush1.bf16.xpose.msra.mxu0 0
        %594 = vmatprep.subr.bf16.mxu0 0
        %595 = vmatpush1.bf16.xpose.msra.mxu0 0
        %596 = vmatprep.subr.bf16.mxu0 0
        %597 = vmatpush1.bf16.xpose.msra.mxu0 0
        %598 = vmatprep.subr.bf16.mxu0 0
        %599 = vmatpush1.bf16.xpose.msra.mxu0 0
        %600 = vmatprep.subr.bf16.mxu0 0
        %601 = vmatpush1.bf16.xpose.msra.mxu0 0
        %602 = vmatprep.subr.bf16.mxu0 0
        %603 = vmatpush1.bf16.xpose.msra.mxu0 0
        %604 = vmatprep.subr.bf16.mxu0 0
        %605 = vmatpush1.bf16.xpose.msra.mxu0 0
        %606 = vmatprep.mubr.bf16.mxu0 0
        %607 = vmatmul.mubr.bf16.gmra.mrb[0].mxu0 %v569
        %v608 = vpop.f32.mrb[0].mxu0
        %v609 = vadd.f32 0.0, %v608
        %v610 = vpop.f32.mrb[0].mxu0
        %v611 = vpop.f32.mrb[0].mxu0
        %v612 = vpop.f32.mrb[0].mxu0
        %613 = vdwg.mxu0
        %614 = vrot.lane.b32.xlu0 %v564, 96
        %v615 = vpop.permute.xlu0 %614
        %v617 = vsel %vm567, %v564, 0
        %v620 = vsel %vm567, %v615, 0
        %622 = vmatprep.subr.bf16.mxu0 0
        %623 = vmatpush1.bf16.xpose.msra.mxu0 %v620
        %624 = vmatprep.subr.bf16.mxu0 0
        %625 = vmatpush1.bf16.xpose.msra.mxu0 0
        %626 = vmatprep.subr.bf16.mxu0 0
        %627 = vmatpush1.bf16.xpose.msra.mxu0 0
        %628 = vmatprep.subr.bf16.mxu0 0
        %629 = vmatpush1.bf16.xpose.msra.mxu0 0
        %630 = vmatprep.subr.bf16.mxu0 0
        %631 = vmatpush1.bf16.xpose.msra.mxu0 0
        %632 = vmatprep.subr.bf16.mxu0 0
        %633 = vmatpush1.bf16.xpose.msra.mxu0 0
        %634 = vmatprep.subr.bf16.mxu0 0
        %635 = vmatpush1.bf16.xpose.msra.mxu0 0
        %636 = vmatprep.subr.bf16.mxu0 0
        %637 = vmatpush1.bf16.xpose.msra.mxu0 0
        %638 = vmatprep.subr.bf16.mxu0 0
        %639 = vmatpush1.bf16.xpose.msra.mxu0 0
        %640 = vmatprep.subr.bf16.mxu0 0
        %641 = vmatpush1.bf16.xpose.msra.mxu0 0
        %642 = vmatprep.subr.bf16.mxu0 0
        %643 = vmatpush1.bf16.xpose.msra.mxu0 0
        %644 = vmatprep.subr.bf16.mxu0 0
        %645 = vmatpush1.bf16.xpose.msra.mxu0 0
        %646 = vmatprep.subr.bf16.mxu0 0
        %647 = vmatpush1.bf16.xpose.msra.mxu0 0
        %648 = vmatprep.subr.bf16.mxu0 0
        %649 = vmatpush1.bf16.xpose.msra.mxu0 0
        %650 = vmatprep.subr.bf16.mxu0 0
        %651 = vmatpush1.bf16.xpose.msra.mxu0 0
        %652 = vmatprep.subr.bf16.mxu0 0
        %653 = vmatpush1.bf16.xpose.msra.mxu0 0
        %654 = vmatprep.mubr.bf16.mxu0 0
        %655 = vmatmul.mubr.bf16.gmra.mrb[0].mxu0 %v617
        %v656 = vpop.f32.mrb[0].mxu0
        %v657 = vadd.f32 0.0, %v656
        %v658 = vpop.f32.mrb[0].mxu0
        %v659 = vpop.f32.mrb[0].mxu0
        %v660 = vpop.f32.mrb[0].mxu0
        %661 = vdwg.mxu0
        %v662 = vsel %vm567, %v609, -inf
        %663 = vmax.xlane.f32.xlu0 %v662
        %v664 = vpop.xlane.xlu0 %663
        %v665 = vsel %vm567, %v657, -inf
        %666 = vmax.xlane.f32.xlu0 %v665
        %v667 = vpop.xlane.xlu0 %666
        %v668 = vsub.f32 %v609, %v664
        %v669 = vsub.f32 %v657, %v667
        %v670 = vmul.f32 %v668, 1.442695
        %v671 = vpow.pop %v670
        %v672 = vmul.f32 %v669, 1.442695
        %v673 = vpow.pop %v672
        %v674 = vsel %vm567, %v671, 0.0
        %675 = vadd.xlane.f32.xlu0 %v674
        %v676 = vpop.xlane.xlu0 %675
        %v677 = vsel %vm567, %v673, 0.0
        %678 = vadd.xlane.f32.xlu0 %v677
        %v679 = vpop.xlane.xlu0 %678
        %v680 = vrcp.pop %v676
        %v681 = vrcp.pop %v679
        %v682 = vmul.f32 %v671, %v680
        %v683 = vmul.f32 %v673, %v681
        %v684 = vpack.c.bf16 %v682, %v682
        %v685 = vpack.c.bf16 %v683, %v683
        %686 = vrot.lane.b32.xlu0 %v563, 64
        %v687 = vpop.permute.xlu0 %686
        %v689 = vsel %vm567, %v684, 0
        %vm691 = vcmask 1043456
        %v693 = vsel %vm691, %v687, 0
        %695 = vmatprep.subr.bf16.mxu0 0
        %696 = vmatpush1.bf16.msra.mxu0 %v693
        %697 = vmatprep.subr.bf16.mxu0 0
        %698 = vmatpush1.bf16.msra.mxu0 0
        %699 = vmatprep.subr.bf16.mxu0 0
        %700 = vmatpush1.bf16.msra.mxu0 0
        %701 = vmatprep.subr.bf16.mxu0 0
        %702 = vmatpush1.bf16.msra.mxu0 0
        %703 = vmatprep.subr.bf16.mxu0 0
        %704 = vmatpush1.bf16.msra.mxu0 0
        %705 = vmatprep.subr.bf16.mxu0 0
        %706 = vmatpush1.bf16.msra.mxu0 0
        %707 = vmatprep.subr.bf16.mxu0 0
        %708 = vmatpush1.bf16.msra.mxu0 0
        %709 = vmatprep.subr.bf16.mxu0 0
        %710 = vmatpush1.bf16.msra.mxu0 0
        %711 = vmatprep.subr.bf16.mxu0 0
        %712 = vmatpush1.bf16.msra.mxu0 0
        %713 = vmatprep.subr.bf16.mxu0 0
        %714 = vmatpush1.bf16.msra.mxu0 0
        %715 = vmatprep.subr.bf16.mxu0 0
        %716 = vmatpush1.bf16.msra.mxu0 0
        %717 = vmatprep.subr.bf16.mxu0 0
        %718 = vmatpush1.bf16.msra.mxu0 0
        %719 = vmatprep.subr.bf16.mxu0 0
        %720 = vmatpush1.bf16.msra.mxu0 0
        %721 = vmatprep.subr.bf16.mxu0 0
        %722 = vmatpush1.bf16.msra.mxu0 0
        %723 = vmatprep.subr.bf16.mxu0 0
        %724 = vmatpush1.bf16.msra.mxu0 0
        %725 = vmatprep.subr.bf16.mxu0 0
        %726 = vmatpush1.bf16.msra.mxu0 0
        %727 = vmatprep.mubr.bf16.mxu0 0
        %728 = vmatmul.mubr.bf16.gmra.mrb[0].mxu0 %v689
        %v729 = vpop.f32.mrb[0].mxu0
        %v730 = vadd.f32 0.0, %v729
        %v731 = vpop.f32.mrb[0].mxu0
        %v732 = vpop.f32.mrb[0].mxu0
        %v733 = vpop.f32.mrb[0].mxu0
        %734 = vdwg.mxu0
        %735 = vrot.lane.b32.xlu0 %v564, 64
        %v736 = vpop.permute.xlu0 %735
        %v738 = vsel %vm567, %v685, 0
        %v741 = vsel %vm691, %v736, 0
        %743 = vmatprep.subr.bf16.mxu0 0
        %744 = vmatpush1.bf16.msra.mxu0 %v741
        %745 = vmatprep.subr.bf16.mxu0 0
        %746 = vmatpush1.bf16.msra.mxu0 0
        %747 = vmatprep.subr.bf16.mxu0 0
        %748 = vmatpush1.bf16.msra.mxu0 0
        %749 = vmatprep.subr.bf16.mxu0 0
        %750 = vmatpush1.bf16.msra.mxu0 0
        %751 = vmatprep.subr.bf16.mxu0 0
        %752 = vmatpush1.bf16.msra.mxu0 0
        %753 = vmatprep.subr.bf16.mxu0 0
        %754 = vmatpush1.bf16.msra.mxu0 0
        %755 = vmatprep.subr.bf16.mxu0 0
        %756 = vmatpush1.bf16.msra.mxu0 0
        %757 = vmatprep.subr.bf16.mxu0 0
        %758 = vmatpush1.bf16.msra.mxu0 0
        %759 = vmatprep.subr.bf16.mxu0 0
        %760 = vmatpush1.bf16.msra.mxu0 0
        %761 = vmatprep.subr.bf16.mxu0 0
        %762 = vmatpush1.bf16.msra.mxu0 0
        %763 = vmatprep.subr.bf16.mxu0 0
        %764 = vmatpush1.bf16.msra.mxu0 0
        %765 = vmatprep.subr.bf16.mxu0 0
        %766 = vmatpush1.bf16.msra.mxu0 0
        %767 = vmatprep.subr.bf16.mxu0 0
        %768 = vmatpush1.bf16.msra.mxu0 0
        %769 = vmatprep.subr.bf16.mxu0 0
        %770 = vmatpush1.bf16.msra.mxu0 0
        %771 = vmatprep.subr.bf16.mxu0 0
        %772 = vmatpush1.bf16.msra.mxu0 0
        %773 = vmatprep.subr.bf16.mxu0 0
        %774 = vmatpush1.bf16.msra.mxu0 0
        %775 = vmatprep.mubr.bf16.mxu0 0
        %776 = vmatmul.mubr.bf16.gmra.mrb[0].mxu0 %v738
        %v777 = vpop.f32.mrb[0].mxu0
        %v778 = vadd.f32 0.0, %v777
        %v779 = vpop.f32.mrb[0].mxu0
        %v780 = vpop.f32.mrb[0].mxu0
        %v781 = vpop.f32.mrb[0].mxu0
        %782 = vdwg.mxu0
        %783 = vrot.lane.b32.xlu0 %v563, 120
        %v784 = vpop.permute.xlu0 %783
        %785 = vrot.lane.b32.xlu0 %v563, 88
        %v786 = vpop.permute.xlu0 %785
        %v788 = vsel %vm567, %v784, 0
        %v791 = vsel %vm567, %v786, 0
        %793 = vmatprep.subr.bf16.mxu0 0
        %794 = vmatpush1.bf16.xpose.msra.mxu0 %v791
        %795 = vmatprep.subr.bf16.mxu0 0
        %796 = vmatpush1.bf16.xpose.msra.mxu0 0
        %797 = vmatprep.subr.bf16.mxu0 0
        %798 = vmatpush1.bf16.xpose.msra.mxu0 0
        %799 = vmatprep.subr.bf16.mxu0 0
        %800 = vmatpush1.bf16.xpose.msra.mxu0 0
        %801 = vmatprep.subr.bf16.mxu0 0
        %802 = vmatpush1.bf16.xpose.msra.mxu0 0
        %803 = vmatprep.subr.bf16.mxu0 0
        %804 = vmatpush1.bf16.xpose.msra.mxu0 0
        %805 = vmatprep.subr.bf16.mxu0 0
        %806 = vmatpush1.bf16.xpose.msra.mxu0 0
        %807 = vmatprep.subr.bf16.mxu0 0
        %808 = vmatpush1.bf16.xpose.msra.mxu0 0
        %809 = vmatprep.subr.bf16.mxu0 0
        %810 = vmatpush1.bf16.xpose.msra.mxu0 0
        %811 = vmatprep.subr.bf16.mxu0 0
        %812 = vmatpush1.bf16.xpose.msra.mxu0 0
        %813 = vmatprep.subr.bf16.mxu0 0
        %814 = vmatpush1.bf16.xpose.msra.mxu0 0
        %815 = vmatprep.subr.bf16.mxu0 0
        %816 = vmatpush1.bf16.xpose.msra.mxu0 0
        %817 = vmatprep.subr.bf16.mxu0 0
        %818 = vmatpush1.bf16.xpose.msra.mxu0 0
        %819 = vmatprep.subr.bf16.mxu0 0
        %820 = vmatpush1.bf16.xpose.msra.mxu0 0
        %821 = vmatprep.subr.bf16.mxu0 0
        %822 = vmatpush1.bf16.xpose.msra.mxu0 0
        %823 = vmatprep.subr.bf16.mxu0 0
        %824 = vmatpush1.bf16.xpose.msra.mxu0 0
        %825 = vmatprep.mubr.bf16.mxu0 0
        %826 = vmatmul.mubr.bf16.gmra.mrb[0].mxu0 %v788
        %v827 = vpop.f32.mrb[0].mxu0
        %v828 = vadd.f32 0.0, %v827
        %v829 = vpop.f32.mrb[0].mxu0
        %v830 = vpop.f32.mrb[0].mxu0
        %v831 = vpop.f32.mrb[0].mxu0
        %832 = vdwg.mxu0
        %833 = vrot.lane.b32.xlu0 %v564, 120
        %v834 = vpop.permute.xlu0 %833
        %835 = vrot.lane.b32.xlu0 %v564, 88
        %v836 = vpop.permute.xlu0 %835
        %v838 = vsel %vm567, %v834, 0
        %v841 = vsel %vm567, %v836, 0
        %843 = vmatprep.subr.bf16.mxu0 0
        %844 = vmatpush1.bf16.xpose.msra.mxu0 %v841
        %845 = vmatprep.subr.bf16.mxu0 0
        %846 = vmatpush1.bf16.xpose.msra.mxu0 0
        %847 = vmatprep.subr.bf16.mxu0 0
        %848 = vmatpush1.bf16.xpose.msra.mxu0 0
        %849 = vmatprep.subr.bf16.mxu0 0
        %850 = vmatpush1.bf16.xpose.msra.mxu0 0
        %851 = vmatprep.subr.bf16.mxu0 0
        %852 = vmatpush1.bf16.xpose.msra.mxu0 0
        %853 = vmatprep.subr.bf16.mxu0 0
        %854 = vmatpush1.bf16.xpose.msra.mxu0 0
        %855 = vmatprep.subr.bf16.mxu0 0
        %856 = vmatpush1.bf16.xpose.msra.mxu0 0
        %857 = vmatprep.subr.bf16.mxu0 0
        %858 = vmatpush1.bf16.xpose.msra.mxu0 0
        %859 = vmatprep.subr.bf16.mxu0 0
        %860 = vmatpush1.bf16.xpose.msra.mxu0 0
        %861 = vmatprep.subr.bf16.mxu0 0
        %862 = vmatpush1.bf16.xpose.msra.mxu0 0
        %863 = vmatprep.subr.bf16.mxu0 0
        %864 = vmatpush1.bf16.xpose.msra.mxu0 0
        %865 = vmatprep.subr.bf16.mxu0 0
        %866 = vmatpush1.bf16.xpose.msra.mxu0 0
        %867 = vmatprep.subr.bf16.mxu0 0
        %868 = vmatpush1.bf16.xpose.msra.mxu0 0
        %869 = vmatprep.subr.bf16.mxu0 0
        %870 = vmatpush1.bf16.xpose.msra.mxu0 0
        %871 = vmatprep.subr.bf16.mxu0 0
        %872 = vmatpush1.bf16.xpose.msra.mxu0 0
        %873 = vmatprep.subr.bf16.mxu0 0
        %874 = vmatpush1.bf16.xpose.msra.mxu0 0
        %875 = vmatprep.mubr.bf16.mxu0 0
        %876 = vmatmul.mubr.bf16.gmra.mrb[0].mxu0 %v838
        %v877 = vpop.f32.mrb[0].mxu0
        %v878 = vadd.f32 0.0, %v877
        %v879 = vpop.f32.mrb[0].mxu0
        %v880 = vpop.f32.mrb[0].mxu0
        %v881 = vpop.f32.mrb[0].mxu0
        %882 = vdwg.mxu0
        %v883 = vsel %vm567, %v828, -inf
        %884 = vmax.xlane.f32.xlu0 %v883
        %v885 = vpop.xlane.xlu0 %884
        %v886 = vsel %vm567, %v878, -inf
        %887 = vmax.xlane.f32.xlu0 %v886
        %v888 = vpop.xlane.xlu0 %887
        %v889 = vsub.f32 %v828, %v885
        %v890 = vsub.f32 %v878, %v888
        %v891 = vmul.f32 %v889, 1.442695
        %v892 = vpow.pop %v891
        %v893 = vmul.f32 %v890, 1.442695
        %v894 = vpow.pop %v893
        %v895 = vsel %vm567, %v892, 0.0
        %896 = vadd.xlane.f32.xlu0 %v895
        %v897 = vpop.xlane.xlu0 %896
        %v898 = vsel %vm567, %v894, 0.0
        %899 = vadd.xlane.f32.xlu0 %v898
        %v900 = vpop.xlane.xlu0 %899
        %v901 = vrcp.pop %v897
        %v902 = vrcp.pop %v900
        %v903 = vmul.f32 %v892, %v901
        %v904 = vmul.f32 %v894, %v902
        %v905 = vpack.c.bf16 %v903, %v903
        %v906 = vpack.c.bf16 %v904, %v904
        %907 = vrot.lane.b32.xlu0 %v563, 56
        %v908 = vpop.permute.xlu0 %907
        %v910 = vsel %vm567, %v905, 0
        %v913 = vsel %vm691, %v908, 0
        %915 = vmatprep.subr.bf16.mxu0 0
        %916 = vmatpush1.bf16.msra.mxu0 %v913
        %917 = vmatprep.subr.bf16.mxu0 0
        %918 = vmatpush1.bf16.msra.mxu0 0
        %919 = vmatprep.subr.bf16.mxu0 0
        %920 = vmatpush1.bf16.msra.mxu0 0
        %921 = vmatprep.subr.bf16.mxu0 0
        %922 = vmatpush1.bf16.msra.mxu0 0
        %923 = vmatprep.subr.bf16.mxu0 0
        %924 = vmatpush1.bf16.msra.mxu0 0
        %925 = vmatprep.subr.bf16.mxu0 0
        %926 = vmatpush1.bf16.msra.mxu0 0
        %927 = vmatprep.subr.bf16.mxu0 0
        %928 = vmatpush1.bf16.msra.mxu0 0
        %929 = vmatprep.subr.bf16.mxu0 0
        %930 = vmatpush1.bf16.msra.mxu0 0
        %931 = vmatprep.subr.bf16.mxu0 0
        %932 = vmatpush1.bf16.msra.mxu0 0
        %933 = vmatprep.subr.bf16.mxu0 0
        %934 = vmatpush1.bf16.msra.mxu0 0
        %935 = vmatprep.subr.bf16.mxu0 0
        %936 = vmatpush1.bf16.msra.mxu0 0
        %937 = vmatprep.subr.bf16.mxu0 0
        %938 = vmatpush1.bf16.msra.mxu0 0
        %939 = vmatprep.subr.bf16.mxu0 0
        %940 = vmatpush1.bf16.msra.mxu0 0
        %941 = vmatprep.subr.bf16.mxu0 0
        %942 = vmatpush1.bf16.msra.mxu0 0
        %943 = vmatprep.subr.bf16.mxu0 0
        %944 = vmatpush1.bf16.msra.mxu0 0
        %945 = vmatprep.subr.bf16.mxu0 0
        %946 = vmatpush1.bf16.msra.mxu0 0
        %947 = vmatprep.mubr.bf16.mxu0 0
        %948 = vmatmul.mubr.bf16.gmra.mrb[0].mxu0 %v910
        %v949 = vpop.f32.mrb[0].mxu0
        %v950 = vadd.f32 0.0, %v949
        %v951 = vpop.f32.mrb[0].mxu0
        %v952 = vpop.f32.mrb[0].mxu0
        %v953 = vpop.f32.mrb[0].mxu0
        %954 = vdwg.mxu0
        %955 = vrot.lane.b32.xlu0 %v564, 56
        %v956 = vpop.permute.xlu0 %955
        %v958 = vsel %vm567, %v906, 0
        %v961 = vsel %vm691, %v956, 0
        %963 = vmatprep.subr.bf16.mxu0 0
        %964 = vmatpush1.bf16.msra.mxu0 %v961
        %965 = vmatprep.subr.bf16.mxu0 0
        %966 = vmatpush1.bf16.msra.mxu0 0
        %967 = vmatprep.subr.bf16.mxu0 0
        %968 = vmatpush1.bf16.msra.mxu0 0
        %969 = vmatprep.subr.bf16.mxu0 0
        %970 = vmatpush1.bf16.msra.mxu0 0
        %971 = vmatprep.subr.bf16.mxu0 0
        %972 = vmatpush1.bf16.msra.mxu0 0
        %973 = vmatprep.subr.bf16.mxu0 0
        %974 = vmatpush1.bf16.msra.mxu0 0
        %975 = vmatprep.subr.bf16.mxu0 0
        %976 = vmatpush1.bf16.msra.mxu0 0
        %977 = vmatprep.subr.bf16.mxu0 0
        %978 = vmatpush1.bf16.msra.mxu0 0
        %979 = vmatprep.subr.bf16.mxu0 0
        %980 = vmatpush1.bf16.msra.mxu0 0
        %981 = vmatprep.subr.bf16.mxu0 0
        %982 = vmatpush1.bf16.msra.mxu0 0
        %983 = vmatprep.subr.bf16.mxu0 0
        %984 = vmatpush1.bf16.msra.mxu0 0
        %985 = vmatprep.subr.bf16.mxu0 0
        %986 = vmatpush1.bf16.msra.mxu0 0
        %987 = vmatprep.subr.bf16.mxu0 0
        %988 = vmatpush1.bf16.msra.mxu0 0
        %989 = vmatprep.subr.bf16.mxu0 0
        %990 = vmatpush1.bf16.msra.mxu0 0
        %991 = vmatprep.subr.bf16.mxu0 0
        %992 = vmatpush1.bf16.msra.mxu0 0
        %993 = vmatprep.subr.bf16.mxu0 0
        %994 = vmatpush1.bf16.msra.mxu0 0
        %995 = vmatprep.mubr.bf16.mxu0 0
        %996 = vmatmul.mubr.bf16.gmra.mrb[0].mxu0 %v958
        %v997 = vpop.f32.mrb[0].mxu0
        %v998 = vadd.f32 0.0, %v997
        %v999 = vpop.f32.mrb[0].mxu0
        %v1000 = vpop.f32.mrb[0].mxu0
        %v1001 = vpop.f32.mrb[0].mxu0
        %1002 = vdwg.mxu0
        %1003 = vrot.lane.b32.xlu0 %v563, 112
        %v1004 = vpop.permute.xlu0 %1003
        %1005 = vrot.lane.b32.xlu0 %v563, 80
        %v1006 = vpop.permute.xlu0 %1005
        %v1008 = vsel %vm567, %v1004, 0
        %v1011 = vsel %vm567, %v1006, 0
        %1013 = vmatprep.subr.bf16.mxu0 0
        %1014 = vmatpush1.bf16.xpose.msra.mxu0 %v1011
        %1015 = vmatprep.subr.bf16.mxu0 0
        %1016 = vmatpush1.bf16.xpose.msra.mxu0 0
        %1017 = vmatprep.subr.bf16.mxu0 0
        %1018 = vmatpush1.bf16.xpose.msra.mxu0 0
        %1019 = vmatprep.subr.bf16.mxu0 0
        %1020 = vmatpush1.bf16.xpose.msra.mxu0 0
        %1021 = vmatprep.subr.bf16.mxu0 0
        %1022 = vmatpush1.bf16.xpose.msra.mxu0 0
        %1023 = vmatprep.subr.bf16.mxu0 0
        %1024 = vmatpush1.bf16.xpose.msra.mxu0 0
        %1025 = vmatprep.subr.bf16.mxu0 0
        %1026 = vmatpush1.bf16.xpose.msra.mxu0 0
        %1027 = vmatprep.subr.bf16.mxu0 0
        %1028 = vmatpush1.bf16.xpose.msra.mxu0 0
        %1029 = vmatprep.subr.bf16.mxu0 0
        %1030 = vmatpush1.bf16.xpose.msra.mxu0 0
        %1031 = vmatprep.subr.bf16.mxu0 0
        %1032 = vmatpush1.bf16.xpose.msra.mxu0 0
        %1033 = vmatprep.subr.bf16.mxu0 0
        %1034 = vmatpush1.bf16.xpose.msra.mxu0 0
        %1035 = vmatprep.subr.bf16.mxu0 0
        %1036 = vmatpush1.bf16.xpose.msra.mxu0 0
        %1037 = vmatprep.subr.bf16.mxu0 0
        %1038 = vmatpush1.bf16.xpose.msra.mxu0 0
        %1039 = vmatprep.subr.bf16.mxu0 0
        %1040 = vmatpush1.bf16.xpose.msra.mxu0 0
        %1041 = vmatprep.subr.bf16.mxu0 0
        %1042 = vmatpush1.bf16.xpose.msra.mxu0 0
        %1043 = vmatprep.subr.bf16.mxu0 0
        %1044 = vmatpush1.bf16.xpose.msra.mxu0 0
        %1045 = vmatprep.mubr.bf16.mxu0 0
        %1046 = vmatmul.mubr.bf16.gmra.mrb[0].mxu0 %v1008
        %v1047 = vpop.f32.mrb[0].mxu0
        %v1048 = vadd.f32 0.0, %v1047
        %v1049 = vpop.f32.mrb[0].mxu0
        %v1050 = vpop.f32.mrb[0].mxu0
        %v1051 = vpop.f32.mrb[0].mxu0
        %1052 = vdwg.mxu0
        %1053 = vrot.lane.b32.xlu0 %v564, 112
        %v1054 = vpop.permute.xlu0 %1053
        %1055 = vrot.lane.b32.xlu0 %v564, 80
        %v1056 = vpop.permute.xlu0 %1055
        %v1058 = vsel %vm567, %v1054, 0
        %v1061 = vsel %vm567, %v1056, 0
        %1063 = vmatprep.subr.bf16.mxu0 0
        %1064 = vmatpush1.bf16.xpose.msra.mxu0 %v1061
        %1065 = vmatprep.subr.bf16.mxu0 0
        %1066 = vmatpush1.bf16.xpose.msra.mxu0 0
        %1067 = vmatprep.subr.bf16.mxu0 0
        %1068 = vmatpush1.bf16.xpose.msra.mxu0 0
        %1069 = vmatprep.subr.bf16.mxu0 0
        %1070 = vmatpush1.bf16.xpose.msra.mxu0 0
        %1071 = vmatprep.subr.bf16.mxu0 0
        %1072 = vmatpush1.bf16.xpose.msra.mxu0 0
        %1073 = vmatprep.subr.bf16.mxu0 0
        %1074 = vmatpush1.bf16.xpose.msra.mxu0 0
        %1075 = vmatprep.subr.bf16.mxu0 0
        %1076 = vmatpush1.bf16.xpose.msra.mxu0 0
        %1077 = vmatprep.subr.bf16.mxu0 0
        %1078 = vmatpush1.bf16.xpose.msra.mxu0 0
        %1079 = vmatprep.subr.bf16.mxu0 0
        %1080 = vmatpush1.bf16.xpose.msra.mxu0 0
        %1081 = vmatprep.subr.bf16.mxu0 0
        %1082 = vmatpush1.bf16.xpose.msra.mxu0 0
        %1083 = vmatprep.subr.bf16.mxu0 0
        %1084 = vmatpush1.bf16.xpose.msra.mxu0 0
        %1085 = vmatprep.subr.bf16.mxu0 0
        %1086 = vmatpush1.bf16.xpose.msra.mxu0 0
        %1087 = vmatprep.subr.bf16.mxu0 0
        %1088 = vmatpush1.bf16.xpose.msra.mxu0 0
        %1089 = vmatprep.subr.bf16.mxu0 0
        %1090 = vmatpush1.bf16.xpose.msra.mxu0 0
        %1091 = vmatprep.subr.bf16.mxu0 0
        %1092 = vmatpush1.bf16.xpose.msra.mxu0 0
        %1093 = vmatprep.subr.bf16.mxu0 0
        %1094 = vmatpush1.bf16.xpose.msra.mxu0 0
        %1095 = vmatprep.mubr.bf16.mxu0 0
        %1096 = vmatmul.mubr.bf16.gmra.mrb[0].mxu0 %v1058
        %v1097 = vpop.f32.mrb[0].mxu0
        %v1098 = vadd.f32 0.0, %v1097
        %v1099 = vpop.f32.mrb[0].mxu0
        %v1100 = vpop.f32.mrb[0].mxu0
        %v1101 = vpop.f32.mrb[0].mxu0
        %1102 = vdwg.mxu0
        %v1103 = vsel %vm567, %v1048, -inf
        %1104 = vmax.xlane.f32.xlu0 %v1103
        %v1105 = vpop.xlane.xlu0 %1104
        %v1106 = vsel %vm567, %v1098, -inf
        %1107 = vmax.xlane.f32.xlu0 %v1106
        %v1108 = vpop.xlane.xlu0 %1107
        %v1109 = vsub.f32 %v1048, %v1105
        %v1110 = vsub.f32 %v1098, %v1108
        %v1111 = vmul.f32 %v1109, 1.442695
        %v1112 = vpow.pop %v1111
        %v1113 = vmul.f32 %v1110, 1.442695
        %v1114 = vpow.pop %v1113
        %v1115 = vsel %vm567, %v1112, 0.0
        %1116 = vadd.xlane.f32.xlu0 %v1115
        %v1117 = vpop.xlane.xlu0 %1116
        %v1118 = vsel %vm567, %v1114, 0.0
        %1119 = vadd.xlane.f32.xlu0 %v1118
        %v1120 = vpop.xlane.xlu0 %1119
        %v1121 = vrcp.pop %v1117
        %v1122 = vrcp.pop %v1120
        %v1123 = vmul.f32 %v1112, %v1121
        %v1124 = vmul.f32 %v1114, %v1122
        %v1125 = vpack.c.bf16 %v1123, %v1123
        %v1126 = vpack.c.bf16 %v1124, %v1124
        %1127 = vrot.lane.b32.xlu0 %v563, 48
        %v1128 = vpop.permute.xlu0 %1127
        %v1130 = vsel %vm567, %v1125, 0
        %v1133 = vsel %vm691, %v1128, 0
        %1135 = vmatprep.subr.bf16.mxu0 0
        %1136 = vmatpush1.bf16.msra.mxu0 %v1133
        %1137 = vmatprep.subr.bf16.mxu0 0
        %1138 = vmatpush1.bf16.msra.mxu0 0
        %1139 = vmatprep.subr.bf16.mxu0 0
        %1140 = vmatpush1.bf16.msra.mxu0 0
        %1141 = vmatprep.subr.bf16.mxu0 0
        %1142 = vmatpush1.bf16.msra.mxu0 0
        %1143 = vmatprep.subr.bf16.mxu0 0
        %1144 = vmatpush1.bf16.msra.mxu0 0
        %1145 = vmatprep.subr.bf16.mxu0 0
        %1146 = vmatpush1.bf16.msra.mxu0 0
        %1147 = vmatprep.subr.bf16.mxu0 0
        %1148 = vmatpush1.bf16.msra.mxu0 0
        %1149 = vmatprep.subr.bf16.mxu0 0
        %1150 = vmatpush1.bf16.msra.mxu0 0
        %1151 = vmatprep.subr.bf16.mxu0 0
        %1152 = vmatpush1.bf16.msra.mxu0 0
        %1153 = vmatprep.subr.bf16.mxu0 0
        %1154 = vmatpush1.bf16.msra.mxu0 0
        %1155 = vmatprep.subr.bf16.mxu0 0
        %1156 = vmatpush1.bf16.msra.mxu0 0
        %1157 = vmatprep.subr.bf16.mxu0 0
        %1158 = vmatpush1.bf16.msra.mxu0 0
        %1159 = vmatprep.subr.bf16.mxu0 0
        %1160 = vmatpush1.bf16.msra.mxu0 0
        %1161 = vmatprep.subr.bf16.mxu0 0
        %1162 = vmatpush1.bf16.msra.mxu0 0
        %1163 = vmatprep.subr.bf16.mxu0 0
        %1164 = vmatpush1.bf16.msra.mxu0 0
        %1165 = vmatprep.subr.bf16.mxu0 0
        %1166 = vmatpush1.bf16.msra.mxu0 0
        %1167 = vmatprep.mubr.bf16.mxu0 0
        %1168 = vmatmul.mubr.bf16.gmra.mrb[0].mxu0 %v1130
        %v1169 = vpop.f32.mrb[0].mxu0
        %v1170 = vadd.f32 0.0, %v1169
        %v1171 = vpop.f32.mrb[0].mxu0
        %v1172 = vpop.f32.mrb[0].mxu0
        %v1173 = vpop.f32.mrb[0].mxu0
        %1174 = vdwg.mxu0
        %1175 = vrot.lane.b32.xlu0 %v564, 48
        %v1176 = vpop.permute.xlu0 %1175
        %v1178 = vsel %vm567, %v1126, 0
        %v1181 = vsel %vm691, %v1176, 0
        %1183 = vmatprep.subr.bf16.mxu0 0
        %1184 = vmatpush1.bf16.msra.mxu0 %v1181
        %1185 = vmatprep.subr.bf16.mxu0 0
        %1186 = vmatpush1.bf16.msra.mxu0 0
        %1187 = vmatprep.subr.bf16.mxu0 0
        %1188 = vmatpush1.bf16.msra.mxu0 0
        %1189 = vmatprep.subr.bf16.mxu0 0
        %1190 = vmatpush1.bf16.msra.mxu0 0
        %1191 = vmatprep.subr.bf16.mxu0 0
        %1192 = vmatpush1.bf16.msra.mxu0 0
        %1193 = vmatprep.subr.bf16.mxu0 0
        %1194 = vmatpush1.bf16.msra.mxu0 0
        %1195 = vmatprep.subr.bf16.mxu0 0
        %1196 = vmatpush1.bf16.msra.mxu0 0
        %1197 = vmatprep.subr.bf16.mxu0 0
        %1198 = vmatpush1.bf16.msra.mxu0 0
        %1199 = vmatprep.subr.bf16.mxu0 0
        %1200 = vmatpush1.bf16.msra.mxu0 0
        %1201 = vmatprep.subr.bf16.mxu0 0
        %1202 = vmatpush1.bf16.msra.mxu0 0
        %1203 = vmatprep.subr.bf16.mxu0 0
        %1204 = vmatpush1.bf16.msra.mxu0 0
        %1205 = vmatprep.subr.bf16.mxu0 0
        %1206 = vmatpush1.bf16.msra.mxu0 0
        %1207 = vmatprep.subr.bf16.mxu0 0
        %1208 = vmatpush1.bf16.msra.mxu0 0
        %1209 = vmatprep.subr.bf16.mxu0 0
        %1210 = vmatpush1.bf16.msra.mxu0 0
        %1211 = vmatprep.subr.bf16.mxu0 0
        %1212 = vmatpush1.bf16.msra.mxu0 0
        %1213 = vmatprep.subr.bf16.mxu0 0
        %1214 = vmatpush1.bf16.msra.mxu0 0
        %1215 = vmatprep.mubr.bf16.mxu0 0
        %1216 = vmatmul.mubr.bf16.gmra.mrb[0].mxu0 %v1178
        %v1217 = vpop.f32.mrb[0].mxu0
        %v1218 = vadd.f32 0.0, %v1217
        %v1219 = vpop.f32.mrb[0].mxu0
        %v1220 = vpop.f32.mrb[0].mxu0
        %v1221 = vpop.f32.mrb[0].mxu0
        %1222 = vdwg.mxu0
        %1223 = vrot.lane.b32.xlu0 %v563, 104
        %v1224 = vpop.permute.xlu0 %1223
        %1225 = vrot.lane.b32.xlu0 %v563, 72
        %v1226 = vpop.permute.xlu0 %1225
        %v1228 = vsel %vm567, %v1224, 0
        %v1231 = vsel %vm567, %v1226, 0
        %1233 = vmatprep.subr.bf16.mxu0 0
        %1234 = vmatpush1.bf16.xpose.msra.mxu0 %v1231
        %1235 = vmatprep.subr.bf16.mxu0 0
        %1236 = vmatpush1.bf16.xpose.msra.mxu0 0
        %1237 = vmatprep.subr.bf16.mxu0 0
        %1238 = vmatpush1.bf16.xpose.msra.mxu0 0
        %1239 = vmatprep.subr.bf16.mxu0 0
        %1240 = vmatpush1.bf16.xpose.msra.mxu0 0
        %1241 = vmatprep.subr.bf16.mxu0 0
        %1242 = vmatpush1.bf16.xpose.msra.mxu0 0
        %1243 = vmatprep.subr.bf16.mxu0 0
        %1244 = vmatpush1.bf16.xpose.msra.mxu0 0
        %1245 = vmatprep.subr.bf16.mxu0 0
        %1246 = vmatpush1.bf16.xpose.msra.mxu0 0
        %1247 = vmatprep.subr.bf16.mxu0 0
        %1248 = vmatpush1.bf16.xpose.msra.mxu0 0
        %1249 = vmatprep.subr.bf16.mxu0 0
        %1250 = vmatpush1.bf16.xpose.msra.mxu0 0
        %1251 = vmatprep.subr.bf16.mxu0 0
        %1252 = vmatpush1.bf16.xpose.msra.mxu0 0
        %1253 = vmatprep.subr.bf16.mxu0 0
        %1254 = vmatpush1.bf16.xpose.msra.mxu0 0
        %1255 = vmatprep.subr.bf16.mxu0 0
        %1256 = vmatpush1.bf16.xpose.msra.mxu0 0
        %1257 = vmatprep.subr.bf16.mxu0 0
        %1258 = vmatpush1.bf16.xpose.msra.mxu0 0
        %1259 = vmatprep.subr.bf16.mxu0 0
        %1260 = vmatpush1.bf16.xpose.msra.mxu0 0
        %1261 = vmatprep.subr.bf16.mxu0 0
        %1262 = vmatpush1.bf16.xpose.msra.mxu0 0
        %1263 = vmatprep.subr.bf16.mxu0 0
        %1264 = vmatpush1.bf16.xpose.msra.mxu0 0
        %1265 = vmatprep.mubr.bf16.mxu0 0
        %1266 = vmatmul.mubr.bf16.gmra.mrb[0].mxu0 %v1228
        %v1267 = vpop.f32.mrb[0].mxu0
        %v1268 = vadd.f32 0.0, %v1267
        %v1269 = vpop.f32.mrb[0].mxu0
        %v1270 = vpop.f32.mrb[0].mxu0
        %v1271 = vpop.f32.mrb[0].mxu0
        %1272 = vdwg.mxu0
        %1273 = vrot.lane.b32.xlu0 %v564, 104
        %v1274 = vpop.permute.xlu0 %1273
        %1275 = vrot.lane.b32.xlu0 %v564, 72
        %v1276 = vpop.permute.xlu0 %1275
        %v1278 = vsel %vm567, %v1274, 0
        %v1281 = vsel %vm567, %v1276, 0
        %1283 = vmatprep.subr.bf16.mxu0 0
        %1284 = vmatpush1.bf16.xpose.msra.mxu0 %v1281
        %1285 = vmatprep.subr.bf16.mxu0 0
        %1286 = vmatpush1.bf16.xpose.msra.mxu0 0
        %1287 = vmatprep.subr.bf16.mxu0 0
        %1288 = vmatpush1.bf16.xpose.msra.mxu0 0
        %1289 = vmatprep.subr.bf16.mxu0 0
        %1290 = vmatpush1.bf16.xpose.msra.mxu0 0
        %1291 = vmatprep.subr.bf16.mxu0 0
        %1292 = vmatpush1.bf16.xpose.msra.mxu0 0
        %1293 = vmatprep.subr.bf16.mxu0 0
        %1294 = vmatpush1.bf16.xpose.msra.mxu0 0
        %1295 = vmatprep.subr.bf16.mxu0 0
        %1296 = vmatpush1.bf16.xpose.msra.mxu0 0
        %1297 = vmatprep.subr.bf16.mxu0 0
        %1298 = vmatpush1.bf16.xpose.msra.mxu0 0
        %1299 = vmatprep.subr.bf16.mxu0 0
        %1300 = vmatpush1.bf16.xpose.msra.mxu0 0
        %1301 = vmatprep.subr.bf16.mxu0 0
        %1302 = vmatpush1.bf16.xpose.msra.mxu0 0
        %1303 = vmatprep.subr.bf16.mxu0 0
        %1304 = vmatpush1.bf16.xpose.msra.mxu0 0
        %1305 = vmatprep.subr.bf16.mxu0 0
        %1306 = vmatpush1.bf16.xpose.msra.mxu0 0
        %1307 = vmatprep.subr.bf16.mxu0 0
        %1308 = vmatpush1.bf16.xpose.msra.mxu0 0
        %1309 = vmatprep.subr.bf16.mxu0 0
        %1310 = vmatpush1.bf16.xpose.msra.mxu0 0
        %1311 = vmatprep.subr.bf16.mxu0 0
        %1312 = vmatpush1.bf16.xpose.msra.mxu0 0
        %1313 = vmatprep.subr.bf16.mxu0 0
        %1314 = vmatpush1.bf16.xpose.msra.mxu0 0
        %1315 = vmatprep.mubr.bf16.mxu0 0
        %1316 = vmatmul.mubr.bf16.gmra.mrb[0].mxu0 %v1278
        %v1317 = vpop.f32.mrb[0].mxu0
        %v1318 = vadd.f32 0.0, %v1317
        %v1319 = vpop.f32.mrb[0].mxu0
        %v1320 = vpop.f32.mrb[0].mxu0
        %v1321 = vpop.f32.mrb[0].mxu0
        %1322 = vdwg.mxu0
        %v1323 = vsel %vm567, %v1268, -inf
        %1324 = vmax.xlane.f32.xlu0 %v1323
        %v1325 = vpop.xlane.xlu0 %1324
        %v1326 = vsel %vm567, %v1318, -inf
        %1327 = vmax.xlane.f32.xlu0 %v1326
        %v1328 = vpop.xlane.xlu0 %1327
        %v1329 = vsub.f32 %v1268, %v1325
        %v1330 = vsub.f32 %v1318, %v1328
        %v1331 = vmul.f32 %v1329, 1.442695
        %v1332 = vpow.pop %v1331
        %v1333 = vmul.f32 %v1330, 1.442695
        %v1334 = vpow.pop %v1333
        %v1335 = vsel %vm567, %v1332, 0.0
        %1336 = vadd.xlane.f32.xlu0 %v1335
        %v1337 = vpop.xlane.xlu0 %1336
        %v1338 = vsel %vm567, %v1334, 0.0
        %1339 = vadd.xlane.f32.xlu0 %v1338
        %v1340 = vpop.xlane.xlu0 %1339
        %v1341 = vrcp.pop %v1337
        %v1342 = vrcp.pop %v1340
        %v1343 = vmul.f32 %v1332, %v1341
        %v1344 = vmul.f32 %v1334, %v1342
        %v1345 = vpack.c.bf16 %v1343, %v1343
        %v1346 = vpack.c.bf16 %v1344, %v1344
        %1347 = vrot.lane.b32.xlu0 %v563, 40
        %v1348 = vpop.permute.xlu0 %1347
        %v1350 = vsel %vm567, %v1345, 0
        %v1353 = vsel %vm691, %v1348, 0
        %1355 = vmatprep.subr.bf16.mxu0 0
        %1356 = vmatpush1.bf16.msra.mxu0 %v1353
        %1357 = vmatprep.subr.bf16.mxu0 0
        %1358 = vmatpush1.bf16.msra.mxu0 0
        %1359 = vmatprep.subr.bf16.mxu0 0
        %1360 = vmatpush1.bf16.msra.mxu0 0
        %1361 = vmatprep.subr.bf16.mxu0 0
        %1362 = vmatpush1.bf16.msra.mxu0 0
        %1363 = vmatprep.subr.bf16.mxu0 0
        %1364 = vmatpush1.bf16.msra.mxu0 0
        %1365 = vmatprep.subr.bf16.mxu0 0
        %1366 = vmatpush1.bf16.msra.mxu0 0
        %1367 = vmatprep.subr.bf16.mxu0 0
        %1368 = vmatpush1.bf16.msra.mxu0 0
        %1369 = vmatprep.subr.bf16.mxu0 0
        %1370 = vmatpush1.bf16.msra.mxu0 0
        %1371 = vmatprep.subr.bf16.mxu0 0
        %1372 = vmatpush1.bf16.msra.mxu0 0
        %1373 = vmatprep.subr.bf16.mxu0 0
        %1374 = vmatpush1.bf16.msra.mxu0 0
        %1375 = vmatprep.subr.bf16.mxu0 0
        %1376 = vmatpush1.bf16.msra.mxu0 0
        %1377 = vmatprep.subr.bf16.mxu0 0
        %1378 = vmatpush1.bf16.msra.mxu0 0
        %1379 = vmatprep.subr.bf16.mxu0 0
        %1380 = vmatpush1.bf16.msra.mxu0 0
        %1381 = vmatprep.subr.bf16.mxu0 0
        %1382 = vmatpush1.bf16.msra.mxu0 0
        %1383 = vmatprep.subr.bf16.mxu0 0
        %1384 = vmatpush1.bf16.msra.mxu0 0
        %1385 = vmatprep.subr.bf16.mxu0 0
        %1386 = vmatpush1.bf16.msra.mxu0 0
        %1387 = vmatprep.mubr.bf16.mxu0 0
        %1388 = vmatmul.mubr.bf16.gmra.mrb[0].mxu0 %v1350
        %v1389 = vpop.f32.mrb[0].mxu0
        %v1390 = vadd.f32 0.0, %v1389
        %v1391 = vpop.f32.mrb[0].mxu0
        %v1392 = vpop.f32.mrb[0].mxu0
        %v1393 = vpop.f32.mrb[0].mxu0
        %1394 = vdwg.mxu0
        %1395 = vrot.lane.b32.xlu0 %v564, 40
        %v1396 = vpop.permute.xlu0 %1395
        %v1398 = vsel %vm567, %v1346, 0
        %v1401 = vsel %vm691, %v1396, 0
        %1403 = vmatprep.subr.bf16.mxu0 0
        %1404 = vmatpush1.bf16.msra.mxu0 %v1401
        %1405 = vmatprep.subr.bf16.mxu0 0
        %1406 = vmatpush1.bf16.msra.mxu0 0
        %1407 = vmatprep.subr.bf16.mxu0 0
        %1408 = vmatpush1.bf16.msra.mxu0 0
        %1409 = vmatprep.subr.bf16.mxu0 0
        %1410 = vmatpush1.bf16.msra.mxu0 0
        %1411 = vmatprep.subr.bf16.mxu0 0
        %1412 = vmatpush1.bf16.msra.mxu0 0
        %1413 = vmatprep.subr.bf16.mxu0 0
        %1414 = vmatpush1.bf16.msra.mxu0 0
        %1415 = vmatprep.subr.bf16.mxu0 0
        %1416 = vmatpush1.bf16.msra.mxu0 0
        %1417 = vmatprep.subr.bf16.mxu0 0
        %1418 = vmatpush1.bf16.msra.mxu0 0
        %1419 = vmatprep.subr.bf16.mxu0 0
        %1420 = vmatpush1.bf16.msra.mxu0 0
        %1421 = vmatprep.subr.bf16.mxu0 0
        %1422 = vmatpush1.bf16.msra.mxu0 0
        %1423 = vmatprep.subr.bf16.mxu0 0
        %1424 = vmatpush1.bf16.msra.mxu0 0
        %1425 = vmatprep.subr.bf16.mxu0 0
        %1426 = vmatpush1.bf16.msra.mxu0 0
        %1427 = vmatprep.subr.bf16.mxu0 0
        %1428 = vmatpush1.bf16.msra.mxu0 0
        %1429 = vmatprep.subr.bf16.mxu0 0
        %1430 = vmatpush1.bf16.msra.mxu0 0
        %1431 = vmatprep.subr.bf16.mxu0 0
        %1432 = vmatpush1.bf16.msra.mxu0 0
        %1433 = vmatprep.subr.bf16.mxu0 0
        %1434 = vmatpush1.bf16.msra.mxu0 0
        %1435 = vmatprep.mubr.bf16.mxu0 0
        %1436 = vmatmul.mubr.bf16.gmra.mrb[0].mxu0 %v1398
        %v1437 = vpop.f32.mrb[0].mxu0
        %v1438 = vadd.f32 0.0, %v1437
        %v1439 = vpop.f32.mrb[0].mxu0
        %v1440 = vpop.f32.mrb[0].mxu0
        %v1441 = vpop.f32.mrb[0].mxu0
        %1442 = vdwg.mxu0
        %1445 = vrot.lane.b32.xlu0 %v950, 8
        %v1446 = vpop.permute.xlu0 %1445
        %1447 = vrot.lane.b32.xlu0 %v998, 8
        %v1448 = vpop.permute.xlu0 %1447
        %1453 = vrot.lane.b32.xlu0 %v1170, 16
        %v1454 = vpop.permute.xlu0 %1453
        %1455 = vrot.lane.b32.xlu0 %v1218, 16
        %v1456 = vpop.permute.xlu0 %1455
        %1461 = vrot.lane.b32.xlu0 %v1390, 24
        %v1462 = vpop.permute.xlu0 %1461
        %1463 = vrot.lane.b32.xlu0 %v1438, 24
        %v1464 = vpop.permute.xlu0 %1463
        %v1467 = vsel %vm567, %v730, %v1446
        %v1468 = vsel %vm567, %v778, %v1448
        %vm1469 = vcmask 130048
        %v1470 = vsel %vm1469, %v1467, %v1454
        %v1471 = vsel %vm1469, %v1468, %v1456
        %vm1472 = vcmask 195584
        %v1473 = vsel %vm1472, %v1470, %v1462
        %v1474 = vsel %vm1472, %v1471, %v1464
        %v1475 = vpack.c.bf16 %v1473, %v1473
        %v1476 = vpack.c.bf16 %v1474, %v1474
        %vm1477 = vcmask 257024
        %1478 = vst.msk [vmem:[#allocation2] sm:$0xf] %vm1477, %v1475
        %1479 = vst.msk [vmem:[#allocation2 + $0x4] sm:$0xf] %vm1477, %v1476
        %v1480 = vld [vmem:[#allocation2] sm:$0xf]
        %v1481 = vld [vmem:[#allocation2 + $0x4] sm:$0xf]
        %v1482 = vld [vmem:[%s5] sm:$0xf]
        %v1483 = vld [vmem:[%s5 + $0x4] sm:$0xf]
        %v1484 = vld [vmem:[%s5 + $0x8] sm:$0xf]
        %v1485 = vld [vmem:[%s5 + $0xc] sm:$0xf]
        %v1486 = vld [vmem:[%s6] sm:$0x1]
        %v1488 = vlaneseq
        %v1489 = vshrl.u32 %v1488, 7
        %v1490 = vsub.s32 0, %v1489
        %v1491 = vrot.slane %v1486, %v1490
        %v1495 = vunpack.c.l.b16 %v1480
        %v1496 = vunpack.c.l.b16 %v1481
        %v1497 = vpack.c.b16 %v1496, %v1495
        %v1502 = vunpack.c.l.b16 %v1482
        %v1503 = vunpack.c.l.b16 %v1483
        %v1504 = vunpack.c.l.b16 %v1484
        %v1505 = vunpack.c.l.b16 %v1485
        %v1506 = vpack.c.b16 %v1503, %v1502
        %v1507 = vpack.c.b16 %v1505, %v1504
        %v1511 = vsel %vm447, %v1497, 0
        %1513 = vmatprep.subr.bf16.mxu0 0
        %1514 = vmatpush1.bf16.msra.mxu0 %v1506
        %1515 = vmatprep.subr.bf16.mxu0 0
        %1516 = vmatpush1.bf16.msra.mxu0 %v1507
        %1517 = vmatprep.subr.bf16.mxu0 0
        %1518 = vmatpush1.bf16.msra.mxu0 0
        %1519 = vmatprep.subr.bf16.mxu0 0
        %1520 = vmatpush1.bf16.msra.mxu0 0
        %1521 = vmatprep.subr.bf16.mxu0 0
        %1522 = vmatpush1.bf16.msra.mxu0 0
        %1523 = vmatprep.subr.bf16.mxu0 0
        %1524 = vmatpush1.bf16.msra.mxu0 0
        %1525 = vmatprep.subr.bf16.mxu0 0
        %1526 = vmatpush1.bf16.msra.mxu0 0
        %1527 = vmatprep.subr.bf16.mxu0 0
        %1528 = vmatpush1.bf16.msra.mxu0 0
        %1529 = vmatprep.subr.bf16.mxu0 0
        %1530 = vmatpush1.bf16.msra.mxu0 0
        %1531 = vmatprep.subr.bf16.mxu0 0
        %1532 = vmatpush1.bf16.msra.mxu0 0
        %1533 = vmatprep.subr.bf16.mxu0 0
        %1534 = vmatpush1.bf16.msra.mxu0 0
        %1535 = vmatprep.subr.bf16.mxu0 0
        %1536 = vmatpush1.bf16.msra.mxu0 0
        %1537 = vmatprep.subr.bf16.mxu0 0
        %1538 = vmatpush1.bf16.msra.mxu0 0
        %1539 = vmatprep.subr.bf16.mxu0 0
        %1540 = vmatpush1.bf16.msra.mxu0 0
        %1541 = vmatprep.subr.bf16.mxu0 0
        %1542 = vmatpush1.bf16.msra.mxu0 0
        %1543 = vmatprep.subr.bf16.mxu0 0
        %1544 = vmatpush1.bf16.msra.mxu0 0
        %1545 = vmatprep.mubr.bf16.mxu0 0
        %1546 = vmatmul.mubr.bf16.gmra.mrb[0].mxu0 %v1511
        %v1547 = vpop.f32.mrb[0].mxu0
        %v1548 = vadd.f32 %v1491, %v1547
        %v1549 = vpop.f32.mrb[0].mxu0
        %v1550 = vpop.f32.mrb[0].mxu0
        %v1551 = vadd.f32 %v1491, %v1550
        %v1552 = vpop.f32.mrb[0].mxu0
        %1553 = vdwg.mxu0
        %v1554 = vadd.f32 %v443, %v1548
        %v1555 = vadd.f32 %v444, %v1551
        %v1556 = vld [vmem:[%s7] sm:$0x1]
        %v1557 = vld [vmem:[%s8] sm:$0x1]
        %v1558 = vsel %vm447, %v1554, 0.0
        %1559 = vadd.xlane.f32.xlu0 %v1558
        %v1560 = vpop.xlane.xlu0 %1559
        %v1561 = vsel %vm447, %v1555, 0.0
        %1562 = vadd.xlane.f32.xlu0 %v1561
        %v1563 = vpop.xlane.xlu0 %1562
        %v1564 = vmul.f32 %v1560, %v454
        %v1565 = vmul.f32 %v1563, %v454
        %v1566 = vsub.f32 %v1554, %v1564
        %v1567 = vsub.f32 %v1555, %v1565
        %v1568 = vmul.f32 %v1566, %v1566
        %v1569 = vmul.f32 %v1567, %v1567
        %v1570 = vsel %vm447, %v1568, 0.0
        %1571 = vadd.xlane.f32.xlu0 %v1570
        %v1572 = vpop.xlane.xlu0 %1571
        %v1573 = vsel %vm447, %v1569, 0.0
        %1574 = vadd.xlane.f32.xlu0 %v1573
        %v1575 = vpop.xlane.xlu0 %1574
        %v1576 = vmul.f32 %v1572, %v454
        %v1577 = vmul.f32 %v1575, %v454
        %v1578 = vadd.f32 %v1576, 1e-05
        %v1579 = vadd.f32 %v1577, 1e-05
        %v1580 = vrsqrt.pop %v1578
        %v1581 = vrsqrt.pop %v1579
        %v1582 = vmul.f32 %v1566, %v1580
        %v1583 = vmul.f32 %v1567, %v1581
        %v1585 = vlaneseq
        %v1586 = vshrl.u32 %v1585, 7
        %v1587 = vsub.s32 0, %v1586
        %v1588 = vrot.slane %v1556, %v1587
        %v1590 = vmul.f32 %v1582, %v1588
        %v1591 = vmul.f32 %v1583, %v1588
        %v1593 = vlaneseq
        %v1594 = vshrl.u32 %v1593, 7
        %v1595 = vsub.s32 0, %v1594
        %v1596 = vrot.slane %v1557, %v1595
        %v1598 = vadd.f32 %v1590, %v1596
        %v1599 = vadd.f32 %v1591, %v1596
        %v1600 = vpack.c.bf16 %v1599, %v1598
        %v1601 = vld [vmem:[%s9] sm:$0xf]
        %v1602 = vld [vmem:[%s9 + $0x4] sm:$0xf]
        %v1603 = vld [vmem:[%s9 + $0x8] sm:$0xf]
        %v1604 = vld [vmem:[%s9 + $0xc] sm:$0xf]
        %v1605 = vld [vmem:[%s10] sm:$0x1]
        %v1607 = vlaneseq
        %v1608 = vshrl.u32 %v1607, 7
        %v1609 = vsub.s32 0, %v1608
        %v1610 = vrot.slane %v1605, %v1609
        %v1616 = vunpack.c.l.b16 %v1601
        %v1617 = vunpack.c.l.b16 %v1602
        %v1618 = vunpack.c.l.b16 %v1603
        %v1619 = vunpack.c.l.b16 %v1604
        %v1620 = vpack.c.b16 %v1617, %v1616
        %v1621 = vpack.c.b16 %v1619, %v1618
        %v1625 = vsel %vm447, %v1600, 0
        %1627 = vmatprep.subr.bf16.mxu0 0
        %1628 = vmatpush1.bf16.msra.mxu0 %v1620
        %1629 = vmatprep.subr.bf16.mxu0 0
        %1630 = vmatpush1.bf16.msra.mxu0 %v1621
        %1631 = vmatprep.subr.bf16.mxu0 0
        %1632 = vmatpush1.bf16.msra.mxu0 0
        %1633 = vmatprep.subr.bf16.mxu0 0
        %1634 = vmatpush1.bf16.msra.mxu0 0
        %1635 = vmatprep.subr.bf16.mxu0 0
        %1636 = vmatpush1.bf16.msra.mxu0 0
        %1637 = vmatprep.subr.bf16.mxu0 0
        %1638 = vmatpush1.bf16.msra.mxu0 0
        %1639 = vmatprep.subr.bf16.mxu0 0
        %1640 = vmatpush1.bf16.msra.mxu0 0
        %1641 = vmatprep.subr.bf16.mxu0 0
        %1642 = vmatpush1.bf16.msra.mxu0 0
        %1643 = vmatprep.subr.bf16.mxu0 0
        %1644 = vmatpush1.bf16.msra.mxu0 0
        %1645 = vmatprep.subr.bf16.mxu0 0
        %1646 = vmatpush1.bf16.msra.mxu0 0
        %1647 = vmatprep.subr.bf16.mxu0 0
        %1648 = vmatpush1.bf16.msra.mxu0 0
        %1649 = vmatprep.subr.bf16.mxu0 0
        %1650 = vmatpush1.bf16.msra.mxu0 0
        %1651 = vmatprep.subr.bf16.mxu0 0
        %1652 = vmatpush1.bf16.msra.mxu0 0
        %1653 = vmatprep.subr.bf16.mxu0 0
        %1654 = vmatpush1.bf16.msra.mxu0 0
        %1655 = vmatprep.subr.bf16.mxu0 0
        %1656 = vmatpush1.bf16.msra.mxu0 0
        %1657 = vmatprep.subr.bf16.mxu0 0
        %1658 = vmatpush1.bf16.msra.mxu0 0
        %1659 = vmatprep.mubr.bf16.mxu0 0
        %1660 = vmatmul.mubr.bf16.gmra.mrb[0].mxu0 %v1625
        %v1661 = vpop.f32.mrb[0].mxu0
        %v1662 = vadd.f32 %v1610, %v1661
        %v1663 = vpop.f32.mrb[0].mxu0
        %v1664 = vpop.f32.mrb[0].mxu0
        %v1665 = vadd.f32 %v1610, %v1664
        %v1666 = vpop.f32.mrb[0].mxu0
        %1667 = vdwg.mxu0
        %v1668 = vmul.f32 %v1662, 1.702
        %v1669 = vmul.f32 %v1665, 1.702
        %v1670 = vxor.u32 %v1668, 2147483648
        %v1671 = vxor.u32 %v1669, 2147483648
        %v1672 = vmul.f32 %v1670, 1.442695
        %v1673 = vpow.pop %v1672
        %v1674 = vmul.f32 %v1671, 1.442695
        %v1675 = vpow.pop %v1674
        %v1676 = vadd.f32 %v1673, 1.0
        %v1677 = vadd.f32 %v1675, 1.0
        %v1678 = vrcp.pop %v1676
        %v1679 = vmul.f32 1.0, %v1678
        %v1680 = vrcp.pop %v1677
        %v1681 = vmul.f32 1.0, %v1680
        %v1682 = vmul.f32 %v1662, %v1679
        %v1683 = vmul.f32 %v1665, %v1681
        %v1684 = vpack.c.bf16 %v1683, %v1682
        %v1685 = vld [vmem:[%s11] sm:$0xf]
        %v1686 = vld [vmem:[%s11 + $0x4] sm:$0xf]
        %v1687 = vld [vmem:[%s11 + $0x8] sm:$0xf]
        %v1688 = vld [vmem:[%s11 + $0xc] sm:$0xf]
        %v1689 = vld [vmem:[%s11 + $0x10] sm:$0xf]
        %v1690 = vld [vmem:[%s11 + $0x14] sm:$0xf]
        %v1691 = vld [vmem:[%s11 + $0x18] sm:$0xf]
        %v1692 = vld [vmem:[%s11 + $0x1c] sm:$0xf]
        %v1693 = vld [vmem:[%s11 + $0x20] sm:$0xf]
        %v1694 = vld [vmem:[%s11 + $0x24] sm:$0xf]
        %v1695 = vld [vmem:[%s11 + $0x28] sm:$0xf]
        %v1696 = vld [vmem:[%s11 + $0x2c] sm:$0xf]
        %v1697 = vld [vmem:[%s11 + $0x30] sm:$0xf]
        %v1698 = vld [vmem:[%s11 + $0x34] sm:$0xf]
        %v1699 = vld [vmem:[%s11 + $0x38] sm:$0xf]
        %v1700 = vld [vmem:[%s11 + $0x3c] sm:$0xf]
        %v1701 = vld [vmem:[%s12] sm:$0x1]
        %v1703 = vlaneseq
        %v1704 = vshrl.u32 %v1703, 7
        %v1705 = vsub.s32 0, %v1704
        %v1706 = vrot.slane %v1701, %v1705
        %v1724 = vunpack.c.l.b16 %v1685
        %v1725 = vunpack.c.l.b16 %v1686
        %v1726 = vunpack.c.l.b16 %v1687
        %v1727 = vunpack.c.l.b16 %v1688
        %v1728 = vunpack.c.l.b16 %v1689
        %v1729 = vunpack.c.l.b16 %v1690
        %v1730 = vunpack.c.l.b16 %v1691
        %v1731 = vunpack.c.l.b16 %v1692
        %v1732 = vunpack.c.l.b16 %v1693
        %v1733 = vunpack.c.l.b16 %v1694
        %v1734 = vunpack.c.l.b16 %v1695
        %v1735 = vunpack.c.l.b16 %v1696
        %v1736 = vunpack.c.l.b16 %v1697
        %v1737 = vunpack.c.l.b16 %v1698
        %v1738 = vunpack.c.l.b16 %v1699
        %v1739 = vunpack.c.l.b16 %v1700
        %v1740 = vpack.c.b16 %v1725, %v1724
        %v1741 = vpack.c.b16 %v1727, %v1726
        %v1742 = vpack.c.b16 %v1729, %v1728
        %v1743 = vpack.c.b16 %v1731, %v1730
        %v1744 = vpack.c.b16 %v1733, %v1732
        %v1745 = vpack.c.b16 %v1735, %v1734
        %v1746 = vpack.c.b16 %v1737, %v1736
        %v1747 = vpack.c.b16 %v1739, %v1738
        %1756 = vmatprep.subr.bf16.mxu0 0
        %1757 = vmatpush1.bf16.msra.mxu0 %v1740
        %1758 = vmatprep.subr.bf16.mxu0 0
        %1759 = vmatpush1.bf16.msra.mxu0 %v1741
        %1760 = vmatprep.subr.bf16.mxu0 0
        %1761 = vmatpush1.bf16.msra.mxu0 %v1742
        %1762 = vmatprep.subr.bf16.mxu0 0
        %1763 = vmatpush1.bf16.msra.mxu0 %v1743
        %1764 = vmatprep.subr.bf16.mxu0 0
        %1765 = vmatpush1.bf16.msra.mxu0 %v1744
        %1766 = vmatprep.subr.bf16.mxu0 0
        %1767 = vmatpush1.bf16.msra.mxu0 %v1745
        %1768 = vmatprep.subr.bf16.mxu0 0
        %1769 = vmatpush1.bf16.msra.mxu0 %v1746
        %1770 = vmatprep.subr.bf16.mxu0 0
        %1771 = vmatpush1.bf16.msra.mxu0 %v1747
        %1772 = vmatprep.subr.bf16.mxu0 0
        %1773 = vmatpush1.bf16.msra.mxu0 0
        %1774 = vmatprep.subr.bf16.mxu0 0
        %1775 = vmatpush1.bf16.msra.mxu0 0
        %1776 = vmatprep.subr.bf16.mxu0 0
        %1777 = vmatpush1.bf16.msra.mxu0 0
        %1778 = vmatprep.subr.bf16.mxu0 0
        %1779 = vmatpush1.bf16.msra.mxu0 0
        %1780 = vmatprep.subr.bf16.mxu0 0
        %1781 = vmatpush1.bf16.msra.mxu0 0
        %1782 = vmatprep.subr.bf16.mxu0 0
        %1783 = vmatpush1.bf16.msra.mxu0 0
        %1784 = vmatprep.subr.bf16.mxu0 0
        %1785 = vmatpush1.bf16.msra.mxu0 0
        %1786 = vmatprep.subr.bf16.mxu0 0
        %1787 = vmatpush1.bf16.msra.mxu0 0
        %1788 = vmatprep.mubr.bf16.mxu0 0
        %1789 = vmatmul.mubr.bf16.gmra.mrb[0].mxu0 %v1684
        %v1790 = vpop.f32.mrb[0].mxu0
        %v1791 = vadd.f32 %v1706, %v1790
        %v1792 = vpop.f32.mrb[0].mxu0
        %v1793 = vpop.f32.mrb[0].mxu0
        %v1794 = vadd.f32 %v1706, %v1793
        %v1795 = vpop.f32.mrb[0].mxu0
        %1796 = vdwg.mxu0
        %v1797 = vadd.f32 %v1554, %v1791
        %v1798 = vadd.f32 %v1555, %v1794
        %1799 = vst.msk [vmem:[%s434] sm:$0xff] %vm447, %v1797
        %1800 = vst.msk [vmem:[%s434 + $0x8] sm:$0xff] %vm447, %v1798
        %s1801 = sand.u32 %s313, 1
        %s1802 = scalar_lea.sflag [#allocation4], %s1801
        %s1803 = sand.u32 %s313, 1
        %s1804 = smul.addr %s1803, 16
        %s1805 = scalar_lea.vmem [#allocation3], %s1804
        // Predicated region
        $region73: #{tpu_custom_call.1} parent=71 // pred_check
          %p1806 = pneg %p323
        $region74: #{tpu_custom_call.1} parent=71 // pred_check_branch
          %1808 = sbr.rel (%p1806) target = $region76
        $region75: #{tpu_custom_call.1} parent=71 // pred_region
          %s1809 = smul.u32 2, %s27
          %s1811 = ssub.s32 256, 256
          %1812 = vsyncadd %s1802, %s1811
          %s1813 = smul.addr %s1809, 128
          %s1814 = scalar_lea.hbm %s13, %s1813
          %s1815 = sshll.u32 %s1805, 4
          %s1816 = int_to_ptr.vmem [resolvable:$true] %s1815
          %1821 = dma.vmem_to_hbm [thread:$0]  %s1816, 256, %s1814, %s1802, 128, 128, 8
        $region76: #{tpu_custom_call.1} parent=71 // pred_fallthru
          _
      $region72: #{tpu_custom_call.1} parent=5 // pred_fallthru
        _
      %p1822 = scmp.le.s32.totalorder 2, %s22
      // Predicated region
      $region77: #{tpu_custom_call.1} parent=5 // pred_check
        %p1823 = pneg %p1822
      $region78: #{tpu_custom_call.1} parent=5 // pred_check_branch
        %1825 = sbr.rel (%p1823) target = $region80
      $region79: #{tpu_custom_call.1} parent=5 // pred_region
        %s1826 = ssub.s32 %s22, 2
        // Predicated region
        $region81: #{tpu_custom_call.1} parent=79 // pred_check
          %p1827 = pneg %p329
        $region82: #{tpu_custom_call.1} parent=79 // pred_check_branch
          %1829 = sbr.rel (%p1827) target = $region84
        $region83: #{tpu_custom_call.1} parent=79 // pred_region
          %s1830 = sand.u32 %s314, 1
          %s1831 = scalar_lea.sflag [#allocation4], %s1830
          %s1832 = sand.u32 %s314, 1
          %s1833 = smul.addr %s1832, 16
          %s1834 = scalar_lea.vmem [#allocation3], %s1833
          %1835 = dma.done %s1831, 256
        $region84: #{tpu_custom_call.1} parent=79 // pred_fallthru
          _
      $region80: #{tpu_custom_call.1} parent=5 // pred_fallthru
        _
    $region6: #{tpu_custom_call.1} parent=1 // loop_footer
      %s26 = sadd.s32 1, %s22
    $region7: #{tpu_custom_call.1} parent=1 // loop_footer_branch
      %21 = sbr.rel target = $region3
    $region8: #{tpu_custom_call.1} parent=1 // loop_exit
      _
    %1836 = vsyncpa [#allocation4], 1
    %s1837 = scalar_lea.sflag [#allocation4], 1
    %1838 = vsyncpa %s1837, 1

</llo_original>
